<compile_context>
chip_gen: v5e
topology: v5e:2x2
jax: 0.10.0
libtpu: 0.0.40
codegen_flags: <defaults>
</compile_context>

<pallas_src>
import jax
import jax.numpy as jnp
from jax import lax
from jax.experimental import pallas as pl
from jax.experimental.pallas import tpu as pltpu

# ----------------------------------------------------------------------------
# Small-scale config (same structure as CLIP ViT, smaller dims)
# ----------------------------------------------------------------------------
BATCH     = 2
B_BLK     = 2                       # images per grid step -> matmul M = B_BLK * S_PAD
CHANNELS  = 3
IMAGE_RES = 16
PATCH     = 8
WIDTH     = 32                      # transformer width D
LAYERS    = 2
HEADS     = 4
HEAD_DIM  = WIDTH // HEADS
EMBED_DIM = 16                      # output_dim (CLIP projection)
EMBED_PAD = 128                     # lane-dense output slab width
GRID_SZ   = IMAGE_RES // PATCH
NUM_PATCH = GRID_SZ * GRID_SZ
SEQ       = NUM_PATCH + 1           # +1 CLS token
S_PAD     = ((SEQ + 7) // 8) * 8    # pad sequence to sublane multiple
PATCH_K   = CHANNELS * PATCH * PATCH
MLP_DIM   = 4 * WIDTH
M_TOK     = B_BLK * S_PAD           # rows of the token slab inside the kernel
LN_EPS    = 1e-5
MM_DTYPE  = jnp.bfloat16            # MXU operand dtype (f32 accumulate everywhere)


def _layernorm(x, g, b):
    mu = jnp.mean(x, axis=-1, keepdims=True)
    var = jnp.mean((x - mu) ** 2, axis=-1, keepdims=True)
    return (x - mu) * lax.rsqrt(var + LN_EPS) * g + b


def _mm(a, b):
    """MXU matmul: bf16 operands (no-op cast when already bf16), f32 accumulation."""
    return jnp.dot(a.astype(MM_DTYPE), b.astype(MM_DTYPE),
                   preferred_element_type=jnp.float32)


# ----------------------------------------------------------------------------
# Fused kernel: grid = (batch_blocks, LAYERS)
#   l == 0          : patch embed + CLS + pos emb + ln_pre  -> token scratch
#   every l         : one ResidualAttentionBlock on the resident token slab
#   l == LAYERS - 1 : ln_post on CLS rows + CLIP projection -> lane-dense output
# ----------------------------------------------------------------------------
def vit_kernel(patch_ref, conv_w_ref, cls_ref, pos_ref, lnpre_g_ref, lnpre_b_ref,
               ln1g_ref, ln1b_ref, wqkv_ref, bqkv_ref, wo_ref, bo_ref,
               ln2g_ref, ln2b_ref, w1_ref, b1_ref, w2_ref, b2_ref,
               lnpost_g_ref, lnpost_b_ref, proj_ref, out_ref, tok_ref):
    D = WIDTH
    l = pl.program_id(1)
    scale = 1.0 / (HEAD_DIM ** 0.5)

    # ---- patch embedding (conv1-as-matmul, all B_BLK images batched into M) ----
    @pl.when(l == 0)
    def _():
        emb_all = _mm(patch_ref[...], conv_w_ref[...])          # [B_BLK*NUM_PATCH, D]
        pad = jnp.zeros((S_PAD - SEQ, D), jnp.float32)
        for b in range(B_BLK):                                   # static
            emb_b = emb_all[b * NUM_PATCH:(b + 1) * NUM_PATCH, :]
            toks = jnp.concatenate([cls_ref[...], emb_b, pad], axis=0) + pos_ref[...]
            tok_ref[b * S_PAD:(b + 1) * S_PAD, :] = _layernorm(
                toks, lnpre_g_ref[...], lnpre_b_ref[...])

    # ---- ResidualAttentionBlock for layer l (tokens stay VMEM resident) ----
    x = tok_ref[...]                                             # [M_TOK, D] f32

    h = _layernorm(x, ln1g_ref[...], ln1b_ref[...])
    qkv = _mm(h, wqkv_ref[...]) + bqkv_ref[...]                  # [M_TOK, 3D]
    q = qkv[:, :D] * scale
    k = qkv[:, D:2 * D]
    v = qkv[:, 2 * D:]

    # mask padded keys (columns >= SEQ); padded query rows never reach the output
    col = lax.broadcasted_iota(jnp.int32, (S_PAD, S_PAD), 1)
    key_mask = jnp.where(col >= SEQ, -1e30, 0.0).astype(jnp.float32)

    img_outs = []
    for b in range(B_BLK):                                       # static (per image)
        r0 = b * S_PAD
        acc = jnp.zeros((S_PAD, D), jnp.float32)
        for hh in range(HEADS):                                  # static (per head)
            lo = hh * HEAD_DIM
            qh = q[r0:r0 + S_PAD, lo:lo + HEAD_DIM]
            kh = k[r0:r0 + S_PAD, lo:lo + HEAD_DIM]
            vh = v[r0:r0 + S_PAD, lo:lo + HEAD_DIM]
            # q @ k^T via dot_general contracting head_dim (no explicit transpose)
            s = lax.dot_general(qh.astype(MM_DTYPE), kh.astype(MM_DTYPE),
                                (((1,), (1,)), ((), ())),
                                preferred_element_type=jnp.float32)
            s = s + key_mask
            s = s - jnp.max(s, axis=-1, keepdims=True)
            e = jnp.exp(s)
            p = e / jnp.sum(e, axis=-1, keepdims=True)           # exact division
            pv = _mm(p, vh)                                      # [S_PAD, head_dim]
            # fold the output projection per head (== concat heads then @ w_out)
            acc = acc + _mm(pv, wo_ref[lo:lo + HEAD_DIM, :])
        img_outs.append(acc)
    attn = jnp.concatenate(img_outs, axis=0)                     # [M_TOK, D] (sublane concat)
    x = x + attn + bo_ref[...]

    h2 = _layernorm(x, ln2g_ref[...], ln2b_ref[...])
    m = _mm(h2, w1_ref[...]) + b1_ref[...]
    m = m * jax.nn.sigmoid(1.702 * m)                            # QuickGELU (CLIP)
    x = x + _mm(m, w2_ref[...]) + b2_ref[...]
    tok_ref[...] = x

    # ---- ln_post on CLS tokens + CLIP projection (use_clip_attention=False) ----
    @pl.when(l == LAYERS - 1)
    def _():
        cls_rows = jnp.concatenate(
            [x[b * S_PAD:b * S_PAD + 1, :] for b in range(B_BLK)], axis=0)  # [B_BLK, D]
        cls_rows = _layernorm(cls_rows, lnpost_g_ref[...], lnpost_b_ref[...])
        out_ref[...] = _mm(cls_rows, proj_ref[...]).astype(out_ref.dtype)   # [B_BLK, 128]


# ----------------------------------------------------------------------------
# pallas_call wrapper
# ----------------------------------------------------------------------------
def _const_spec(shape):
    # Constant block index -> DMA'd once; tuning knob: pipeline_mode=pl.Buffered(1)
    # would halve its VMEM footprint on v7x (left at default for portability).
    n = len(shape)
    return pl.BlockSpec(shape, lambda b, l, _n=n: (0,) * _n)


def _layer_spec(shape):
    # One layer's weights per grid step along the (last, "arbitrary") layer axis;
    # BlockSpec double-buffering prefetches layer l+1 behind layer l compute.
    n = len(shape)
    return pl.BlockSpec((None,) + shape, lambda b, l, _n=n: (l,) + (0,) * _n)


def vit_encoder_forward(x, p):
    """x: NCHW float32 [B, 3, H, W]  ->  [B, 1, EMBED_DIM]."""
    B, C, H, W = x.shape
    assert B % B_BLK == 0
    gh, gw = H // PATCH, W // PATCH
    # conv1 (stride=patch, no bias) == per-patch channel-major flatten + matmul;
    # flattened across the batch so the kernel's embed matmul has M = B_BLK*NUM_PATCH.
    patches = x.reshape(B, C, gh, PATCH, gw, PATCH)
    patches = patches.transpose(0, 2, 4, 1, 3, 5).reshape(B * gh * gw, C * PATCH * PATCH)

    bf = lambda a: a.astype(MM_DTYPE)                      # pre-cast matmul weights to bf16
    pos_pad = jnp.pad(p["pos"], ((0, S_PAD - SEQ), (0, 0)))
    proj_pad = jnp.pad(bf(p["proj"]), ((0, 0), (0, EMBED_PAD - EMBED_DIM)))

    in_specs = [
        pl.BlockSpec((B_BLK * NUM_PATCH, PATCH_K), lambda b, l: (b, 0)),   # patches
        _const_spec((PATCH_K, WIDTH)),                                      # conv_w (bf16)
        _const_spec((1, WIDTH)),                                            # cls
        _const_spec((S_PAD, WIDTH)),                                        # pos (padded)
        _const_spec((1, WIDTH)), _const_spec((1, WIDTH)),                   # ln_pre g/b
        _layer_spec((1, WIDTH)), _layer_spec((1, WIDTH)),                   # ln1 g/b
        _layer_spec((WIDTH, 3 * WIDTH)), _layer_spec((1, 3 * WIDTH)),       # qkv w/b
        _layer_spec((WIDTH, WIDTH)), _layer_spec((1, WIDTH)),               # out proj w/b
        _layer_spec((1, WIDTH)), _layer_spec((1, WIDTH)),                   # ln2 g/b
        _layer_spec((WIDTH, MLP_DIM)), _layer_spec((1, MLP_DIM)),           # fc1 w/b
        _layer_spec((MLP_DIM, WIDTH)), _layer_spec((1, WIDTH)),             # fc2 w/b
        _const_spec((1, WIDTH)), _const_spec((1, WIDTH)),                   # ln_post g/b
        _const_spec((WIDTH, EMBED_PAD)),                                    # proj (padded, bf16)
    ]

    out = pl.pallas_call(
        vit_kernel,
        out_shape=jax.ShapeDtypeStruct((B, EMBED_PAD), jnp.float32),
        grid=(B // B_BLK, LAYERS),                         # layer axis last ("arbitrary")
        in_specs=in_specs,
        out_specs=pl.BlockSpec((B_BLK, EMBED_PAD), lambda b, l: (b, 0)),
        scratch_shapes=[pltpu.VMEM((M_TOK, WIDTH), jnp.float32)],  # resident token slab
        compiler_params=pltpu.CompilerParams(
            dimension_semantics=("parallel", "arbitrary"),  # batch shards across v7x's 2 TCs
            vmem_limit_bytes=32 * 1024 * 1024),             # at real dims: ~48 MB on v7x
    )(patches, bf(p["conv_w"]), p["cls"], pos_pad, p["ln_pre_g"], p["ln_pre_b"],
      p["ln1_g"], p["ln1_b"], bf(p["w_qkv"]), p["b_qkv"], bf(p["w_out"]), p["b_out"],
      p["ln2_g"], p["ln2_b"], bf(p["w_fc1"]), p["b_fc1"], bf(p["w_fc2"]), p["b_fc2"],
      p["ln_post_g"], p["ln_post_b"], proj_pad)

    return out[:, :EMBED_DIM][:, None, :]                   # [B, 1, EMBED_DIM]


# ----------------------------------------------------------------------------
# Deterministic synthetic parameters (shapes follow the module's __init__);
# per-layer tensors stacked along a leading LAYERS axis for layer streaming.
# ----------------------------------------------------------------------------
def init_params(key):
    def nrm(k, shape, scale=0.02):
        return scale * jax.random.normal(k, shape, jnp.float32)

    ks = iter(jax.random.split(key, 8))
    return {
        # Conv2d(3, D, kernel=patch, stride=patch, bias=False) flattened to [C*p*p, D]
        "conv_w": nrm(next(ks), (PATCH_K, WIDTH)),
        "cls": nrm(next(ks), (1, WIDTH)),
        "pos": nrm(next(ks), (SEQ, WIDTH)),
        "ln_pre_g": jnp.ones((1, WIDTH), jnp.float32),
        "ln_pre_b": jnp.zeros((1, WIDTH), jnp.float32),
        "ln_post_g": jnp.ones((1, WIDTH), jnp.float32),
        "ln_post_b": jnp.zeros((1, WIDTH), jnp.float32),
        "proj": nrm(next(ks), (WIDTH, EMBED_DIM)),
        # stacked per-layer parameters
        "ln1_g": jnp.ones((LAYERS, 1, WIDTH), jnp.float32),
        "ln1_b": jnp.zeros((LAYERS, 1, WIDTH), jnp.float32),
        "w_qkv": nrm(next(ks), (LAYERS, WIDTH, 3 * WIDTH)),   # in_proj (pre-transposed)
        "b_qkv": jnp.zeros((LAYERS, 1, 3 * WIDTH), jnp.float32),
        "w_out": nrm(next(ks), (LAYERS, WIDTH, WIDTH)),       # out_proj (pre-transposed)
        "b_out": jnp.zeros((LAYERS, 1, WIDTH), jnp.float32),
        "ln2_g": jnp.ones((LAYERS, 1, WIDTH), jnp.float32),
        "ln2_b": jnp.zeros((LAYERS, 1, WIDTH), jnp.float32),
        "w_fc1": nrm(next(ks), (LAYERS, WIDTH, MLP_DIM)),
        "b_fc1": jnp.zeros((LAYERS, 1, MLP_DIM), jnp.float32),
        "w_fc2": nrm(next(ks), (LAYERS, MLP_DIM, WIDTH)),
        "b_fc2": jnp.zeros((LAYERS, 1, WIDTH), jnp.float32),
    }


if __name__ == "__main__":
    key = jax.random.PRNGKey(0)
    pkey, xkey = jax.random.split(key)
    params = init_params(pkey)
    x = jax.random.normal(xkey, (BATCH, CHANNELS, IMAGE_RES, IMAGE_RES), jnp.float32)
    out = jax.jit(vit_encoder_forward)(x, params)
    jax.block_until_ready(out)
    assert out.shape == (BATCH, 1, EMBED_DIM) and out.dtype == jnp.float32
    assert bool(jnp.all(jnp.isfinite(out)))
    # TODO(synk): clip checkpoint loading (load_pretrained_clip_vit) and the optional
    # output_fc (out_features=None default) are outside the default forward path.
    print("KERNEL_OK")
</pallas_src>

<mosaic_0001>
module attributes {stable_mosaic.version = 11 : i64} {
  func.func @vit_kernel(%arg0: i32, %arg1: i32, %arg2: memref<8x192xf32, #tpu.memory_space<vmem>>, %arg3: memref<192x32xbf16, #tpu.memory_space<vmem>>, %arg4: memref<1x32xf32, #tpu.memory_space<vmem>>, %arg5: memref<8x32xf32, #tpu.memory_space<vmem>>, %arg6: memref<1x32xf32, #tpu.memory_space<vmem>>, %arg7: memref<1x32xf32, #tpu.memory_space<vmem>>, %arg8: memref<1x1x32xf32, #tpu.memory_space<vmem>>, %arg9: memref<1x1x32xf32, #tpu.memory_space<vmem>>, %arg10: memref<1x32x96xbf16, #tpu.memory_space<vmem>>, %arg11: memref<1x1x96xf32, #tpu.memory_space<vmem>>, %arg12: memref<1x32x32xbf16, #tpu.memory_space<vmem>>, %arg13: memref<1x1x32xf32, #tpu.memory_space<vmem>>, %arg14: memref<1x1x32xf32, #tpu.memory_space<vmem>>, %arg15: memref<1x1x32xf32, #tpu.memory_space<vmem>>, %arg16: memref<1x32x128xbf16, #tpu.memory_space<vmem>>, %arg17: memref<1x1x128xf32, #tpu.memory_space<vmem>>, %arg18: memref<1x128x32xbf16, #tpu.memory_space<vmem>>, %arg19: memref<1x1x32xf32, #tpu.memory_space<vmem>>, %arg20: memref<1x32xf32, #tpu.memory_space<vmem>>, %arg21: memref<1x32xf32, #tpu.memory_space<vmem>>, %arg22: memref<32x128xbf16, #tpu.memory_space<vmem>>, %arg23: memref<2x128xf32, #tpu.memory_space<vmem>>, %arg24: memref<16x32xf32, #tpu.memory_space<vmem>>) attributes {dimension_semantics = [#tpu.dimension_semantics<parallel>, #tpu.dimension_semantics<arbitrary>], iteration_bounds = array<i64: 1, 2>, scalar_prefetch = 0 : i64, scratch_operands = 1 : i64, tpu.core_type = #tpu.core_type<tc>, window_params = [{transform_indices = @transform_0, window_bounds = array<i64: 8, 192>}, {pipeline_mode = #tpu.pipeline_mode<synchronous>, transform_indices = @transform_1, window_bounds = array<i64: 192, 32>}, {pipeline_mode = #tpu.pipeline_mode<synchronous>, transform_indices = @transform_2, window_bounds = array<i64: 1, 32>}, {pipeline_mode = #tpu.pipeline_mode<synchronous>, transform_indices = @transform_3, window_bounds = array<i64: 8, 32>}, {pipeline_mode = #tpu.pipeline_mode<synchronous>, transform_indices = @transform_4, window_bounds = array<i64: 1, 32>}, {pipeline_mode = #tpu.pipeline_mode<synchronous>, transform_indices = @transform_5, window_bounds = array<i64: 1, 32>}, {transform_indices = @transform_6, window_bounds = array<i64: 1, 1, 32>}, {transform_indices = @transform_7, window_bounds = array<i64: 1, 1, 32>}, {transform_indices = @transform_8, window_bounds = array<i64: 1, 32, 96>}, {transform_indices = @transform_9, window_bounds = array<i64: 1, 1, 96>}, {transform_indices = @transform_10, window_bounds = array<i64: 1, 32, 32>}, {transform_indices = @transform_11, window_bounds = array<i64: 1, 1, 32>}, {transform_indices = @transform_12, window_bounds = array<i64: 1, 1, 32>}, {transform_indices = @transform_13, window_bounds = array<i64: 1, 1, 32>}, {transform_indices = @transform_14, window_bounds = array<i64: 1, 32, 128>}, {transform_indices = @transform_15, window_bounds = array<i64: 1, 1, 128>}, {transform_indices = @transform_16, window_bounds = array<i64: 1, 128, 32>}, {transform_indices = @transform_17, window_bounds = array<i64: 1, 1, 32>}, {pipeline_mode = #tpu.pipeline_mode<synchronous>, transform_indices = @transform_18, window_bounds = array<i64: 1, 32>}, {pipeline_mode = #tpu.pipeline_mode<synchronous>, transform_indices = @transform_19, window_bounds = array<i64: 1, 32>}, {pipeline_mode = #tpu.pipeline_mode<synchronous>, transform_indices = @transform_20, window_bounds = array<i64: 32, 128>}, {transform_indices = @transform_21, window_bounds = array<i64: 2, 128>}]} {
    %c0_i32 = arith.constant 0 : i32
    %0 = arith.cmpi eq, %arg1, %c0_i32 : i32
    %1 = arith.extui %0 : i1 to i32
    %c0_i32_0 = arith.constant 0 : i32
    %2 = arith.cmpi ne, %1, %c0_i32_0 : i32
    scf.if %2 {
      %c0_118 = arith.constant 0 : index
      %c0_119 = arith.constant 0 : index
      %304 = vector.load %arg2[%c0_118, %c0_119] : memref<8x192xf32, #tpu.memory_space<vmem>>, vector<8x192xf32>
      %c0_120 = arith.constant 0 : index
      %c0_121 = arith.constant 0 : index
      %305 = vector.load %arg3[%c0_120, %c0_121] : memref<192x32xbf16, #tpu.memory_space<vmem>>, vector<192x32xbf16>
      %306 = arith.truncf %304 : vector<8x192xf32> to vector<8x192xbf16>
      %cst_122 = arith.constant dense<0.000000e+00> : vector<8x32xf32>
      %307 = tpu.matmul %306, %305, %cst_122 {dimension_numbers = #tpu.dot_dimension_numbers<[1], [0], [0], [1], [0, 0, 1, 1], [], []>} : vector<8x192xbf16>, vector<192x32xbf16>, vector<8x32xf32> -> vector<8x32xf32>
      %cst_123 = arith.constant 0.000000e+00 : f32
      %308 = vector.broadcast %cst_123 : f32 to vector<3x32xf32>
      %309 = vector.extract_strided_slice %307 {offsets = [0, 0], sizes = [4, 32], strides = [1, 1]} : vector<8x32xf32> to vector<4x32xf32>
      %c0_124 = arith.constant 0 : index
      %c0_125 = arith.constant 0 : index
      %310 = vector.load %arg4[%c0_124, %c0_125] : memref<1x32xf32, #tpu.memory_space<vmem>>, vector<1x32xf32>
      %311 = tpu.concatenate %310, %309, %308 in 0 : vector<1x32xf32>, vector<4x32xf32>, vector<3x32xf32> -> vector<8x32xf32>
      %c0_126 = arith.constant 0 : index
      %c0_127 = arith.constant 0 : index
      %312 = vector.load %arg5[%c0_126, %c0_127] : memref<8x32xf32, #tpu.memory_space<vmem>>, vector<8x32xf32>
      %313 = arith.addf %311, %312 : vector<8x32xf32>
      %c0_128 = arith.constant 0 : index
      %c0_129 = arith.constant 0 : index
      %314 = vector.load %arg6[%c0_128, %c0_129] : memref<1x32xf32, #tpu.memory_space<vmem>>, vector<1x32xf32>
      %c0_130 = arith.constant 0 : index
      %c0_131 = arith.constant 0 : index
      %315 = vector.load %arg7[%c0_130, %c0_131] : memref<1x32xf32, #tpu.memory_space<vmem>>, vector<1x32xf32>
      %cst_132 = arith.constant dense<0.000000e+00> : vector<8xf32>
      %316 = vector.multi_reduction <add>, %313, %cst_132 [1] : vector<8x32xf32> to vector<8xf32>
      %317 = vector.shape_cast %316 : vector<8xf32> to vector<8x1xf32>
      %cst_133 = arith.constant 3.200000e+01 : f32
      %318 = vector.broadcast %cst_133 : f32 to vector<8x1xf32>
      %319 = arith.divf %317, %318 : vector<8x1xf32>
      %320 = vector.broadcast %319 : vector<8x1xf32> to vector<8x32xf32>
      %321 = arith.subf %313, %320 : vector<8x32xf32>
      %322 = arith.mulf %321, %321 : vector<8x32xf32>
      %cst_134 = arith.constant dense<0.000000e+00> : vector<8xf32>
      %323 = vector.multi_reduction <add>, %322, %cst_134 [1] : vector<8x32xf32> to vector<8xf32>
      %324 = vector.shape_cast %323 : vector<8xf32> to vector<8x1xf32>
      %cst_135 = arith.constant 3.200000e+01 : f32
      %325 = vector.broadcast %cst_135 : f32 to vector<8x1xf32>
      %326 = arith.divf %324, %325 : vector<8x1xf32>
      %327 = vector.broadcast %319 : vector<8x1xf32> to vector<8x32xf32>
      %328 = arith.subf %313, %327 : vector<8x32xf32>
      %cst_136 = arith.constant 9.99999974E-6 : f32
      %329 = vector.broadcast %cst_136 : f32 to vector<8x1xf32>
      %330 = arith.addf %326, %329 : vector<8x1xf32>
      %331 = math.rsqrt %330 : vector<8x1xf32>
      %332 = vector.broadcast %331 : vector<8x1xf32> to vector<8x32xf32>
      %333 = arith.mulf %328, %332 : vector<8x32xf32>
      %334 = vector.broadcast %314 : vector<1x32xf32> to vector<8x32xf32>
      %335 = arith.mulf %333, %334 : vector<8x32xf32>
      %336 = vector.broadcast %315 : vector<1x32xf32> to vector<8x32xf32>
      %337 = arith.addf %335, %336 : vector<8x32xf32>
      %c0_137 = arith.constant 0 : index
      %c0_138 = arith.constant 0 : index
      %338 = vector.load %arg24[%c0_137, %c0_138] : memref<16x32xf32, #tpu.memory_space<vmem>>, vector<8x32xf32>
      tpu.vector_store %arg24[%c0_137, %c0_138], %337 {strides = array<i32>} : memref<16x32xf32, #tpu.memory_space<vmem>>, vector<8x32xf32>,
      %339 = vector.extract_strided_slice %307 {offsets = [4, 0], sizes = [4, 32], strides = [1, 1]} : vector<8x32xf32> to vector<4x32xf32>
      %c0_139 = arith.constant 0 : index
      %c0_140 = arith.constant 0 : index
      %340 = vector.load %arg4[%c0_139, %c0_140] : memref<1x32xf32, #tpu.memory_space<vmem>>, vector<1x32xf32>
      %341 = tpu.concatenate %340, %339, %308 in 0 : vector<1x32xf32>, vector<4x32xf32>, vector<3x32xf32> -> vector<8x32xf32>
      %c0_141 = arith.constant 0 : index
      %c0_142 = arith.constant 0 : index
      %342 = vector.load %arg5[%c0_141, %c0_142] : memref<8x32xf32, #tpu.memory_space<vmem>>, vector<8x32xf32>
      %343 = arith.addf %341, %342 : vector<8x32xf32>
      %c0_143 = arith.constant 0 : index
      %c0_144 = arith.constant 0 : index
      %344 = vector.load %arg6[%c0_143, %c0_144] : memref<1x32xf32, #tpu.memory_space<vmem>>, vector<1x32xf32>
      %c0_145 = arith.constant 0 : index
      %c0_146 = arith.constant 0 : index
      %345 = vector.load %arg7[%c0_145, %c0_146] : memref<1x32xf32, #tpu.memory_space<vmem>>, vector<1x32xf32>
      %cst_147 = arith.constant dense<0.000000e+00> : vector<8xf32>
      %346 = vector.multi_reduction <add>, %343, %cst_147 [1] : vector<8x32xf32> to vector<8xf32>
      %347 = vector.shape_cast %346 : vector<8xf32> to vector<8x1xf32>
      %cst_148 = arith.constant 3.200000e+01 : f32
      %348 = vector.broadcast %cst_148 : f32 to vector<8x1xf32>
      %349 = arith.divf %347, %348 : vector<8x1xf32>
      %350 = vector.broadcast %349 : vector<8x1xf32> to vector<8x32xf32>
      %351 = arith.subf %343, %350 : vector<8x32xf32>
      %352 = arith.mulf %351, %351 : vector<8x32xf32>
      %cst_149 = arith.constant dense<0.000000e+00> : vector<8xf32>
      %353 = vector.multi_reduction <add>, %352, %cst_149 [1] : vector<8x32xf32> to vector<8xf32>
      %354 = vector.shape_cast %353 : vector<8xf32> to vector<8x1xf32>
      %cst_150 = arith.constant 3.200000e+01 : f32
      %355 = vector.broadcast %cst_150 : f32 to vector<8x1xf32>
      %356 = arith.divf %354, %355 : vector<8x1xf32>
      %357 = vector.broadcast %349 : vector<8x1xf32> to vector<8x32xf32>
      %358 = arith.subf %343, %357 : vector<8x32xf32>
      %cst_151 = arith.constant 9.99999974E-6 : f32
      %359 = vector.broadcast %cst_151 : f32 to vector<8x1xf32>
      %360 = arith.addf %356, %359 : vector<8x1xf32>
      %361 = math.rsqrt %360 : vector<8x1xf32>
      %362 = vector.broadcast %361 : vector<8x1xf32> to vector<8x32xf32>
      %363 = arith.mulf %358, %362 : vector<8x32xf32>
      %364 = vector.broadcast %344 : vector<1x32xf32> to vector<8x32xf32>
      %365 = arith.mulf %363, %364 : vector<8x32xf32>
      %366 = vector.broadcast %345 : vector<1x32xf32> to vector<8x32xf32>
      %367 = arith.addf %365, %366 : vector<8x32xf32>
      %c8_152 = arith.constant 8 : index
      %c0_153 = arith.constant 0 : index
      %368 = vector.load %arg24[%c8_152, %c0_153] : memref<16x32xf32, #tpu.memory_space<vmem>>, vector<8x32xf32>
      tpu.vector_store %arg24[%c8_152, %c0_153], %367 {strides = array<i32>} : memref<16x32xf32, #tpu.memory_space<vmem>>, vector<8x32xf32>,
    } else {
    }
    %c0 = arith.constant 0 : index
    %c0_1 = arith.constant 0 : index
    %3 = vector.load %arg24[%c0, %c0_1] : memref<16x32xf32, #tpu.memory_space<vmem>>, vector<16x32xf32>
    %c0_2 = arith.constant 0 : index
    %c0_3 = arith.constant 0 : index
    %c0_4 = arith.constant 0 : index
    %4 = vector.load %arg8[%c0_2, %c0_3, %c0_4] : memref<1x1x32xf32, #tpu.memory_space<vmem>>, vector<1x1x32xf32>
    %5 = vector.shape_cast %4 : vector<1x1x32xf32> to vector<1x32xf32>
    %c0_5 = arith.constant 0 : index
    %c0_6 = arith.constant 0 : index
    %c0_7 = arith.constant 0 : index
    %6 = vector.load %arg9[%c0_5, %c0_6, %c0_7] : memref<1x1x32xf32, #tpu.memory_space<vmem>>, vector<1x1x32xf32>
    %7 = vector.shape_cast %6 : vector<1x1x32xf32> to vector<1x32xf32>
    %cst = arith.constant dense<0.000000e+00> : vector<16xf32>
    %8 = vector.multi_reduction <add>, %3, %cst [1] : vector<16x32xf32> to vector<16xf32>
    %9 = vector.shape_cast %8 : vector<16xf32> to vector<16x1xf32>
    %cst_8 = arith.constant 3.200000e+01 : f32
    %10 = vector.broadcast %cst_8 : f32 to vector<16x1xf32>
    %11 = arith.divf %9, %10 : vector<16x1xf32>
    %12 = vector.broadcast %11 : vector<16x1xf32> to vector<16x32xf32>
    %13 = arith.subf %3, %12 : vector<16x32xf32>
    %14 = arith.mulf %13, %13 : vector<16x32xf32>
    %cst_9 = arith.constant dense<0.000000e+00> : vector<16xf32>
    %15 = vector.multi_reduction <add>, %14, %cst_9 [1] : vector<16x32xf32> to vector<16xf32>
    %16 = vector.shape_cast %15 : vector<16xf32> to vector<16x1xf32>
    %cst_10 = arith.constant 3.200000e+01 : f32
    %17 = vector.broadcast %cst_10 : f32 to vector<16x1xf32>
    %18 = arith.divf %16, %17 : vector<16x1xf32>
    %19 = vector.broadcast %11 : vector<16x1xf32> to vector<16x32xf32>
    %20 = arith.subf %3, %19 : vector<16x32xf32>
    %cst_11 = arith.constant 9.99999974E-6 : f32
    %21 = vector.broadcast %cst_11 : f32 to vector<16x1xf32>
    %22 = arith.addf %18, %21 : vector<16x1xf32>
    %23 = math.rsqrt %22 : vector<16x1xf32>
    %24 = vector.broadcast %23 : vector<16x1xf32> to vector<16x32xf32>
    %25 = arith.mulf %20, %24 : vector<16x32xf32>
    %26 = vector.broadcast %5 : vector<1x32xf32> to vector<16x32xf32>
    %27 = arith.mulf %25, %26 : vector<16x32xf32>
    %28 = vector.broadcast %7 : vector<1x32xf32> to vector<16x32xf32>
    %29 = arith.addf %27, %28 : vector<16x32xf32>
    %c0_12 = arith.constant 0 : index
    %c0_13 = arith.constant 0 : index
    %c0_14 = arith.constant 0 : index
    %30 = vector.load %arg10[%c0_12, %c0_13, %c0_14] : memref<1x32x96xbf16, #tpu.memory_space<vmem>>, vector<1x32x96xbf16>
    %31 = vector.shape_cast %30 : vector<1x32x96xbf16> to vector<32x96xbf16>
    %32 = arith.truncf %29 : vector<16x32xf32> to vector<16x32xbf16>
    %cst_15 = arith.constant dense<0.000000e+00> : vector<16x96xf32>
    %33 = tpu.matmul %32, %31, %cst_15 {dimension_numbers = #tpu.dot_dimension_numbers<[1], [0], [0], [1], [0, 0, 1, 1], [], []>} : vector<16x32xbf16>, vector<32x96xbf16>, vector<16x96xf32> -> vector<16x96xf32>
    %c0_16 = arith.constant 0 : index
    %c0_17 = arith.constant 0 : index
    %c0_18 = arith.constant 0 : index
    %34 = vector.load %arg11[%c0_16, %c0_17, %c0_18] : memref<1x1x96xf32, #tpu.memory_space<vmem>>, vector<1x1x96xf32>
    %35 = vector.shape_cast %34 : vector<1x1x96xf32> to vector<1x96xf32>
    %36 = vector.broadcast %35 : vector<1x96xf32> to vector<16x96xf32>
    %37 = arith.addf %33, %36 : vector<16x96xf32>
    %38 = vector.extract_strided_slice %37 {offsets = [0, 0], sizes = [16, 32], strides = [1, 1]} : vector<16x96xf32> to vector<16x32xf32>
    %cst_19 = arith.constant 0.353553385 : f32
    %39 = vector.broadcast %cst_19 : f32 to vector<16x32xf32>
    %40 = arith.mulf %38, %39 : vector<16x32xf32>
    %41 = vector.extract_strided_slice %37 {offsets = [0, 32], sizes = [16, 32], strides = [1, 1]} : vector<16x96xf32> to vector<16x32xf32>
    %42 = vector.extract_strided_slice %37 {offsets = [0, 64], sizes = [16, 32], strides = [1, 1]} : vector<16x96xf32> to vector<16x32xf32>
    %43 = tpu.iota {dimensions = array<i32: 1>} : vector<8x8xi32>
    %c5_i32 = arith.constant 5 : i32
    %44 = vector.broadcast %c5_i32 : i32 to vector<8x8xi32>
    %45 = arith.cmpi sge, %43, %44 : vector<8x8xi32>
    %cst_20 = arith.constant -1.000000e+30 : f32
    %cst_21 = arith.constant 0.000000e+00 : f32
    %46 = vector.broadcast %cst_20 : f32 to vector<8x8xf32>
    %47 = vector.broadcast %cst_21 : f32 to vector<8x8xf32>
    %48 = arith.select %45, %46, %47 : vector<8x8xi1>, vector<8x8xf32>
    %cst_22 = arith.constant 0.000000e+00 : f32
    %49 = vector.broadcast %cst_22 : f32 to vector<8x32xf32>
    %50 = vector.extract_strided_slice %40 {offsets = [0, 0], sizes = [8, 8], strides = [1, 1]} : vector<16x32xf32> to vector<8x8xf32>
    %51 = vector.extract_strided_slice %41 {offsets = [0, 0], sizes = [8, 8], strides = [1, 1]} : vector<16x32xf32> to vector<8x8xf32>
    %52 = vector.extract_strided_slice %42 {offsets = [0, 0], sizes = [8, 8], strides = [1, 1]} : vector<16x32xf32> to vector<8x8xf32>
    %53 = arith.truncf %50 : vector<8x8xf32> to vector<8x8xbf16>
    %54 = arith.truncf %51 : vector<8x8xf32> to vector<8x8xbf16>
    %cst_23 = arith.constant dense<0.000000e+00> : vector<8x8xf32>
    %55 = tpu.matmul %53, %54, %cst_23 {dimension_numbers = #tpu.dot_dimension_numbers<[1], [1], [0], [0], [0, 0, 1, 0], [], []>} : vector<8x8xbf16>, vector<8x8xbf16>, vector<8x8xf32> -> vector<8x8xf32>
    %56 = arith.addf %55, %48 : vector<8x8xf32>
    %cst_24 = arith.constant dense<0xFF800000> : vector<8xf32>
    %57 = vector.multi_reduction <maximumf>, %56, %cst_24 [1] : vector<8x8xf32> to vector<8xf32>
    %58 = vector.shape_cast %57 : vector<8xf32> to vector<8x1xf32>
    %59 = vector.broadcast %58 : vector<8x1xf32> to vector<8x8xf32>
    %60 = arith.subf %56, %59 : vector<8x8xf32>
    %61 = math.exp %60 : vector<8x8xf32>
    %cst_25 = arith.constant dense<0.000000e+00> : vector<8xf32>
    %62 = vector.multi_reduction <add>, %61, %cst_25 [1] : vector<8x8xf32> to vector<8xf32>
    %63 = vector.shape_cast %62 : vector<8xf32> to vector<8x1xf32>
    %64 = vector.broadcast %63 : vector<8x1xf32> to vector<8x8xf32>
    %65 = arith.divf %61, %64 : vector<8x8xf32>
    %66 = arith.truncf %65 : vector<8x8xf32> to vector<8x8xbf16>
    %67 = arith.truncf %52 : vector<8x8xf32> to vector<8x8xbf16>
    %cst_26 = arith.constant dense<0.000000e+00> : vector<8x8xf32>
    %68 = tpu.matmul %66, %67, %cst_26 {dimension_numbers = #tpu.dot_dimension_numbers<[1], [0], [0], [1], [0, 0, 1, 1], [], []>} : vector<8x8xbf16>, vector<8x8xbf16>, vector<8x8xf32> -> vector<8x8xf32>
    %c0_27 = arith.constant 0 : index
    %c0_28 = arith.constant 0 : index
    %c0_29 = arith.constant 0 : index
    %69 = vector.load %arg12[%c0_27, %c0_28, %c0_29] : memref<1x32x32xbf16, #tpu.memory_space<vmem>>, vector<1x8x32xbf16>
    %70 = vector.shape_cast %69 : vector<1x8x32xbf16> to vector<8x32xbf16>
    %71 = arith.truncf %68 : vector<8x8xf32> to vector<8x8xbf16>
    %cst_30 = arith.constant dense<0.000000e+00> : vector<8x32xf32>
    %72 = tpu.matmul %71, %70, %cst_30 {dimension_numbers = #tpu.dot_dimension_numbers<[1], [0], [0], [1], [0, 0, 1, 1], [], []>} : vector<8x8xbf16>, vector<8x32xbf16>, vector<8x32xf32> -> vector<8x32xf32>
    %73 = arith.addf %49, %72 : vector<8x32xf32>
    %74 = vector.extract_strided_slice %40 {offsets = [0, 8], sizes = [8, 8], strides = [1, 1]} : vector<16x32xf32> to vector<8x8xf32>
    %75 = vector.extract_strided_slice %41 {offsets = [0, 8], sizes = [8, 8], strides = [1, 1]} : vector<16x32xf32> to vector<8x8xf32>
    %76 = vector.extract_strided_slice %42 {offsets = [0, 8], sizes = [8, 8], strides = [1, 1]} : vector<16x32xf32> to vector<8x8xf32>
    %77 = arith.truncf %74 : vector<8x8xf32> to vector<8x8xbf16>
    %78 = arith.truncf %75 : vector<8x8xf32> to vector<8x8xbf16>
    %cst_31 = arith.constant dense<0.000000e+00> : vector<8x8xf32>
    %79 = tpu.matmul %77, %78, %cst_31 {dimension_numbers = #tpu.dot_dimension_numbers<[1], [1], [0], [0], [0, 0, 1, 0], [], []>} : vector<8x8xbf16>, vector<8x8xbf16>, vector<8x8xf32> -> vector<8x8xf32>
    %80 = arith.addf %79, %48 : vector<8x8xf32>
    %cst_32 = arith.constant dense<0xFF800000> : vector<8xf32>
    %81 = vector.multi_reduction <maximumf>, %80, %cst_32 [1] : vector<8x8xf32> to vector<8xf32>
    %82 = vector.shape_cast %81 : vector<8xf32> to vector<8x1xf32>
    %83 = vector.broadcast %82 : vector<8x1xf32> to vector<8x8xf32>
    %84 = arith.subf %80, %83 : vector<8x8xf32>
    %85 = math.exp %84 : vector<8x8xf32>
    %cst_33 = arith.constant dense<0.000000e+00> : vector<8xf32>
    %86 = vector.multi_reduction <add>, %85, %cst_33 [1] : vector<8x8xf32> to vector<8xf32>
    %87 = vector.shape_cast %86 : vector<8xf32> to vector<8x1xf32>
    %88 = vector.broadcast %87 : vector<8x1xf32> to vector<8x8xf32>
    %89 = arith.divf %85, %88 : vector<8x8xf32>
    %90 = arith.truncf %89 : vector<8x8xf32> to vector<8x8xbf16>
    %91 = arith.truncf %76 : vector<8x8xf32> to vector<8x8xbf16>
    %cst_34 = arith.constant dense<0.000000e+00> : vector<8x8xf32>
    %92 = tpu.matmul %90, %91, %cst_34 {dimension_numbers = #tpu.dot_dimension_numbers<[1], [0], [0], [1], [0, 0, 1, 1], [], []>} : vector<8x8xbf16>, vector<8x8xbf16>, vector<8x8xf32> -> vector<8x8xf32>
    %c0_35 = arith.constant 0 : index
    %c8 = arith.constant 8 : index
    %c0_36 = arith.constant 0 : index
    %93 = vector.load %arg12[%c0_35, %c8, %c0_36] : memref<1x32x32xbf16, #tpu.memory_space<vmem>>, vector<1x8x32xbf16>
    %94 = vector.shape_cast %93 : vector<1x8x32xbf16> to vector<8x32xbf16>
    %95 = arith.truncf %92 : vector<8x8xf32> to vector<8x8xbf16>
    %cst_37 = arith.constant dense<0.000000e+00> : vector<8x32xf32>
    %96 = tpu.matmul %95, %94, %cst_37 {dimension_numbers = #tpu.dot_dimension_numbers<[1], [0], [0], [1], [0, 0, 1, 1], [], []>} : vector<8x8xbf16>, vector<8x32xbf16>, vector<8x32xf32> -> vector<8x32xf32>
    %97 = arith.addf %73, %96 : vector<8x32xf32>
    %98 = vector.extract_strided_slice %40 {offsets = [0, 16], sizes = [8, 8], strides = [1, 1]} : vector<16x32xf32> to vector<8x8xf32>
    %99 = vector.extract_strided_slice %41 {offsets = [0, 16], sizes = [8, 8], strides = [1, 1]} : vector<16x32xf32> to vector<8x8xf32>
    %100 = vector.extract_strided_slice %42 {offsets = [0, 16], sizes = [8, 8], strides = [1, 1]} : vector<16x32xf32> to vector<8x8xf32>
    %101 = arith.truncf %98 : vector<8x8xf32> to vector<8x8xbf16>
    %102 = arith.truncf %99 : vector<8x8xf32> to vector<8x8xbf16>
    %cst_38 = arith.constant dense<0.000000e+00> : vector<8x8xf32>
    %103 = tpu.matmul %101, %102, %cst_38 {dimension_numbers = #tpu.dot_dimension_numbers<[1], [1], [0], [0], [0, 0, 1, 0], [], []>} : vector<8x8xbf16>, vector<8x8xbf16>, vector<8x8xf32> -> vector<8x8xf32>
    %104 = arith.addf %103, %48 : vector<8x8xf32>
    %cst_39 = arith.constant dense<0xFF800000> : vector<8xf32>
    %105 = vector.multi_reduction <maximumf>, %104, %cst_39 [1] : vector<8x8xf32> to vector<8xf32>
    %106 = vector.shape_cast %105 : vector<8xf32> to vector<8x1xf32>
    %107 = vector.broadcast %106 : vector<8x1xf32> to vector<8x8xf32>
    %108 = arith.subf %104, %107 : vector<8x8xf32>
    %109 = math.exp %108 : vector<8x8xf32>
    %cst_40 = arith.constant dense<0.000000e+00> : vector<8xf32>
    %110 = vector.multi_reduction <add>, %109, %cst_40 [1] : vector<8x8xf32> to vector<8xf32>
    %111 = vector.shape_cast %110 : vector<8xf32> to vector<8x1xf32>
    %112 = vector.broadcast %111 : vector<8x1xf32> to vector<8x8xf32>
    %113 = arith.divf %109, %112 : vector<8x8xf32>
    %114 = arith.truncf %113 : vector<8x8xf32> to vector<8x8xbf16>
    %115 = arith.truncf %100 : vector<8x8xf32> to vector<8x8xbf16>
    %cst_41 = arith.constant dense<0.000000e+00> : vector<8x8xf32>
    %116 = tpu.matmul %114, %115, %cst_41 {dimension_numbers = #tpu.dot_dimension_numbers<[1], [0], [0], [1], [0, 0, 1, 1], [], []>} : vector<8x8xbf16>, vector<8x8xbf16>, vector<8x8xf32> -> vector<8x8xf32>
    %c0_42 = arith.constant 0 : index
    %c16 = arith.constant 16 : index
    %c0_43 = arith.constant 0 : index
    %117 = vector.load %arg12[%c0_42, %c16, %c0_43] : memref<1x32x32xbf16, #tpu.memory_space<vmem>>, vector<1x8x32xbf16>
    %118 = vector.shape_cast %117 : vector<1x8x32xbf16> to vector<8x32xbf16>
    %119 = arith.truncf %116 : vector<8x8xf32> to vector<8x8xbf16>
    %cst_44 = arith.constant dense<0.000000e+00> : vector<8x32xf32>
    %120 = tpu.matmul %119, %118, %cst_44 {dimension_numbers = #tpu.dot_dimension_numbers<[1], [0], [0], [1], [0, 0, 1, 1], [], []>} : vector<8x8xbf16>, vector<8x32xbf16>, vector<8x32xf32> -> vector<8x32xf32>
    %121 = arith.addf %97, %120 : vector<8x32xf32>
    %122 = vector.extract_strided_slice %40 {offsets = [0, 24], sizes = [8, 8], strides = [1, 1]} : vector<16x32xf32> to vector<8x8xf32>
    %123 = vector.extract_strided_slice %41 {offsets = [0, 24], sizes = [8, 8], strides = [1, 1]} : vector<16x32xf32> to vector<8x8xf32>
    %124 = vector.extract_strided_slice %42 {offsets = [0, 24], sizes = [8, 8], strides = [1, 1]} : vector<16x32xf32> to vector<8x8xf32>
    %125 = arith.truncf %122 : vector<8x8xf32> to vector<8x8xbf16>
    %126 = arith.truncf %123 : vector<8x8xf32> to vector<8x8xbf16>
    %cst_45 = arith.constant dense<0.000000e+00> : vector<8x8xf32>
    %127 = tpu.matmul %125, %126, %cst_45 {dimension_numbers = #tpu.dot_dimension_numbers<[1], [1], [0], [0], [0, 0, 1, 0], [], []>} : vector<8x8xbf16>, vector<8x8xbf16>, vector<8x8xf32> -> vector<8x8xf32>
    %128 = arith.addf %127, %48 : vector<8x8xf32>
    %cst_46 = arith.constant dense<0xFF800000> : vector<8xf32>
    %129 = vector.multi_reduction <maximumf>, %128, %cst_46 [1] : vector<8x8xf32> to vector<8xf32>
    %130 = vector.shape_cast %129 : vector<8xf32> to vector<8x1xf32>
    %131 = vector.broadcast %130 : vector<8x1xf32> to vector<8x8xf32>
    %132 = arith.subf %128, %131 : vector<8x8xf32>
    %133 = math.exp %132 : vector<8x8xf32>
    %cst_47 = arith.constant dense<0.000000e+00> : vector<8xf32>
    %134 = vector.multi_reduction <add>, %133, %cst_47 [1] : vector<8x8xf32> to vector<8xf32>
    %135 = vector.shape_cast %134 : vector<8xf32> to vector<8x1xf32>
    %136 = vector.broadcast %135 : vector<8x1xf32> to vector<8x8xf32>
    %137 = arith.divf %133, %136 : vector<8x8xf32>
    %138 = arith.truncf %137 : vector<8x8xf32> to vector<8x8xbf16>
    %139 = arith.truncf %124 : vector<8x8xf32> to vector<8x8xbf16>
    %cst_48 = arith.constant dense<0.000000e+00> : vector<8x8xf32>
    %140 = tpu.matmul %138, %139, %cst_48 {dimension_numbers = #tpu.dot_dimension_numbers<[1], [0], [0], [1], [0, 0, 1, 1], [], []>} : vector<8x8xbf16>, vector<8x8xbf16>, vector<8x8xf32> -> vector<8x8xf32>
    %c0_49 = arith.constant 0 : index
    %c24 = arith.constant 24 : index
    %c0_50 = arith.constant 0 : index
    %141 = vector.load %arg12[%c0_49, %c24, %c0_50] : memref<1x32x32xbf16, #tpu.memory_space<vmem>>, vector<1x8x32xbf16>
    %142 = vector.shape_cast %141 : vector<1x8x32xbf16> to vector<8x32xbf16>
    %143 = arith.truncf %140 : vector<8x8xf32> to vector<8x8xbf16>
    %cst_51 = arith.constant dense<0.000000e+00> : vector<8x32xf32>
    %144 = tpu.matmul %143, %142, %cst_51 {dimension_numbers = #tpu.dot_dimension_numbers<[1], [0], [0], [1], [0, 0, 1, 1], [], []>} : vector<8x8xbf16>, vector<8x32xbf16>, vector<8x32xf32> -> vector<8x32xf32>
    %145 = arith.addf %121, %144 : vector<8x32xf32>
    %cst_52 = arith.constant 0.000000e+00 : f32
    %146 = vector.broadcast %cst_52 : f32 to vector<8x32xf32>
    %147 = vector.extract_strided_slice %40 {offsets = [8, 0], sizes = [8, 8], strides = [1, 1]} : vector<16x32xf32> to vector<8x8xf32>
    %148 = vector.extract_strided_slice %41 {offsets = [8, 0], sizes = [8, 8], strides = [1, 1]} : vector<16x32xf32> to vector<8x8xf32>
    %149 = vector.extract_strided_slice %42 {offsets = [8, 0], sizes = [8, 8], strides = [1, 1]} : vector<16x32xf32> to vector<8x8xf32>
    %150 = arith.truncf %147 : vector<8x8xf32> to vector<8x8xbf16>
    %151 = arith.truncf %148 : vector<8x8xf32> to vector<8x8xbf16>
    %cst_53 = arith.constant dense<0.000000e+00> : vector<8x8xf32>
    %152 = tpu.matmul %150, %151, %cst_53 {dimension_numbers = #tpu.dot_dimension_numbers<[1], [1], [0], [0], [0, 0, 1, 0], [], []>} : vector<8x8xbf16>, vector<8x8xbf16>, vector<8x8xf32> -> vector<8x8xf32>
    %153 = arith.addf %152, %48 : vector<8x8xf32>
    %cst_54 = arith.constant dense<0xFF800000> : vector<8xf32>
    %154 = vector.multi_reduction <maximumf>, %153, %cst_54 [1] : vector<8x8xf32> to vector<8xf32>
    %155 = vector.shape_cast %154 : vector<8xf32> to vector<8x1xf32>
    %156 = vector.broadcast %155 : vector<8x1xf32> to vector<8x8xf32>
    %157 = arith.subf %153, %156 : vector<8x8xf32>
    %158 = math.exp %157 : vector<8x8xf32>
    %cst_55 = arith.constant dense<0.000000e+00> : vector<8xf32>
    %159 = vector.multi_reduction <add>, %158, %cst_55 [1] : vector<8x8xf32> to vector<8xf32>
    %160 = vector.shape_cast %159 : vector<8xf32> to vector<8x1xf32>
    %161 = vector.broadcast %160 : vector<8x1xf32> to vector<8x8xf32>
    %162 = arith.divf %158, %161 : vector<8x8xf32>
    %163 = arith.truncf %162 : vector<8x8xf32> to vector<8x8xbf16>
    %164 = arith.truncf %149 : vector<8x8xf32> to vector<8x8xbf16>
    %cst_56 = arith.constant dense<0.000000e+00> : vector<8x8xf32>
    %165 = tpu.matmul %163, %164, %cst_56 {dimension_numbers = #tpu.dot_dimension_numbers<[1], [0], [0], [1], [0, 0, 1, 1], [], []>} : vector<8x8xbf16>, vector<8x8xbf16>, vector<8x8xf32> -> vector<8x8xf32>
    %c0_57 = arith.constant 0 : index
    %c0_58 = arith.constant 0 : index
    %c0_59 = arith.constant 0 : index
    %166 = vector.load %arg12[%c0_57, %c0_58, %c0_59] : memref<1x32x32xbf16, #tpu.memory_space<vmem>>, vector<1x8x32xbf16>
    %167 = vector.shape_cast %166 : vector<1x8x32xbf16> to vector<8x32xbf16>
    %168 = arith.truncf %165 : vector<8x8xf32> to vector<8x8xbf16>
    %cst_60 = arith.constant dense<0.000000e+00> : vector<8x32xf32>
    %169 = tpu.matmul %168, %167, %cst_60 {dimension_numbers = #tpu.dot_dimension_numbers<[1], [0], [0], [1], [0, 0, 1, 1], [], []>} : vector<8x8xbf16>, vector<8x32xbf16>, vector<8x32xf32> -> vector<8x32xf32>
    %170 = arith.addf %146, %169 : vector<8x32xf32>
    %171 = vector.extract_strided_slice %40 {offsets = [8, 8], sizes = [8, 8], strides = [1, 1]} : vector<16x32xf32> to vector<8x8xf32>
    %172 = vector.extract_strided_slice %41 {offsets = [8, 8], sizes = [8, 8], strides = [1, 1]} : vector<16x32xf32> to vector<8x8xf32>
    %173 = vector.extract_strided_slice %42 {offsets = [8, 8], sizes = [8, 8], strides = [1, 1]} : vector<16x32xf32> to vector<8x8xf32>
    %174 = arith.truncf %171 : vector<8x8xf32> to vector<8x8xbf16>
    %175 = arith.truncf %172 : vector<8x8xf32> to vector<8x8xbf16>
    %cst_61 = arith.constant dense<0.000000e+00> : vector<8x8xf32>
    %176 = tpu.matmul %174, %175, %cst_61 {dimension_numbers = #tpu.dot_dimension_numbers<[1], [1], [0], [0], [0, 0, 1, 0], [], []>} : vector<8x8xbf16>, vector<8x8xbf16>, vector<8x8xf32> -> vector<8x8xf32>
    %177 = arith.addf %176, %48 : vector<8x8xf32>
    %cst_62 = arith.constant dense<0xFF800000> : vector<8xf32>
    %178 = vector.multi_reduction <maximumf>, %177, %cst_62 [1] : vector<8x8xf32> to vector<8xf32>
    %179 = vector.shape_cast %178 : vector<8xf32> to vector<8x1xf32>
    %180 = vector.broadcast %179 : vector<8x1xf32> to vector<8x8xf32>
    %181 = arith.subf %177, %180 : vector<8x8xf32>
    %182 = math.exp %181 : vector<8x8xf32>
    %cst_63 = arith.constant dense<0.000000e+00> : vector<8xf32>
    %183 = vector.multi_reduction <add>, %182, %cst_63 [1] : vector<8x8xf32> to vector<8xf32>
    %184 = vector.shape_cast %183 : vector<8xf32> to vector<8x1xf32>
    %185 = vector.broadcast %184 : vector<8x1xf32> to vector<8x8xf32>
    %186 = arith.divf %182, %185 : vector<8x8xf32>
    %187 = arith.truncf %186 : vector<8x8xf32> to vector<8x8xbf16>
    %188 = arith.truncf %173 : vector<8x8xf32> to vector<8x8xbf16>
    %cst_64 = arith.constant dense<0.000000e+00> : vector<8x8xf32>
    %189 = tpu.matmul %187, %188, %cst_64 {dimension_numbers = #tpu.dot_dimension_numbers<[1], [0], [0], [1], [0, 0, 1, 1], [], []>} : vector<8x8xbf16>, vector<8x8xbf16>, vector<8x8xf32> -> vector<8x8xf32>
    %c0_65 = arith.constant 0 : index
    %c8_66 = arith.constant 8 : index
    %c0_67 = arith.constant 0 : index
    %190 = vector.load %arg12[%c0_65, %c8_66, %c0_67] : memref<1x32x32xbf16, #tpu.memory_space<vmem>>, vector<1x8x32xbf16>
    %191 = vector.shape_cast %190 : vector<1x8x32xbf16> to vector<8x32xbf16>
    %192 = arith.truncf %189 : vector<8x8xf32> to vector<8x8xbf16>
    %cst_68 = arith.constant dense<0.000000e+00> : vector<8x32xf32>
    %193 = tpu.matmul %192, %191, %cst_68 {dimension_numbers = #tpu.dot_dimension_numbers<[1], [0], [0], [1], [0, 0, 1, 1], [], []>} : vector<8x8xbf16>, vector<8x32xbf16>, vector<8x32xf32> -> vector<8x32xf32>
    %194 = arith.addf %170, %193 : vector<8x32xf32>
    %195 = vector.extract_strided_slice %40 {offsets = [8, 16], sizes = [8, 8], strides = [1, 1]} : vector<16x32xf32> to vector<8x8xf32>
    %196 = vector.extract_strided_slice %41 {offsets = [8, 16], sizes = [8, 8], strides = [1, 1]} : vector<16x32xf32> to vector<8x8xf32>
    %197 = vector.extract_strided_slice %42 {offsets = [8, 16], sizes = [8, 8], strides = [1, 1]} : vector<16x32xf32> to vector<8x8xf32>
    %198 = arith.truncf %195 : vector<8x8xf32> to vector<8x8xbf16>
    %199 = arith.truncf %196 : vector<8x8xf32> to vector<8x8xbf16>
    %cst_69 = arith.constant dense<0.000000e+00> : vector<8x8xf32>
    %200 = tpu.matmul %198, %199, %cst_69 {dimension_numbers = #tpu.dot_dimension_numbers<[1], [1], [0], [0], [0, 0, 1, 0], [], []>} : vector<8x8xbf16>, vector<8x8xbf16>, vector<8x8xf32> -> vector<8x8xf32>
    %201 = arith.addf %200, %48 : vector<8x8xf32>
    %cst_70 = arith.constant dense<0xFF800000> : vector<8xf32>
    %202 = vector.multi_reduction <maximumf>, %201, %cst_70 [1] : vector<8x8xf32> to vector<8xf32>
    %203 = vector.shape_cast %202 : vector<8xf32> to vector<8x1xf32>
    %204 = vector.broadcast %203 : vector<8x1xf32> to vector<8x8xf32>
    %205 = arith.subf %201, %204 : vector<8x8xf32>
    %206 = math.exp %205 : vector<8x8xf32>
    %cst_71 = arith.constant dense<0.000000e+00> : vector<8xf32>
    %207 = vector.multi_reduction <add>, %206, %cst_71 [1] : vector<8x8xf32> to vector<8xf32>
    %208 = vector.shape_cast %207 : vector<8xf32> to vector<8x1xf32>
    %209 = vector.broadcast %208 : vector<8x1xf32> to vector<8x8xf32>
    %210 = arith.divf %206, %209 : vector<8x8xf32>
    %211 = arith.truncf %210 : vector<8x8xf32> to vector<8x8xbf16>
    %212 = arith.truncf %197 : vector<8x8xf32> to vector<8x8xbf16>
    %cst_72 = arith.constant dense<0.000000e+00> : vector<8x8xf32>
    %213 = tpu.matmul %211, %212, %cst_72 {dimension_numbers = #tpu.dot_dimension_numbers<[1], [0], [0], [1], [0, 0, 1, 1], [], []>} : vector<8x8xbf16>, vector<8x8xbf16>, vector<8x8xf32> -> vector<8x8xf32>
    %c0_73 = arith.constant 0 : index
    %c16_74 = arith.constant 16 : index
    %c0_75 = arith.constant 0 : index
    %214 = vector.load %arg12[%c0_73, %c16_74, %c0_75] : memref<1x32x32xbf16, #tpu.memory_space<vmem>>, vector<1x8x32xbf16>
    %215 = vector.shape_cast %214 : vector<1x8x32xbf16> to vector<8x32xbf16>
    %216 = arith.truncf %213 : vector<8x8xf32> to vector<8x8xbf16>
    %cst_76 = arith.constant dense<0.000000e+00> : vector<8x32xf32>
    %217 = tpu.matmul %216, %215, %cst_76 {dimension_numbers = #tpu.dot_dimension_numbers<[1], [0], [0], [1], [0, 0, 1, 1], [], []>} : vector<8x8xbf16>, vector<8x32xbf16>, vector<8x32xf32> -> vector<8x32xf32>
    %218 = arith.addf %194, %217 : vector<8x32xf32>
    %219 = vector.extract_strided_slice %40 {offsets = [8, 24], sizes = [8, 8], strides = [1, 1]} : vector<16x32xf32> to vector<8x8xf32>
    %220 = vector.extract_strided_slice %41 {offsets = [8, 24], sizes = [8, 8], strides = [1, 1]} : vector<16x32xf32> to vector<8x8xf32>
    %221 = vector.extract_strided_slice %42 {offsets = [8, 24], sizes = [8, 8], strides = [1, 1]} : vector<16x32xf32> to vector<8x8xf32>
    %222 = arith.truncf %219 : vector<8x8xf32> to vector<8x8xbf16>
    %223 = arith.truncf %220 : vector<8x8xf32> to vector<8x8xbf16>
    %cst_77 = arith.constant dense<0.000000e+00> : vector<8x8xf32>
    %224 = tpu.matmul %222, %223, %cst_77 {dimension_numbers = #tpu.dot_dimension_numbers<[1], [1], [0], [0], [0, 0, 1, 0], [], []>} : vector<8x8xbf16>, vector<8x8xbf16>, vector<8x8xf32> -> vector<8x8xf32>
    %225 = arith.addf %224, %48 : vector<8x8xf32>
    %cst_78 = arith.constant dense<0xFF800000> : vector<8xf32>
    %226 = vector.multi_reduction <maximumf>, %225, %cst_78 [1] : vector<8x8xf32> to vector<8xf32>
    %227 = vector.shape_cast %226 : vector<8xf32> to vector<8x1xf32>
    %228 = vector.broadcast %227 : vector<8x1xf32> to vector<8x8xf32>
    %229 = arith.subf %225, %228 : vector<8x8xf32>
    %230 = math.exp %229 : vector<8x8xf32>
    %cst_79 = arith.constant dense<0.000000e+00> : vector<8xf32>
    %231 = vector.multi_reduction <add>, %230, %cst_79 [1] : vector<8x8xf32> to vector<8xf32>
    %232 = vector.shape_cast %231 : vector<8xf32> to vector<8x1xf32>
    %233 = vector.broadcast %232 : vector<8x1xf32> to vector<8x8xf32>
    %234 = arith.divf %230, %233 : vector<8x8xf32>
    %235 = arith.truncf %234 : vector<8x8xf32> to vector<8x8xbf16>
    %236 = arith.truncf %221 : vector<8x8xf32> to vector<8x8xbf16>
    %cst_80 = arith.constant dense<0.000000e+00> : vector<8x8xf32>
    %237 = tpu.matmul %235, %236, %cst_80 {dimension_numbers = #tpu.dot_dimension_numbers<[1], [0], [0], [1], [0, 0, 1, 1], [], []>} : vector<8x8xbf16>, vector<8x8xbf16>, vector<8x8xf32> -> vector<8x8xf32>
    %c0_81 = arith.constant 0 : index
    %c24_82 = arith.constant 24 : index
    %c0_83 = arith.constant 0 : index
    %238 = vector.load %arg12[%c0_81, %c24_82, %c0_83] : memref<1x32x32xbf16, #tpu.memory_space<vmem>>, vector<1x8x32xbf16>
    %239 = vector.shape_cast %238 : vector<1x8x32xbf16> to vector<8x32xbf16>
    %240 = arith.truncf %237 : vector<8x8xf32> to vector<8x8xbf16>
    %cst_84 = arith.constant dense<0.000000e+00> : vector<8x32xf32>
    %241 = tpu.matmul %240, %239, %cst_84 {dimension_numbers = #tpu.dot_dimension_numbers<[1], [0], [0], [1], [0, 0, 1, 1], [], []>} : vector<8x8xbf16>, vector<8x32xbf16>, vector<8x32xf32> -> vector<8x32xf32>
    %242 = arith.addf %218, %241 : vector<8x32xf32>
    %243 = tpu.concatenate %145, %242 in 0 : vector<8x32xf32>, vector<8x32xf32> -> vector<16x32xf32>
    %244 = arith.addf %3, %243 : vector<16x32xf32>
    %c0_85 = arith.constant 0 : index
    %c0_86 = arith.constant 0 : index
    %c0_87 = arith.constant 0 : index
    %245 = vector.load %arg13[%c0_85, %c0_86, %c0_87] : memref<1x1x32xf32, #tpu.memory_space<vmem>>, vector<1x1x32xf32>
    %246 = vector.shape_cast %245 : vector<1x1x32xf32> to vector<1x32xf32>
    %247 = vector.broadcast %246 : vector<1x32xf32> to vector<16x32xf32>
    %248 = arith.addf %244, %247 : vector<16x32xf32>
    %c0_88 = arith.constant 0 : index
    %c0_89 = arith.constant 0 : index
    %c0_90 = arith.constant 0 : index
    %249 = vector.load %arg14[%c0_88, %c0_89, %c0_90] : memref<1x1x32xf32, #tpu.memory_space<vmem>>, vector<1x1x32xf32>
    %250 = vector.shape_cast %249 : vector<1x1x32xf32> to vector<1x32xf32>
    %c0_91 = arith.constant 0 : index
    %c0_92 = arith.constant 0 : index
    %c0_93 = arith.constant 0 : index
    %251 = vector.load %arg15[%c0_91, %c0_92, %c0_93] : memref<1x1x32xf32, #tpu.memory_space<vmem>>, vector<1x1x32xf32>
    %252 = vector.shape_cast %251 : vector<1x1x32xf32> to vector<1x32xf32>
    %cst_94 = arith.constant dense<0.000000e+00> : vector<16xf32>
    %253 = vector.multi_reduction <add>, %248, %cst_94 [1] : vector<16x32xf32> to vector<16xf32>
    %254 = vector.shape_cast %253 : vector<16xf32> to vector<16x1xf32>
    %cst_95 = arith.constant 3.200000e+01 : f32
    %255 = vector.broadcast %cst_95 : f32 to vector<16x1xf32>
    %256 = arith.divf %254, %255 : vector<16x1xf32>
    %257 = vector.broadcast %256 : vector<16x1xf32> to vector<16x32xf32>
    %258 = arith.subf %248, %257 : vector<16x32xf32>
    %259 = arith.mulf %258, %258 : vector<16x32xf32>
    %cst_96 = arith.constant dense<0.000000e+00> : vector<16xf32>
    %260 = vector.multi_reduction <add>, %259, %cst_96 [1] : vector<16x32xf32> to vector<16xf32>
    %261 = vector.shape_cast %260 : vector<16xf32> to vector<16x1xf32>
    %cst_97 = arith.constant 3.200000e+01 : f32
    %262 = vector.broadcast %cst_97 : f32 to vector<16x1xf32>
    %263 = arith.divf %261, %262 : vector<16x1xf32>
    %264 = vector.broadcast %256 : vector<16x1xf32> to vector<16x32xf32>
    %265 = arith.subf %248, %264 : vector<16x32xf32>
    %cst_98 = arith.constant 9.99999974E-6 : f32
    %266 = vector.broadcast %cst_98 : f32 to vector<16x1xf32>
    %267 = arith.addf %263, %266 : vector<16x1xf32>
    %268 = math.rsqrt %267 : vector<16x1xf32>
    %269 = vector.broadcast %268 : vector<16x1xf32> to vector<16x32xf32>
    %270 = arith.mulf %265, %269 : vector<16x32xf32>
    %271 = vector.broadcast %250 : vector<1x32xf32> to vector<16x32xf32>
    %272 = arith.mulf %270, %271 : vector<16x32xf32>
    %273 = vector.broadcast %252 : vector<1x32xf32> to vector<16x32xf32>
    %274 = arith.addf %272, %273 : vector<16x32xf32>
    %c0_99 = arith.constant 0 : index
    %c0_100 = arith.constant 0 : index
    %c0_101 = arith.constant 0 : index
    %275 = vector.load %arg16[%c0_99, %c0_100, %c0_101] : memref<1x32x128xbf16, #tpu.memory_space<vmem>>, vector<1x32x128xbf16>
    %276 = vector.shape_cast %275 : vector<1x32x128xbf16> to vector<32x128xbf16>
    %277 = arith.truncf %274 : vector<16x32xf32> to vector<16x32xbf16>
    %cst_102 = arith.constant dense<0.000000e+00> : vector<16x128xf32>
    %278 = tpu.matmul %277, %276, %cst_102 {dimension_numbers = #tpu.dot_dimension_numbers<[1], [0], [0], [1], [0, 0, 1, 1], [], []>} : vector<16x32xbf16>, vector<32x128xbf16>, vector<16x128xf32> -> vector<16x128xf32>
    %c0_103 = arith.constant 0 : index
    %c0_104 = arith.constant 0 : index
    %c0_105 = arith.constant 0 : index
    %279 = vector.load %arg17[%c0_103, %c0_104, %c0_105] : memref<1x1x128xf32, #tpu.memory_space<vmem>>, vector<1x1x128xf32>
    %280 = vector.shape_cast %279 : vector<1x1x128xf32> to vector<1x128xf32>
    %281 = vector.broadcast %280 : vector<1x128xf32> to vector<16x128xf32>
    %282 = arith.addf %278, %281 : vector<16x128xf32>
    %cst_106 = arith.constant 1.702000e+00 : f32
    %283 = vector.broadcast %cst_106 : f32 to vector<16x128xf32>
    %284 = arith.mulf %283, %282 : vector<16x128xf32>
    %285 = arith.negf %284 : vector<16x128xf32>
    %286 = math.exp %285 : vector<16x128xf32>
    %cst_107 = arith.constant 1.000000e+00 : f32
    %287 = vector.broadcast %cst_107 : f32 to vector<16x128xf32>
    %288 = arith.addf %287, %286 : vector<16x128xf32>
    %289 = arith.divf %287, %288 : vector<16x128xf32>
    %290 = arith.mulf %282, %289 : vector<16x128xf32>
    %c0_108 = arith.constant 0 : index
    %c0_109 = arith.constant 0 : index
    %c0_110 = arith.constant 0 : index
    %291 = vector.load %arg18[%c0_108, %c0_109, %c0_110] : memref<1x128x32xbf16, #tpu.memory_space<vmem>>, vector<1x128x32xbf16>
    %292 = vector.shape_cast %291 : vector<1x128x32xbf16> to vector<128x32xbf16>
    %293 = arith.truncf %290 : vector<16x128xf32> to vector<16x128xbf16>
    %cst_111 = arith.constant dense<0.000000e+00> : vector<16x32xf32>
    %294 = tpu.matmul %293, %292, %cst_111 {dimension_numbers = #tpu.dot_dimension_numbers<[1], [0], [0], [1], [0, 0, 1, 1], [], []>} : vector<16x128xbf16>, vector<128x32xbf16>, vector<16x32xf32> -> vector<16x32xf32>
    %295 = arith.addf %248, %294 : vector<16x32xf32>
    %c0_112 = arith.constant 0 : index
    %c0_113 = arith.constant 0 : index
    %c0_114 = arith.constant 0 : index
    %296 = vector.load %arg19[%c0_112, %c0_113, %c0_114] : memref<1x1x32xf32, #tpu.memory_space<vmem>>, vector<1x1x32xf32>
    %297 = vector.shape_cast %296 : vector<1x1x32xf32> to vector<1x32xf32>
    %298 = vector.broadcast %297 : vector<1x32xf32> to vector<16x32xf32>
    %299 = arith.addf %295, %298 : vector<16x32xf32>
    %c0_115 = arith.constant 0 : index
    %c0_116 = arith.constant 0 : index
    %300 = vector.load %arg24[%c0_115, %c0_116] : memref<16x32xf32, #tpu.memory_space<vmem>>, vector<16x32xf32>
    tpu.vector_store %arg24[%c0_115, %c0_116], %299 {strides = array<i32>} : memref<16x32xf32, #tpu.memory_space<vmem>>, vector<16x32xf32>,
    %c1_i32 = arith.constant 1 : i32
    %301 = arith.cmpi eq, %arg1, %c1_i32 : i32
    %302 = arith.extui %301 : i1 to i32
    %c0_i32_117 = arith.constant 0 : i32
    %303 = arith.cmpi ne, %302, %c0_i32_117 : i32
    scf.if %303 {
      %304 = vector.extract_strided_slice %299 {offsets = [0, 0], sizes = [1, 32], strides = [1, 1]} : vector<16x32xf32> to vector<1x32xf32>
      %305 = vector.extract_strided_slice %299 {offsets = [8, 0], sizes = [1, 32], strides = [1, 1]} : vector<16x32xf32> to vector<1x32xf32>
      %306 = tpu.concatenate %304, %305 in 0 : vector<1x32xf32>, vector<1x32xf32> -> vector<2x32xf32>
      %c0_118 = arith.constant 0 : index
      %c0_119 = arith.constant 0 : index
      %307 = vector.load %arg20[%c0_118, %c0_119] : memref<1x32xf32, #tpu.memory_space<vmem>>, vector<1x32xf32>
      %c0_120 = arith.constant 0 : index
      %c0_121 = arith.constant 0 : index
      %308 = vector.load %arg21[%c0_120, %c0_121] : memref<1x32xf32, #tpu.memory_space<vmem>>, vector<1x32xf32>
      %cst_122 = arith.constant dense<0.000000e+00> : vector<2xf32>
      %309 = vector.multi_reduction <add>, %306, %cst_122 [1] : vector<2x32xf32> to vector<2xf32>
      %310 = vector.shape_cast %309 : vector<2xf32> to vector<2x1xf32>
      %cst_123 = arith.constant 3.200000e+01 : f32
      %311 = vector.broadcast %cst_123 : f32 to vector<2x1xf32>
      %312 = arith.divf %310, %311 : vector<2x1xf32>
      %313 = vector.broadcast %312 : vector<2x1xf32> to vector<2x32xf32>
      %314 = arith.subf %306, %313 : vector<2x32xf32>
      %315 = arith.mulf %314, %314 : vector<2x32xf32>
      %cst_124 = arith.constant dense<0.000000e+00> : vector<2xf32>
      %316 = vector.multi_reduction <add>, %315, %cst_124 [1] : vector<2x32xf32> to vector<2xf32>
      %317 = vector.shape_cast %316 : vector<2xf32> to vector<2x1xf32>
      %cst_125 = arith.constant 3.200000e+01 : f32
      %318 = vector.broadcast %cst_125 : f32 to vector<2x1xf32>
      %319 = arith.divf %317, %318 : vector<2x1xf32>
      %320 = vector.broadcast %312 : vector<2x1xf32> to vector<2x32xf32>
      %321 = arith.subf %306, %320 : vector<2x32xf32>
      %cst_126 = arith.constant 9.99999974E-6 : f32
      %322 = vector.broadcast %cst_126 : f32 to vector<2x1xf32>
      %323 = arith.addf %319, %322 : vector<2x1xf32>
      %324 = math.rsqrt %323 : vector<2x1xf32>
      %325 = vector.broadcast %324 : vector<2x1xf32> to vector<2x32xf32>
      %326 = arith.mulf %321, %325 : vector<2x32xf32>
      %327 = vector.broadcast %307 : vector<1x32xf32> to vector<2x32xf32>
      %328 = arith.mulf %326, %327 : vector<2x32xf32>
      %329 = vector.broadcast %308 : vector<1x32xf32> to vector<2x32xf32>
      %330 = arith.addf %328, %329 : vector<2x32xf32>
      %c0_127 = arith.constant 0 : index
      %c0_128 = arith.constant 0 : index
      %331 = vector.load %arg22[%c0_127, %c0_128] : memref<32x128xbf16, #tpu.memory_space<vmem>>, vector<32x128xbf16>
      %332 = arith.truncf %330 : vector<2x32xf32> to vector<2x32xbf16>
      %cst_129 = arith.constant dense<0.000000e+00> : vector<2x128xf32>
      %333 = tpu.matmul %332, %331, %cst_129 {dimension_numbers = #tpu.dot_dimension_numbers<[1], [0], [0], [1], [0, 0, 1, 1], [], []>} : vector<2x32xbf16>, vector<32x128xbf16>, vector<2x128xf32> -> vector<2x128xf32>
      %c0_130 = arith.constant 0 : index
      %c0_131 = arith.constant 0 : index
      %334 = vector.load %arg23[%c0_130, %c0_131] : memref<2x128xf32, #tpu.memory_space<vmem>>, vector<2x128xf32>
      tpu.vector_store %arg23[%c0_130, %c0_131], %333 {strides = array<i32>} : memref<2x128xf32, #tpu.memory_space<vmem>>, vector<2x128xf32>,
    } else {
    }
    return
  }
  func.func @transform_0(%arg0: i32, %arg1: i32) -> (i32, i32) {
    %c0_i32 = arith.constant 0 : i32
    %c0_i32_0 = arith.constant 0 : i32
    return %arg0, %c0_i32 : i32, i32
  }
  func.func @transform_1(%arg0: i32, %arg1: i32) -> (i32, i32) {
    %c0_i32 = arith.constant 0 : i32
    %c0_i32_0 = arith.constant 0 : i32
    %c0_i32_1 = arith.constant 0 : i32
    return %c0_i32, %c0_i32_0 : i32, i32
  }
  func.func @transform_2(%arg0: i32, %arg1: i32) -> (i32, i32) {
    %c0_i32 = arith.constant 0 : i32
    %c0_i32_0 = arith.constant 0 : i32
    %c0_i32_1 = arith.constant 0 : i32
    return %c0_i32, %c0_i32_0 : i32, i32
  }
  func.func @transform_3(%arg0: i32, %arg1: i32) -> (i32, i32) {
    %c0_i32 = arith.constant 0 : i32
    %c0_i32_0 = arith.constant 0 : i32
    %c0_i32_1 = arith.constant 0 : i32
    return %c0_i32, %c0_i32_0 : i32, i32
  }
  func.func @transform_4(%arg0: i32, %arg1: i32) -> (i32, i32) {
    %c0_i32 = arith.constant 0 : i32
    %c0_i32_0 = arith.constant 0 : i32
    %c0_i32_1 = arith.constant 0 : i32
    return %c0_i32, %c0_i32_0 : i32, i32
  }
  func.func @transform_5(%arg0: i32, %arg1: i32) -> (i32, i32) {
    %c0_i32 = arith.constant 0 : i32
    %c0_i32_0 = arith.constant 0 : i32
    %c0_i32_1 = arith.constant 0 : i32
    return %c0_i32, %c0_i32_0 : i32, i32
  }
  func.func @transform_6(%arg0: i32, %arg1: i32) -> (i32, i32, i32) {
    %c0_i32 = arith.constant 0 : i32
    %c0_i32_0 = arith.constant 0 : i32
    %c0_i32_1 = arith.constant 0 : i32
    return %arg1, %c0_i32, %c0_i32_0 : i32, i32, i32
  }
  func.func @transform_7(%arg0: i32, %arg1: i32) -> (i32, i32, i32) {
    %c0_i32 = arith.constant 0 : i32
    %c0_i32_0 = arith.constant 0 : i32
    %c0_i32_1 = arith.constant 0 : i32
    return %arg1, %c0_i32, %c0_i32_0 : i32, i32, i32
  }
  func.func @transform_8(%arg0: i32, %arg1: i32) -> (i32, i32, i32) {
    %c0_i32 = arith.constant 0 : i32
    %c0_i32_0 = arith.constant 0 : i32
    %c0_i32_1 = arith.constant 0 : i32
    return %arg1, %c0_i32, %c0_i32_0 : i32, i32, i32
  }
  func.func @transform_9(%arg0: i32, %arg1: i32) -> (i32, i32, i32) {
    %c0_i32 = arith.constant 0 : i32
    %c0_i32_0 = arith.constant 0 : i32
    %c0_i32_1 = arith.constant 0 : i32
    return %arg1, %c0_i32, %c0_i32_0 : i32, i32, i32
  }
  func.func @transform_10(%arg0: i32, %arg1: i32) -> (i32, i32, i32) {
    %c0_i32 = arith.constant 0 : i32
    %c0_i32_0 = arith.constant 0 : i32
    %c0_i32_1 = arith.constant 0 : i32
    return %arg1, %c0_i32, %c0_i32_0 : i32, i32, i32
  }
  func.func @transform_11(%arg0: i32, %arg1: i32) -> (i32, i32, i32) {
    %c0_i32 = arith.constant 0 : i32
    %c0_i32_0 = arith.constant 0 : i32
    %c0_i32_1 = arith.constant 0 : i32
    return %arg1, %c0_i32, %c0_i32_0 : i32, i32, i32
  }
  func.func @transform_12(%arg0: i32, %arg1: i32) -> (i32, i32, i32) {
    %c0_i32 = arith.constant 0 : i32
    %c0_i32_0 = arith.constant 0 : i32
    %c0_i32_1 = arith.constant 0 : i32
    return %arg1, %c0_i32, %c0_i32_0 : i32, i32, i32
  }
  func.func @transform_13(%arg0: i32, %arg1: i32) -> (i32, i32, i32) {
    %c0_i32 = arith.constant 0 : i32
    %c0_i32_0 = arith.constant 0 : i32
    %c0_i32_1 = arith.constant 0 : i32
    return %arg1, %c0_i32, %c0_i32_0 : i32, i32, i32
  }
  func.func @transform_14(%arg0: i32, %arg1: i32) -> (i32, i32, i32) {
    %c0_i32 = arith.constant 0 : i32
    %c0_i32_0 = arith.constant 0 : i32
    %c0_i32_1 = arith.constant 0 : i32
    return %arg1, %c0_i32, %c0_i32_0 : i32, i32, i32
  }
  func.func @transform_15(%arg0: i32, %arg1: i32) -> (i32, i32, i32) {
    %c0_i32 = arith.constant 0 : i32
    %c0_i32_0 = arith.constant 0 : i32
    %c0_i32_1 = arith.constant 0 : i32
    return %arg1, %c0_i32, %c0_i32_0 : i32, i32, i32
  }
  func.func @transform_16(%arg0: i32, %arg1: i32) -> (i32, i32, i32) {
    %c0_i32 = arith.constant 0 : i32
    %c0_i32_0 = arith.constant 0 : i32
    %c0_i32_1 = arith.constant 0 : i32
    return %arg1, %c0_i32, %c0_i32_0 : i32, i32, i32
  }
  func.func @transform_17(%arg0: i32, %arg1: i32) -> (i32, i32, i32) {
    %c0_i32 = arith.constant 0 : i32
    %c0_i32_0 = arith.constant 0 : i32
    %c0_i32_1 = arith.constant 0 : i32
    return %arg1, %c0_i32, %c0_i32_0 : i32, i32, i32
  }
  func.func @transform_18(%arg0: i32, %arg1: i32) -> (i32, i32) {
    %c0_i32 = arith.constant 0 : i32
    %c0_i32_0 = arith.constant 0 : i32
    %c0_i32_1 = arith.constant 0 : i32
    return %c0_i32, %c0_i32_0 : i32, i32
  }
  func.func @transform_19(%arg0: i32, %arg1: i32) -> (i32, i32) {
    %c0_i32 = arith.constant 0 : i32
    %c0_i32_0 = arith.constant 0 : i32
    %c0_i32_1 = arith.constant 0 : i32
    return %c0_i32, %c0_i32_0 : i32, i32
  }
  func.func @transform_20(%arg0: i32, %arg1: i32) -> (i32, i32) {
    %c0_i32 = arith.constant 0 : i32
    %c0_i32_0 = arith.constant 0 : i32
    %c0_i32_1 = arith.constant 0 : i32
    return %c0_i32, %c0_i32_0 : i32, i32
  }
  func.func @transform_21(%arg0: i32, %arg1: i32) -> (i32, i32) {
    %c0_i32 = arith.constant 0 : i32
    %c0_i32_0 = arith.constant 0 : i32
    return %arg0, %c0_i32 : i32, i32
  }
}

</mosaic_0001>

<llo_original>
// kernel: vit_encoder_forward.1
$region0: #{vit_encoder_forward.1}
  #allocation0 [shape = 'u32[]', space=smem, size = 0x4, offset = 0x4, fixed_abs, tag = 'smem constant byte address 0x4 - core index']
  #allocation1 [shape = 'u32[72,128]{1,0:T(1,128)}', space=vmem, size = 0x9000, scoped, tag = 'internal scratch']
  #allocation2 [shape = 'f32[16,32]{1,0:T(8,128)}', space=vmem, size = 0x2000, scoped, tag = 'scratch operand']
  %s0 = inlined_call_operand.vmem [shape: f32[8,192], index: 0, kind: input, shape index: {}]
  %s1 = inlined_call_operand.vmem [shape: bf16[192,32], index: 1, kind: input, shape index: {}]
  %s2 = inlined_call_operand.vmem [shape: f32[1,32], index: 2, kind: input, shape index: {}]
  %s3 = inlined_call_operand.vmem [shape: f32[8,32], index: 3, kind: input, shape index: {}]
  %s4 = inlined_call_operand.vmem [shape: f32[1,32], index: 4, kind: input, shape index: {}]
  %s5 = inlined_call_operand.vmem [shape: f32[1,32], index: 5, kind: input, shape index: {}]
  %s6 = inlined_call_operand.vmem [shape: f32[2,1,32], index: 6, kind: input, shape index: {}]
  %s7 = inlined_call_operand.vmem [shape: f32[2,1,32], index: 7, kind: input, shape index: {}]
  %s8 = inlined_call_operand.vmem [shape: bf16[2,32,96], index: 8, kind: input, shape index: {}]
  %s9 = inlined_call_operand.vmem [shape: f32[2,1,96], index: 9, kind: input, shape index: {}]
  %s10 = inlined_call_operand.vmem [shape: bf16[2,32,32], index: 10, kind: input, shape index: {}]
  %s11 = inlined_call_operand.vmem [shape: f32[2,1,32], index: 11, kind: input, shape index: {}]
  %s12 = inlined_call_operand.vmem [shape: f32[2,1,32], index: 12, kind: input, shape index: {}]
  %s13 = inlined_call_operand.vmem [shape: f32[2,1,32], index: 13, kind: input, shape index: {}]
  %s14 = inlined_call_operand.vmem [shape: bf16[2,32,128], index: 14, kind: input, shape index: {}]
  %s15 = inlined_call_operand.vmem [shape: f32[2,1,128], index: 15, kind: input, shape index: {}]
  %s16 = inlined_call_operand.vmem [shape: bf16[2,128,32], index: 16, kind: input, shape index: {}]
  %s17 = inlined_call_operand.vmem [shape: f32[2,1,32], index: 17, kind: input, shape index: {}]
  %s18 = inlined_call_operand.vmem [shape: f32[1,32], index: 18, kind: input, shape index: {}]
  %s19 = inlined_call_operand.vmem [shape: f32[1,32], index: 19, kind: input, shape index: {}]
  %s20 = inlined_call_operand.vmem [shape: bf16[32,128], index: 20, kind: input, shape index: {}]
  %s21 = inlined_call_operand.hbm [shape: f32[2,128], index: 21, kind: output, shape index: {}]
  %s22 = sld [smem:[#allocation0]]
  $region125: #{vit_encoder_forward.1} parent=0
    _
  %s24 = ssub.s32 1, %s22
  %s25 = scalar_select 0, %s24, %s22
  $region1: #{vit_encoder_forward.1} parent=0
    #allocation3 [shape = 'u8[1024]{0}', space=vmem, size = 0x400, scoped, tag = 'output window, operand 0, single buffered']
    #allocation4 [shape = 's32[2]{0}', space=sflag, size = 0x8, scoped, tag = 'scoped memory for vit_encoder_forward.1']
    %26 = vsyncpa [#allocation4], 0
    loop: start=0, step=1, limit=4
    $region2: #{vit_encoder_forward.1} parent=1 // loop_pre_header
      _
    $region3: #{vit_encoder_forward.1} parent=1 // loop_header
      %s28 = sphi 0, %s32
      %p29 = scmp.ge.s32.totalorder %s28, 4
      %s35 = sphi 0, %s47
      %s36 = sphi 0, %s43
      %s37 = sphi 0, %s35
      %s38 = sphi 0, %s36
      %s39 = sphi 0, %s37
      %s40 = sphi 0, %s38
      %s50 = sphi 0, %s52
      %s53 = sphi 0, %s50
      %s54 = sphi 0, %s53
      %s70 = sphi 0, %s54
      %s74 = sphi 0, %s74
      %s76 = sphi 0, %s74
      %s77 = sphi 0, %s76
      %s91 = sphi 0, %s77
      %s95 = sphi 0, %s95
      %s97 = sphi 0, %s95
      %s98 = sphi 0, %s97
      %s112 = sphi 0, %s98
      %s116 = sphi 0, %s116
      %s118 = sphi 0, %s116
      %s119 = sphi 0, %s118
      %s133 = sphi 0, %s119
      %s137 = sphi 0, %s137
      %s139 = sphi 0, %s137
      %s140 = sphi 0, %s139
      %s154 = sphi 0, %s140
      %s158 = sphi 0, %s158
      %s160 = sphi 0, %s158
      %s161 = sphi 0, %s160
      %s175 = sphi 0, %s161
      %s181 = sphi 0, %s183
      %s184 = sphi 0, %s181
      %s185 = sphi 0, %s184
      %s201 = sphi 0, %s185
      %s207 = sphi 0, %s209
      %s210 = sphi 0, %s207
      %s211 = sphi 0, %s210
      %s227 = sphi 0, %s211
      %s233 = sphi 0, %s235
      %s236 = sphi 0, %s233
      %s237 = sphi 0, %s236
      %s253 = sphi 0, %s237
      %s259 = sphi 0, %s261
      %s262 = sphi 0, %s259
      %s263 = sphi 0, %s262
      %s279 = sphi 0, %s263
      %s285 = sphi 0, %s287
      %s288 = sphi 0, %s285
      %s289 = sphi 0, %s288
      %s305 = sphi 0, %s289
      %s311 = sphi 0, %s313
      %s314 = sphi 0, %s311
      %s315 = sphi 0, %s314
      %s331 = sphi 0, %s315
      %s337 = sphi 0, %s339
      %s340 = sphi 0, %s337
      %s341 = sphi 0, %s340
      %s357 = sphi 0, %s341
      %s363 = sphi 0, %s365
      %s366 = sphi 0, %s363
      %s367 = sphi 0, %s366
      %s383 = sphi 0, %s367
      %s389 = sphi 0, %s391
      %s392 = sphi 0, %s389
      %s393 = sphi 0, %s392
      %s409 = sphi 0, %s393
      %s415 = sphi 0, %s417
      %s418 = sphi 0, %s415
      %s419 = sphi 0, %s418
      %s435 = sphi 0, %s419
      %s441 = sphi 0, %s443
      %s444 = sphi 0, %s441
      %s445 = sphi 0, %s444
      %s461 = sphi 0, %s445
      %s467 = sphi 0, %s469
      %s470 = sphi 0, %s467
      %s471 = sphi 0, %s470
      %s487 = sphi 0, %s471
      %s491 = sphi 0, %s491
      %s493 = sphi 0, %s491
      %s494 = sphi 0, %s493
      %s508 = sphi 0, %s494
      %s512 = sphi 0, %s512
      %s514 = sphi 0, %s512
      %s515 = sphi 0, %s514
      %s529 = sphi 0, %s515
      %s533 = sphi 0, %s533
      %s535 = sphi 0, %s533
      %s536 = sphi 0, %s535
      %s550 = sphi 0, %s536
      %s556 = sphi 0, %s558
      %s559 = sphi 0, %s556
      %s560 = sphi 0, %s559
      %s576 = sphi 0, %s560
    $region4: #{vit_encoder_forward.1} parent=1 // loop_header_branch
      %31 = sbr.rel (%p29) target = $region8
    $region5: #{vit_encoder_forward.1} parent=1 // loop_body
      %s33 = ssub.s32 %s28, 1
      %s34 = ssub.s32 %s28, 2
      %s41 = sadd.s32 1, %s36
      %p42 = scmp.ge.s32.totalorder %s41, 2
      %s43 = scalar_select %p42, 0, %s41
      %s44 = sadd.s32 1, %s35
      %s45 = scalar_select %p42, %s44, %s35
      %p46 = scmp.ge.s32.totalorder %s45, 1
      %s47 = scalar_select %p46, 0, %s45
      %s48 = ssub.s32 %s35, %s47
      %p49 = scmp.eq.s32.totalorder %s48, 0
      %s51 = sadd.s32 %s50, 1
      %s52 = scalar_select %p49, %s50, %s51
      %p55 = pneg %p49
      %p56 = scmp.eq.s32.totalorder %s28, 1
      %p57 = por %p55, %p56
      %p58 = scmp.ne.s32.totalorder %s50, %s53
      %p59 = scmp.eq.s32.totalorder %s28, 0
      %p60 = por %p58, %p59
      %p61 = scmp.ne.s32.totalorder %s50, %s53
      %p62 = scmp.eq.s32.totalorder %s33, 1
      %p63 = por %p61, %p62
      %p64 = scmp.ne.s32.totalorder %s53, %s54
      %p65 = scmp.eq.s32.totalorder %s33, 0
      %p66 = por %p64, %p65
      %p67 = scmp.ne.s32.totalorder %s53, %s54
      %p68 = scmp.eq.s32.totalorder %s34, 1
      %p69 = por %p67, %p68
      %p71 = scmp.ne.s32.totalorder %s54, %s70
      %p72 = scmp.eq.s32.totalorder %s34, 0
      %p73 = por %p71, %p72
      %s75 = sadd.s32 %s74, 1
      %p78 = scmp.eq.s32.totalorder %s28, 1
      %p79 = scmp.ne.s32.totalorder %s74, %s76
      %p80 = scmp.eq.s32.totalorder %s28, 0
      %p81 = por %p79, %p80
      %p82 = scmp.ne.s32.totalorder %s74, %s76
      %p83 = scmp.eq.s32.totalorder %s33, 1
      %p84 = por %p82, %p83
      %p85 = scmp.ne.s32.totalorder %s76, %s77
      %p86 = scmp.eq.s32.totalorder %s33, 0
      %p87 = por %p85, %p86
      %p88 = scmp.ne.s32.totalorder %s76, %s77
      %p89 = scmp.eq.s32.totalorder %s34, 1
      %p90 = por %p88, %p89
      %p92 = scmp.ne.s32.totalorder %s77, %s91
      %p93 = scmp.eq.s32.totalorder %s34, 0
      %p94 = por %p92, %p93
      %s96 = sadd.s32 %s95, 1
      %p99 = scmp.eq.s32.totalorder %s28, 1
      %p100 = scmp.ne.s32.totalorder %s95, %s97
      %p101 = scmp.eq.s32.totalorder %s28, 0
      %p102 = por %p100, %p101
      %p103 = scmp.ne.s32.totalorder %s95, %s97
      %p104 = scmp.eq.s32.totalorder %s33, 1
      %p105 = por %p103, %p104
      %p106 = scmp.ne.s32.totalorder %s97, %s98
      %p107 = scmp.eq.s32.totalorder %s33, 0
      %p108 = por %p106, %p107
      %p109 = scmp.ne.s32.totalorder %s97, %s98
      %p110 = scmp.eq.s32.totalorder %s34, 1
      %p111 = por %p109, %p110
      %p113 = scmp.ne.s32.totalorder %s98, %s112
      %p114 = scmp.eq.s32.totalorder %s34, 0
      %p115 = por %p113, %p114
      %s117 = sadd.s32 %s116, 1
      %p120 = scmp.eq.s32.totalorder %s28, 1
      %p121 = scmp.ne.s32.totalorder %s116, %s118
      %p122 = scmp.eq.s32.totalorder %s28, 0
      %p123 = por %p121, %p122
      %p124 = scmp.ne.s32.totalorder %s116, %s118
      %p125 = scmp.eq.s32.totalorder %s33, 1
      %p126 = por %p124, %p125
      %p127 = scmp.ne.s32.totalorder %s118, %s119
      %p128 = scmp.eq.s32.totalorder %s33, 0
      %p129 = por %p127, %p128
      %p130 = scmp.ne.s32.totalorder %s118, %s119
      %p131 = scmp.eq.s32.totalorder %s34, 1
      %p132 = por %p130, %p131
      %p134 = scmp.ne.s32.totalorder %s119, %s133
      %p135 = scmp.eq.s32.totalorder %s34, 0
      %p136 = por %p134, %p135
      %s138 = sadd.s32 %s137, 1
      %p141 = scmp.eq.s32.totalorder %s28, 1
      %p142 = scmp.ne.s32.totalorder %s137, %s139
      %p143 = scmp.eq.s32.totalorder %s28, 0
      %p144 = por %p142, %p143
      %p145 = scmp.ne.s32.totalorder %s137, %s139
      %p146 = scmp.eq.s32.totalorder %s33, 1
      %p147 = por %p145, %p146
      %p148 = scmp.ne.s32.totalorder %s139, %s140
      %p149 = scmp.eq.s32.totalorder %s33, 0
      %p150 = por %p148, %p149
      %p151 = scmp.ne.s32.totalorder %s139, %s140
      %p152 = scmp.eq.s32.totalorder %s34, 1
      %p153 = por %p151, %p152
      %p155 = scmp.ne.s32.totalorder %s140, %s154
      %p156 = scmp.eq.s32.totalorder %s34, 0
      %p157 = por %p155, %p156
      %s159 = sadd.s32 %s158, 1
      %p162 = scmp.eq.s32.totalorder %s28, 1
      %p163 = scmp.ne.s32.totalorder %s158, %s160
      %p164 = scmp.eq.s32.totalorder %s28, 0
      %p165 = por %p163, %p164
      %p166 = scmp.ne.s32.totalorder %s158, %s160
      %p167 = scmp.eq.s32.totalorder %s33, 1
      %p168 = por %p166, %p167
      %p169 = scmp.ne.s32.totalorder %s160, %s161
      %p170 = scmp.eq.s32.totalorder %s33, 0
      %p171 = por %p169, %p170
      %p172 = scmp.ne.s32.totalorder %s160, %s161
      %p173 = scmp.eq.s32.totalorder %s34, 1
      %p174 = por %p172, %p173
      %p176 = scmp.ne.s32.totalorder %s161, %s175
      %p177 = scmp.eq.s32.totalorder %s34, 0
      %p178 = por %p176, %p177
      %s179 = ssub.s32 %s36, %s43
      %p180 = scmp.eq.s32.totalorder %s179, 0
      %s182 = sadd.s32 %s181, 1
      %s183 = scalar_select %p180, %s181, %s182
      %p186 = pneg %p180
      %p187 = scmp.eq.s32.totalorder %s28, 1
      %p188 = por %p186, %p187
      %p189 = scmp.ne.s32.totalorder %s181, %s184
      %p190 = scmp.eq.s32.totalorder %s28, 0
      %p191 = por %p189, %p190
      %p192 = scmp.ne.s32.totalorder %s181, %s184
      %p193 = scmp.eq.s32.totalorder %s33, 1
      %p194 = por %p192, %p193
      %p195 = scmp.ne.s32.totalorder %s184, %s185
      %p196 = scmp.eq.s32.totalorder %s33, 0
      %p197 = por %p195, %p196
      %p198 = scmp.ne.s32.totalorder %s184, %s185
      %p199 = scmp.eq.s32.totalorder %s34, 1
      %p200 = por %p198, %p199
      %p202 = scmp.ne.s32.totalorder %s185, %s201
      %p203 = scmp.eq.s32.totalorder %s34, 0
      %p204 = por %p202, %p203
      %s205 = ssub.s32 %s36, %s43
      %p206 = scmp.eq.s32.totalorder %s205, 0
      %s208 = sadd.s32 %s207, 1
      %s209 = scalar_select %p206, %s207, %s208
      %p212 = pneg %p206
      %p213 = scmp.eq.s32.totalorder %s28, 1
      %p214 = por %p212, %p213
      %p215 = scmp.ne.s32.totalorder %s207, %s210
      %p216 = scmp.eq.s32.totalorder %s28, 0
      %p217 = por %p215, %p216
      %p218 = scmp.ne.s32.totalorder %s207, %s210
      %p219 = scmp.eq.s32.totalorder %s33, 1
      %p220 = por %p218, %p219
      %p221 = scmp.ne.s32.totalorder %s210, %s211
      %p222 = scmp.eq.s32.totalorder %s33, 0
      %p223 = por %p221, %p222
      %p224 = scmp.ne.s32.totalorder %s210, %s211
      %p225 = scmp.eq.s32.totalorder %s34, 1
      %p226 = por %p224, %p225
      %p228 = scmp.ne.s32.totalorder %s211, %s227
      %p229 = scmp.eq.s32.totalorder %s34, 0
      %p230 = por %p228, %p229
      %s231 = ssub.s32 %s36, %s43
      %p232 = scmp.eq.s32.totalorder %s231, 0
      %s234 = sadd.s32 %s233, 1
      %s235 = scalar_select %p232, %s233, %s234
      %p238 = pneg %p232
      %p239 = scmp.eq.s32.totalorder %s28, 1
      %p240 = por %p238, %p239
      %p241 = scmp.ne.s32.totalorder %s233, %s236
      %p242 = scmp.eq.s32.totalorder %s28, 0
      %p243 = por %p241, %p242
      %p244 = scmp.ne.s32.totalorder %s233, %s236
      %p245 = scmp.eq.s32.totalorder %s33, 1
      %p246 = por %p244, %p245
      %p247 = scmp.ne.s32.totalorder %s236, %s237
      %p248 = scmp.eq.s32.totalorder %s33, 0
      %p249 = por %p247, %p248
      %p250 = scmp.ne.s32.totalorder %s236, %s237
      %p251 = scmp.eq.s32.totalorder %s34, 1
      %p252 = por %p250, %p251
      %p254 = scmp.ne.s32.totalorder %s237, %s253
      %p255 = scmp.eq.s32.totalorder %s34, 0
      %p256 = por %p254, %p255
      %s257 = ssub.s32 %s36, %s43
      %p258 = scmp.eq.s32.totalorder %s257, 0
      %s260 = sadd.s32 %s259, 1
      %s261 = scalar_select %p258, %s259, %s260
      %p264 = pneg %p258
      %p265 = scmp.eq.s32.totalorder %s28, 1
      %p266 = por %p264, %p265
      %p267 = scmp.ne.s32.totalorder %s259, %s262
      %p268 = scmp.eq.s32.totalorder %s28, 0
      %p269 = por %p267, %p268
      %p270 = scmp.ne.s32.totalorder %s259, %s262
      %p271 = scmp.eq.s32.totalorder %s33, 1
      %p272 = por %p270, %p271
      %p273 = scmp.ne.s32.totalorder %s262, %s263
      %p274 = scmp.eq.s32.totalorder %s33, 0
      %p275 = por %p273, %p274
      %p276 = scmp.ne.s32.totalorder %s262, %s263
      %p277 = scmp.eq.s32.totalorder %s34, 1
      %p278 = por %p276, %p277
      %p280 = scmp.ne.s32.totalorder %s263, %s279
      %p281 = scmp.eq.s32.totalorder %s34, 0
      %p282 = por %p280, %p281
      %s283 = ssub.s32 %s36, %s43
      %p284 = scmp.eq.s32.totalorder %s283, 0
      %s286 = sadd.s32 %s285, 1
      %s287 = scalar_select %p284, %s285, %s286
      %p290 = pneg %p284
      %p291 = scmp.eq.s32.totalorder %s28, 1
      %p292 = por %p290, %p291
      %p293 = scmp.ne.s32.totalorder %s285, %s288
      %p294 = scmp.eq.s32.totalorder %s28, 0
      %p295 = por %p293, %p294
      %p296 = scmp.ne.s32.totalorder %s285, %s288
      %p297 = scmp.eq.s32.totalorder %s33, 1
      %p298 = por %p296, %p297
      %p299 = scmp.ne.s32.totalorder %s288, %s289
      %p300 = scmp.eq.s32.totalorder %s33, 0
      %p301 = por %p299, %p300
      %p302 = scmp.ne.s32.totalorder %s288, %s289
      %p303 = scmp.eq.s32.totalorder %s34, 1
      %p304 = por %p302, %p303
      %p306 = scmp.ne.s32.totalorder %s289, %s305
      %p307 = scmp.eq.s32.totalorder %s34, 0
      %p308 = por %p306, %p307
      %s309 = ssub.s32 %s36, %s43
      %p310 = scmp.eq.s32.totalorder %s309, 0
      %s312 = sadd.s32 %s311, 1
      %s313 = scalar_select %p310, %s311, %s312
      %p316 = pneg %p310
      %p317 = scmp.eq.s32.totalorder %s28, 1
      %p318 = por %p316, %p317
      %p319 = scmp.ne.s32.totalorder %s311, %s314
      %p320 = scmp.eq.s32.totalorder %s28, 0
      %p321 = por %p319, %p320
      %p322 = scmp.ne.s32.totalorder %s311, %s314
      %p323 = scmp.eq.s32.totalorder %s33, 1
      %p324 = por %p322, %p323
      %p325 = scmp.ne.s32.totalorder %s314, %s315
      %p326 = scmp.eq.s32.totalorder %s33, 0
      %p327 = por %p325, %p326
      %p328 = scmp.ne.s32.totalorder %s314, %s315
      %p329 = scmp.eq.s32.totalorder %s34, 1
      %p330 = por %p328, %p329
      %p332 = scmp.ne.s32.totalorder %s315, %s331
      %p333 = scmp.eq.s32.totalorder %s34, 0
      %p334 = por %p332, %p333
      %s335 = ssub.s32 %s36, %s43
      %p336 = scmp.eq.s32.totalorder %s335, 0
      %s338 = sadd.s32 %s337, 1
      %s339 = scalar_select %p336, %s337, %s338
      %p342 = pneg %p336
      %p343 = scmp.eq.s32.totalorder %s28, 1
      %p344 = por %p342, %p343
      %p345 = scmp.ne.s32.totalorder %s337, %s340
      %p346 = scmp.eq.s32.totalorder %s28, 0
      %p347 = por %p345, %p346
      %p348 = scmp.ne.s32.totalorder %s337, %s340
      %p349 = scmp.eq.s32.totalorder %s33, 1
      %p350 = por %p348, %p349
      %p351 = scmp.ne.s32.totalorder %s340, %s341
      %p352 = scmp.eq.s32.totalorder %s33, 0
      %p353 = por %p351, %p352
      %p354 = scmp.ne.s32.totalorder %s340, %s341
      %p355 = scmp.eq.s32.totalorder %s34, 1
      %p356 = por %p354, %p355
      %p358 = scmp.ne.s32.totalorder %s341, %s357
      %p359 = scmp.eq.s32.totalorder %s34, 0
      %p360 = por %p358, %p359
      %s361 = ssub.s32 %s36, %s43
      %p362 = scmp.eq.s32.totalorder %s361, 0
      %s364 = sadd.s32 %s363, 1
      %s365 = scalar_select %p362, %s363, %s364
      %p368 = pneg %p362
      %p369 = scmp.eq.s32.totalorder %s28, 1
      %p370 = por %p368, %p369
      %p371 = scmp.ne.s32.totalorder %s363, %s366
      %p372 = scmp.eq.s32.totalorder %s28, 0
      %p373 = por %p371, %p372
      %p374 = scmp.ne.s32.totalorder %s363, %s366
      %p375 = scmp.eq.s32.totalorder %s33, 1
      %p376 = por %p374, %p375
      %p377 = scmp.ne.s32.totalorder %s366, %s367
      %p378 = scmp.eq.s32.totalorder %s33, 0
      %p379 = por %p377, %p378
      %p380 = scmp.ne.s32.totalorder %s366, %s367
      %p381 = scmp.eq.s32.totalorder %s34, 1
      %p382 = por %p380, %p381
      %p384 = scmp.ne.s32.totalorder %s367, %s383
      %p385 = scmp.eq.s32.totalorder %s34, 0
      %p386 = por %p384, %p385
      %s387 = ssub.s32 %s36, %s43
      %p388 = scmp.eq.s32.totalorder %s387, 0
      %s390 = sadd.s32 %s389, 1
      %s391 = scalar_select %p388, %s389, %s390
      %p394 = pneg %p388
      %p395 = scmp.eq.s32.totalorder %s28, 1
      %p396 = por %p394, %p395
      %p397 = scmp.ne.s32.totalorder %s389, %s392
      %p398 = scmp.eq.s32.totalorder %s28, 0
      %p399 = por %p397, %p398
      %p400 = scmp.ne.s32.totalorder %s389, %s392
      %p401 = scmp.eq.s32.totalorder %s33, 1
      %p402 = por %p400, %p401
      %p403 = scmp.ne.s32.totalorder %s392, %s393
      %p404 = scmp.eq.s32.totalorder %s33, 0
      %p405 = por %p403, %p404
      %p406 = scmp.ne.s32.totalorder %s392, %s393
      %p407 = scmp.eq.s32.totalorder %s34, 1
      %p408 = por %p406, %p407
      %p410 = scmp.ne.s32.totalorder %s393, %s409
      %p411 = scmp.eq.s32.totalorder %s34, 0
      %p412 = por %p410, %p411
      %s413 = ssub.s32 %s36, %s43
      %p414 = scmp.eq.s32.totalorder %s413, 0
      %s416 = sadd.s32 %s415, 1
      %s417 = scalar_select %p414, %s415, %s416
      %p420 = pneg %p414
      %p421 = scmp.eq.s32.totalorder %s28, 1
      %p422 = por %p420, %p421
      %p423 = scmp.ne.s32.totalorder %s415, %s418
      %p424 = scmp.eq.s32.totalorder %s28, 0
      %p425 = por %p423, %p424
      %p426 = scmp.ne.s32.totalorder %s415, %s418
      %p427 = scmp.eq.s32.totalorder %s33, 1
      %p428 = por %p426, %p427
      %p429 = scmp.ne.s32.totalorder %s418, %s419
      %p430 = scmp.eq.s32.totalorder %s33, 0
      %p431 = por %p429, %p430
      %p432 = scmp.ne.s32.totalorder %s418, %s419
      %p433 = scmp.eq.s32.totalorder %s34, 1
      %p434 = por %p432, %p433
      %p436 = scmp.ne.s32.totalorder %s419, %s435
      %p437 = scmp.eq.s32.totalorder %s34, 0
      %p438 = por %p436, %p437
      %s439 = ssub.s32 %s36, %s43
      %p440 = scmp.eq.s32.totalorder %s439, 0
      %s442 = sadd.s32 %s441, 1
      %s443 = scalar_select %p440, %s441, %s442
      %p446 = pneg %p440
      %p447 = scmp.eq.s32.totalorder %s28, 1
      %p448 = por %p446, %p447
      %p449 = scmp.ne.s32.totalorder %s441, %s444
      %p450 = scmp.eq.s32.totalorder %s28, 0
      %p451 = por %p449, %p450
      %p452 = scmp.ne.s32.totalorder %s441, %s444
      %p453 = scmp.eq.s32.totalorder %s33, 1
      %p454 = por %p452, %p453
      %p455 = scmp.ne.s32.totalorder %s444, %s445
      %p456 = scmp.eq.s32.totalorder %s33, 0
      %p457 = por %p455, %p456
      %p458 = scmp.ne.s32.totalorder %s444, %s445
      %p459 = scmp.eq.s32.totalorder %s34, 1
      %p460 = por %p458, %p459
      %p462 = scmp.ne.s32.totalorder %s445, %s461
      %p463 = scmp.eq.s32.totalorder %s34, 0
      %p464 = por %p462, %p463
      %s465 = ssub.s32 %s36, %s43
      %p466 = scmp.eq.s32.totalorder %s465, 0
      %s468 = sadd.s32 %s467, 1
      %s469 = scalar_select %p466, %s467, %s468
      %p472 = pneg %p466
      %p473 = scmp.eq.s32.totalorder %s28, 1
      %p474 = por %p472, %p473
      %p475 = scmp.ne.s32.totalorder %s467, %s470
      %p476 = scmp.eq.s32.totalorder %s28, 0
      %p477 = por %p475, %p476
      %p478 = scmp.ne.s32.totalorder %s467, %s470
      %p479 = scmp.eq.s32.totalorder %s33, 1
      %p480 = por %p478, %p479
      %p481 = scmp.ne.s32.totalorder %s470, %s471
      %p482 = scmp.eq.s32.totalorder %s33, 0
      %p483 = por %p481, %p482
      %p484 = scmp.ne.s32.totalorder %s470, %s471
      %p485 = scmp.eq.s32.totalorder %s34, 1
      %p486 = por %p484, %p485
      %p488 = scmp.ne.s32.totalorder %s471, %s487
      %p489 = scmp.eq.s32.totalorder %s34, 0
      %p490 = por %p488, %p489
      %s492 = sadd.s32 %s491, 1
      %p495 = scmp.eq.s32.totalorder %s28, 1
      %p496 = scmp.ne.s32.totalorder %s491, %s493
      %p497 = scmp.eq.s32.totalorder %s28, 0
      %p498 = por %p496, %p497
      %p499 = scmp.ne.s32.totalorder %s491, %s493
      %p500 = scmp.eq.s32.totalorder %s33, 1
      %p501 = por %p499, %p500
      %p502 = scmp.ne.s32.totalorder %s493, %s494
      %p503 = scmp.eq.s32.totalorder %s33, 0
      %p504 = por %p502, %p503
      %p505 = scmp.ne.s32.totalorder %s493, %s494
      %p506 = scmp.eq.s32.totalorder %s34, 1
      %p507 = por %p505, %p506
      %p509 = scmp.ne.s32.totalorder %s494, %s508
      %p510 = scmp.eq.s32.totalorder %s34, 0
      %p511 = por %p509, %p510
      %s513 = sadd.s32 %s512, 1
      %p516 = scmp.eq.s32.totalorder %s28, 1
      %p517 = scmp.ne.s32.totalorder %s512, %s514
      %p518 = scmp.eq.s32.totalorder %s28, 0
      %p519 = por %p517, %p518
      %p520 = scmp.ne.s32.totalorder %s512, %s514
      %p521 = scmp.eq.s32.totalorder %s33, 1
      %p522 = por %p520, %p521
      %p523 = scmp.ne.s32.totalorder %s514, %s515
      %p524 = scmp.eq.s32.totalorder %s33, 0
      %p525 = por %p523, %p524
      %p526 = scmp.ne.s32.totalorder %s514, %s515
      %p527 = scmp.eq.s32.totalorder %s34, 1
      %p528 = por %p526, %p527
      %p530 = scmp.ne.s32.totalorder %s515, %s529
      %p531 = scmp.eq.s32.totalorder %s34, 0
      %p532 = por %p530, %p531
      %s534 = sadd.s32 %s533, 1
      %p537 = scmp.eq.s32.totalorder %s28, 1
      %p538 = scmp.ne.s32.totalorder %s533, %s535
      %p539 = scmp.eq.s32.totalorder %s28, 0
      %p540 = por %p538, %p539
      %p541 = scmp.ne.s32.totalorder %s533, %s535
      %p542 = scmp.eq.s32.totalorder %s33, 1
      %p543 = por %p541, %p542
      %p544 = scmp.ne.s32.totalorder %s535, %s536
      %p545 = scmp.eq.s32.totalorder %s33, 0
      %p546 = por %p544, %p545
      %p547 = scmp.ne.s32.totalorder %s535, %s536
      %p548 = scmp.eq.s32.totalorder %s34, 1
      %p549 = por %p547, %p548
      %p551 = scmp.ne.s32.totalorder %s536, %s550
      %p552 = scmp.eq.s32.totalorder %s34, 0
      %p553 = por %p551, %p552
      %s554 = ssub.s32 %s35, %s47
      %p555 = scmp.eq.s32.totalorder %s554, 0
      %s557 = sadd.s32 %s556, 1
      %s558 = scalar_select %p555, %s556, %s557
      %p561 = pneg %p555
      %p562 = scmp.eq.s32.totalorder %s28, 1
      %p563 = por %p561, %p562
      %p564 = scmp.ne.s32.totalorder %s556, %s559
      %p565 = scmp.eq.s32.totalorder %s28, 0
      %p566 = por %p564, %p565
      %p567 = scmp.ne.s32.totalorder %s556, %s559
      %p568 = scmp.eq.s32.totalorder %s33, 1
      %p569 = por %p567, %p568
      %p570 = scmp.ne.s32.totalorder %s559, %s560
      %p571 = scmp.eq.s32.totalorder %s33, 0
      %p572 = por %p570, %p571
      %p573 = scmp.ne.s32.totalorder %s559, %s560
      %p574 = scmp.eq.s32.totalorder %s34, 1
      %p575 = por %p573, %p574
      %p577 = scmp.ne.s32.totalorder %s560, %s576
      %p578 = scmp.eq.s32.totalorder %s34, 0
      %p579 = por %p577, %p578
      %p580 = scmp.le.s32.totalorder 1, %s28
      %p581 = scmp.lt.s32.totalorder %s28, 3
      %p582 = pnand %p580, %p581
      %p583 = pneg %p582
      // Predicated region
      $region9: #{vit_encoder_forward.1} parent=5 // pred_check
        _
      $region10: #{vit_encoder_forward.1} parent=5 // pred_check_branch
        %585 = sbr.rel (%p582) target = $region12
      $region11: #{vit_encoder_forward.1} parent=5 // pred_region
        %s586 = ssub.s32 %s28, 1
        // Predicated region
        $region13: #{vit_encoder_forward.1} parent=11 // pred_check
          %p587 = pneg %p66
        $region14: #{vit_encoder_forward.1} parent=11 // pred_check_branch
          %589 = sbr.rel (%p587) target = $region16
        $region15: #{vit_encoder_forward.1} parent=11 // pred_region
          %p590 = scmp.lt.s32.totalorder %s37, 0
          %s591 = scalar_select %p590, %s37, 0
          %s592 = smul.addr %s591, 2
          %s593 = smul.addr %s592, 8
          %s594 = scalar_lea.vmem %s0, %s593
        $region16: #{vit_encoder_forward.1} parent=11 // pred_fallthru
          _
        // Predicated region
        $region17: #{vit_encoder_forward.1} parent=11 // pred_check
          %p595 = pneg %p87
        $region18: #{vit_encoder_forward.1} parent=11 // pred_check_branch
          %597 = sbr.rel (%p595) target = $region20
        $region19: #{vit_encoder_forward.1} parent=11 // pred_region
          _
        $region20: #{vit_encoder_forward.1} parent=11 // pred_fallthru
          _
        // Predicated region
        $region21: #{vit_encoder_forward.1} parent=11 // pred_check
          %p598 = pneg %p108
        $region22: #{vit_encoder_forward.1} parent=11 // pred_check_branch
          %600 = sbr.rel (%p598) target = $region24
        $region23: #{vit_encoder_forward.1} parent=11 // pred_region
          _
        $region24: #{vit_encoder_forward.1} parent=11 // pred_fallthru
          _
        // Predicated region
        $region25: #{vit_encoder_forward.1} parent=11 // pred_check
          %p601 = pneg %p129
        $region26: #{vit_encoder_forward.1} parent=11 // pred_check_branch
          %603 = sbr.rel (%p601) target = $region28
        $region27: #{vit_encoder_forward.1} parent=11 // pred_region
          _
        $region28: #{vit_encoder_forward.1} parent=11 // pred_fallthru
          _
        // Predicated region
        $region29: #{vit_encoder_forward.1} parent=11 // pred_check
          %p604 = pneg %p150
        $region30: #{vit_encoder_forward.1} parent=11 // pred_check_branch
          %606 = sbr.rel (%p604) target = $region32
        $region31: #{vit_encoder_forward.1} parent=11 // pred_region
          _
        $region32: #{vit_encoder_forward.1} parent=11 // pred_fallthru
          _
        // Predicated region
        $region33: #{vit_encoder_forward.1} parent=11 // pred_check
          %p607 = pneg %p171
        $region34: #{vit_encoder_forward.1} parent=11 // pred_check_branch
          %609 = sbr.rel (%p607) target = $region36
        $region35: #{vit_encoder_forward.1} parent=11 // pred_region
          _
        $region36: #{vit_encoder_forward.1} parent=11 // pred_fallthru
          _
        // Predicated region
        $region37: #{vit_encoder_forward.1} parent=11 // pred_check
          %p610 = pneg %p504
        $region38: #{vit_encoder_forward.1} parent=11 // pred_check_branch
          %612 = sbr.rel (%p610) target = $region40
        $region39: #{vit_encoder_forward.1} parent=11 // pred_region
          _
        $region40: #{vit_encoder_forward.1} parent=11 // pred_fallthru
          _
        // Predicated region
        $region41: #{vit_encoder_forward.1} parent=11 // pred_check
          %p613 = pneg %p525
        $region42: #{vit_encoder_forward.1} parent=11 // pred_check_branch
          %615 = sbr.rel (%p613) target = $region44
        $region43: #{vit_encoder_forward.1} parent=11 // pred_region
          _
        $region44: #{vit_encoder_forward.1} parent=11 // pred_fallthru
          _
        // Predicated region
        $region45: #{vit_encoder_forward.1} parent=11 // pred_check
          %p616 = pneg %p546
        $region46: #{vit_encoder_forward.1} parent=11 // pred_check_branch
          %618 = sbr.rel (%p616) target = $region48
        $region47: #{vit_encoder_forward.1} parent=11 // pred_region
          _
        $region48: #{vit_encoder_forward.1} parent=11 // pred_fallthru
          _
      $region12: #{vit_encoder_forward.1} parent=5 // pred_fallthru
        _
      %p619 = scmp.lt.s32.totalorder %s28, 2
      // Predicated region
      $region49: #{vit_encoder_forward.1} parent=5 // pred_check
        %p620 = pneg %p619
      $region50: #{vit_encoder_forward.1} parent=5 // pred_check_branch
        %622 = sbr.rel (%p620) target = $region52
      $region51: #{vit_encoder_forward.1} parent=5 // pred_region
        // Predicated region
        $region53: #{vit_encoder_forward.1} parent=51 // pred_check
          %p623 = pneg %p191
        $region54: #{vit_encoder_forward.1} parent=51 // pred_check_branch
          %625 = sbr.rel (%p623) target = $region56
        $region55: #{vit_encoder_forward.1} parent=51 // pred_region
          %p626 = scmp.lt.s32.totalorder %s36, 1
          %s627 = scalar_select %p626, %s36, 1
          %s628 = scalar_lea.vmem %s6, %s627
        $region56: #{vit_encoder_forward.1} parent=51 // pred_fallthru
          _
        // Predicated region
        $region57: #{vit_encoder_forward.1} parent=51 // pred_check
          %p629 = pneg %p217
        $region58: #{vit_encoder_forward.1} parent=51 // pred_check_branch
          %631 = sbr.rel (%p629) target = $region60
        $region59: #{vit_encoder_forward.1} parent=51 // pred_region
          %p632 = scmp.lt.s32.totalorder %s36, 1
          %s633 = scalar_select %p632, %s36, 1
          %s634 = scalar_lea.vmem %s7, %s633
        $region60: #{vit_encoder_forward.1} parent=51 // pred_fallthru
          _
        // Predicated region
        $region61: #{vit_encoder_forward.1} parent=51 // pred_check
          %p635 = pneg %p243
        $region62: #{vit_encoder_forward.1} parent=51 // pred_check_branch
          %637 = sbr.rel (%p635) target = $region64
        $region63: #{vit_encoder_forward.1} parent=51 // pred_region
          %p638 = scmp.lt.s32.totalorder %s36, 1
          %s639 = scalar_select %p638, %s36, 1
          %s640 = smul.addr %s639, 4
          %s641 = smul.addr %s640, 4
          %s642 = scalar_lea.vmem %s8, %s641
        $region64: #{vit_encoder_forward.1} parent=51 // pred_fallthru
          _
        // Predicated region
        $region65: #{vit_encoder_forward.1} parent=51 // pred_check
          %p643 = pneg %p269
        $region66: #{vit_encoder_forward.1} parent=51 // pred_check_branch
          %645 = sbr.rel (%p643) target = $region68
        $region67: #{vit_encoder_forward.1} parent=51 // pred_region
          %p646 = scmp.lt.s32.totalorder %s36, 1
          %s647 = scalar_select %p646, %s36, 1
          %s648 = scalar_lea.vmem %s9, %s647
        $region68: #{vit_encoder_forward.1} parent=51 // pred_fallthru
          _
        // Predicated region
        $region69: #{vit_encoder_forward.1} parent=51 // pred_check
          %p649 = pneg %p295
        $region70: #{vit_encoder_forward.1} parent=51 // pred_check_branch
          %651 = sbr.rel (%p649) target = $region72
        $region71: #{vit_encoder_forward.1} parent=51 // pred_region
          %p652 = scmp.lt.s32.totalorder %s36, 1
          %s653 = scalar_select %p652, %s36, 1
          %s654 = smul.addr %s653, 4
          %s655 = smul.addr %s654, 4
          %s656 = scalar_lea.vmem %s10, %s655
        $region72: #{vit_encoder_forward.1} parent=51 // pred_fallthru
          _
        // Predicated region
        $region73: #{vit_encoder_forward.1} parent=51 // pred_check
          %p657 = pneg %p321
        $region74: #{vit_encoder_forward.1} parent=51 // pred_check_branch
          %659 = sbr.rel (%p657) target = $region76
        $region75: #{vit_encoder_forward.1} parent=51 // pred_region
          %p660 = scmp.lt.s32.totalorder %s36, 1
          %s661 = scalar_select %p660, %s36, 1
          %s662 = scalar_lea.vmem %s11, %s661
        $region76: #{vit_encoder_forward.1} parent=51 // pred_fallthru
          _
        // Predicated region
        $region77: #{vit_encoder_forward.1} parent=51 // pred_check
          %p663 = pneg %p347
        $region78: #{vit_encoder_forward.1} parent=51 // pred_check_branch
          %665 = sbr.rel (%p663) target = $region80
        $region79: #{vit_encoder_forward.1} parent=51 // pred_region
          %p666 = scmp.lt.s32.totalorder %s36, 1
          %s667 = scalar_select %p666, %s36, 1
          %s668 = scalar_lea.vmem %s12, %s667
        $region80: #{vit_encoder_forward.1} parent=51 // pred_fallthru
          _
        // Predicated region
        $region81: #{vit_encoder_forward.1} parent=51 // pred_check
          %p669 = pneg %p373
        $region82: #{vit_encoder_forward.1} parent=51 // pred_check_branch
          %671 = sbr.rel (%p669) target = $region84
        $region83: #{vit_encoder_forward.1} parent=51 // pred_region
          %p672 = scmp.lt.s32.totalorder %s36, 1
          %s673 = scalar_select %p672, %s36, 1
          %s674 = scalar_lea.vmem %s13, %s673
        $region84: #{vit_encoder_forward.1} parent=51 // pred_fallthru
          _
        // Predicated region
        $region85: #{vit_encoder_forward.1} parent=51 // pred_check
          %p675 = pneg %p399
        $region86: #{vit_encoder_forward.1} parent=51 // pred_check_branch
          %677 = sbr.rel (%p675) target = $region88
        $region87: #{vit_encoder_forward.1} parent=51 // pred_region
          %p678 = scmp.lt.s32.totalorder %s36, 1
          %s679 = scalar_select %p678, %s36, 1
          %s680 = smul.addr %s679, 4
          %s681 = smul.addr %s680, 4
          %s682 = scalar_lea.vmem %s14, %s681
        $region88: #{vit_encoder_forward.1} parent=51 // pred_fallthru
          _
        // Predicated region
        $region89: #{vit_encoder_forward.1} parent=51 // pred_check
          %p683 = pneg %p425
        $region90: #{vit_encoder_forward.1} parent=51 // pred_check_branch
          %685 = sbr.rel (%p683) target = $region92
        $region91: #{vit_encoder_forward.1} parent=51 // pred_region
          %p686 = scmp.lt.s32.totalorder %s36, 1
          %s687 = scalar_select %p686, %s36, 1
          %s688 = scalar_lea.vmem %s15, %s687
        $region92: #{vit_encoder_forward.1} parent=51 // pred_fallthru
          _
        // Predicated region
        $region93: #{vit_encoder_forward.1} parent=51 // pred_check
          %p689 = pneg %p451
        $region94: #{vit_encoder_forward.1} parent=51 // pred_check_branch
          %691 = sbr.rel (%p689) target = $region96
        $region95: #{vit_encoder_forward.1} parent=51 // pred_region
          %p692 = scmp.lt.s32.totalorder %s36, 1
          %s693 = scalar_select %p692, %s36, 1
          %s694 = smul.addr %s693, 16
          %s695 = smul.addr %s694, 4
          %s696 = scalar_lea.vmem %s16, %s695
        $region96: #{vit_encoder_forward.1} parent=51 // pred_fallthru
          _
        // Predicated region
        $region97: #{vit_encoder_forward.1} parent=51 // pred_check
          %p697 = pneg %p477
        $region98: #{vit_encoder_forward.1} parent=51 // pred_check_branch
          %699 = sbr.rel (%p697) target = $region100
        $region99: #{vit_encoder_forward.1} parent=51 // pred_region
          %p700 = scmp.lt.s32.totalorder %s36, 1
          %s701 = scalar_select %p700, %s36, 1
          %s702 = scalar_lea.vmem %s17, %s701
        $region100: #{vit_encoder_forward.1} parent=51 // pred_fallthru
          _
      $region52: #{vit_encoder_forward.1} parent=5 // pred_fallthru
        _
      %p703 = scmp.le.s32.totalorder 1, %s28
      %p704 = scmp.lt.s32.totalorder %s28, 3
      %p705 = pnand %p703, %p704
      %p706 = pneg %p705
      // Predicated region
      $region101: #{vit_encoder_forward.1} parent=5 // pred_check
        _
      $region102: #{vit_encoder_forward.1} parent=5 // pred_check_branch
        %708 = sbr.rel (%p705) target = $region104
      $region103: #{vit_encoder_forward.1} parent=5 // pred_region
        %s709 = ssub.s32 %s28, 1
        %p710 = scmp.lt.s32.totalorder %s37, 0
        %s711 = scalar_select %p710, %s37, 0
        %s712 = smul.addr %s711, 2
        %s713 = smul.addr %s712, 8
        %s714 = scalar_lea.vmem %s0, %s713
        %p715 = pneg %p66
        %p716 = pneg %p63
        %p717 = pneg %p87
        %p718 = pneg %p84
        %p719 = pneg %p108
        %p720 = pneg %p105
        %p721 = pneg %p129
        %p722 = pneg %p126
        %p723 = pneg %p150
        %p724 = pneg %p147
        %p725 = pneg %p171
        %p726 = pneg %p168
        %p727 = scmp.lt.s32.totalorder %s38, 1
        %s728 = scalar_select %p727, %s38, 1
        %s729 = scalar_lea.vmem %s6, %s728
        %p730 = pneg %p197
        %p731 = pneg %p194
        %p732 = scmp.lt.s32.totalorder %s38, 1
        %s733 = scalar_select %p732, %s38, 1
        %s734 = scalar_lea.vmem %s7, %s733
        %p735 = pneg %p223
        %p736 = pneg %p220
        %p737 = scmp.lt.s32.totalorder %s38, 1
        %s738 = scalar_select %p737, %s38, 1
        %s739 = smul.addr %s738, 4
        %s740 = smul.addr %s739, 4
        %s741 = scalar_lea.vmem %s8, %s740
        %p742 = pneg %p249
        %p743 = pneg %p246
        %p744 = scmp.lt.s32.totalorder %s38, 1
        %s745 = scalar_select %p744, %s38, 1
        %s746 = scalar_lea.vmem %s9, %s745
        %p747 = pneg %p275
        %p748 = pneg %p272
        %p749 = scmp.lt.s32.totalorder %s38, 1
        %s750 = scalar_select %p749, %s38, 1
        %s751 = smul.addr %s750, 4
        %s752 = smul.addr %s751, 4
        %s753 = scalar_lea.vmem %s10, %s752
        %p754 = pneg %p301
        %p755 = pneg %p298
        %p756 = scmp.lt.s32.totalorder %s38, 1
        %s757 = scalar_select %p756, %s38, 1
        %s758 = scalar_lea.vmem %s11, %s757
        %p759 = pneg %p327
        %p760 = pneg %p324
        %p761 = scmp.lt.s32.totalorder %s38, 1
        %s762 = scalar_select %p761, %s38, 1
        %s763 = scalar_lea.vmem %s12, %s762
        %p764 = pneg %p353
        %p765 = pneg %p350
        %p766 = scmp.lt.s32.totalorder %s38, 1
        %s767 = scalar_select %p766, %s38, 1
        %s768 = scalar_lea.vmem %s13, %s767
        %p769 = pneg %p379
        %p770 = pneg %p376
        %p771 = scmp.lt.s32.totalorder %s38, 1
        %s772 = scalar_select %p771, %s38, 1
        %s773 = smul.addr %s772, 4
        %s774 = smul.addr %s773, 4
        %s775 = scalar_lea.vmem %s14, %s774
        %p776 = pneg %p405
        %p777 = pneg %p402
        %p778 = scmp.lt.s32.totalorder %s38, 1
        %s779 = scalar_select %p778, %s38, 1
        %s780 = scalar_lea.vmem %s15, %s779
        %p781 = pneg %p431
        %p782 = pneg %p428
        %p783 = scmp.lt.s32.totalorder %s38, 1
        %s784 = scalar_select %p783, %s38, 1
        %s785 = smul.addr %s784, 16
        %s786 = smul.addr %s785, 4
        %s787 = scalar_lea.vmem %s16, %s786
        %p788 = pneg %p457
        %p789 = pneg %p454
        %p790 = scmp.lt.s32.totalorder %s38, 1
        %s791 = scalar_select %p790, %s38, 1
        %s792 = scalar_lea.vmem %s17, %s791
        %p793 = pneg %p483
        %p794 = pneg %p480
        %p795 = pneg %p504
        %p796 = pneg %p501
        %p797 = pneg %p525
        %p798 = pneg %p522
        %p799 = pneg %p546
        %p800 = pneg %p543
        %p801 = pneg %p572
        %p802 = pneg %p569
        %p803 = scmp.lt.s32.totalorder %s37, 0
        %s804 = scalar_select %p803, %s37, 0
        %s805 = smul.addr %s804, 2
        %s806 = smul.addr %s805, 8
        %s807 = scalar_lea.vmem %s0, %s806
        %p808 = scmp.lt.s32.totalorder %s38, 1
        %s809 = scalar_select %p808, %s38, 1
        %s810 = scalar_lea.vmem %s6, %s809
        %p811 = scmp.lt.s32.totalorder %s38, 1
        %s812 = scalar_select %p811, %s38, 1
        %s813 = scalar_lea.vmem %s7, %s812
        %p814 = scmp.lt.s32.totalorder %s38, 1
        %s815 = scalar_select %p814, %s38, 1
        %s816 = smul.addr %s815, 4
        %s817 = smul.addr %s816, 4
        %s818 = scalar_lea.vmem %s8, %s817
        %p819 = scmp.lt.s32.totalorder %s38, 1
        %s820 = scalar_select %p819, %s38, 1
        %s821 = scalar_lea.vmem %s9, %s820
        %p822 = scmp.lt.s32.totalorder %s38, 1
        %s823 = scalar_select %p822, %s38, 1
        %s824 = smul.addr %s823, 4
        %s825 = smul.addr %s824, 4
        %s826 = scalar_lea.vmem %s10, %s825
        %p827 = scmp.lt.s32.totalorder %s38, 1
        %s828 = scalar_select %p827, %s38, 1
        %s829 = scalar_lea.vmem %s11, %s828
        %p830 = scmp.lt.s32.totalorder %s38, 1
        %s831 = scalar_select %p830, %s38, 1
        %s832 = scalar_lea.vmem %s12, %s831
        %p833 = scmp.lt.s32.totalorder %s38, 1
        %s834 = scalar_select %p833, %s38, 1
        %s835 = scalar_lea.vmem %s13, %s834
        %p836 = scmp.lt.s32.totalorder %s38, 1
        %s837 = scalar_select %p836, %s38, 1
        %s838 = smul.addr %s837, 4
        %s839 = smul.addr %s838, 4
        %s840 = scalar_lea.vmem %s14, %s839
        %p841 = scmp.lt.s32.totalorder %s38, 1
        %s842 = scalar_select %p841, %s38, 1
        %s843 = scalar_lea.vmem %s15, %s842
        %p844 = scmp.lt.s32.totalorder %s38, 1
        %s845 = scalar_select %p844, %s38, 1
        %s846 = smul.addr %s845, 16
        %s847 = smul.addr %s846, 4
        %s848 = scalar_lea.vmem %s16, %s847
        %p849 = scmp.lt.s32.totalorder %s38, 1
        %s850 = scalar_select %p849, %s38, 1
        %s851 = scalar_lea.vmem %s17, %s850
        %p853 = scmp.eq.s32.totalorder %s38, 0
        // Predicated region
        $region105: #{vit_encoder_forward.1} parent=103 // pred_check
          %p854 = pneg %p853
        $region106: #{vit_encoder_forward.1} parent=103 // pred_check_branch
          %856 = sbr.rel (%p854) target = $region108
        $region107: #{vit_encoder_forward.1} parent=103 // pred_region
          %v857 = vld [vmem:[%s807] sm:$0xff]
          %v858 = vld [vmem:[%s807 + $0x8] sm:$0xff]
          %v859 = vld [vmem:[%s1] sm:$0xf]
          %v860 = vld [vmem:[%s1 + $0x4] sm:$0xf]
          %v861 = vld [vmem:[%s1 + $0x8] sm:$0xf]
          %v862 = vld [vmem:[%s1 + $0xc] sm:$0xf]
          %v863 = vld [vmem:[%s1 + $0x10] sm:$0xf]
          %v864 = vld [vmem:[%s1 + $0x14] sm:$0xf]
          %v865 = vld [vmem:[%s1 + $0x18] sm:$0xf]
          %v866 = vld [vmem:[%s1 + $0x1c] sm:$0xf]
          %v867 = vld [vmem:[%s1 + $0x20] sm:$0xf]
          %v868 = vld [vmem:[%s1 + $0x24] sm:$0xf]
          %v869 = vld [vmem:[%s1 + $0x28] sm:$0xf]
          %v870 = vld [vmem:[%s1 + $0x2c] sm:$0xf]
          %v871 = vld [vmem:[%s1 + $0x30] sm:$0xf]
          %v872 = vld [vmem:[%s1 + $0x34] sm:$0xf]
          %v873 = vld [vmem:[%s1 + $0x38] sm:$0xf]
          %v874 = vld [vmem:[%s1 + $0x3c] sm:$0xf]
          %v875 = vld [vmem:[%s1 + $0x40] sm:$0xf]
          %v876 = vld [vmem:[%s1 + $0x44] sm:$0xf]
          %v877 = vld [vmem:[%s1 + $0x48] sm:$0xf]
          %v878 = vld [vmem:[%s1 + $0x4c] sm:$0xf]
          %v879 = vld [vmem:[%s1 + $0x50] sm:$0xf]
          %v880 = vld [vmem:[%s1 + $0x54] sm:$0xf]
          %v881 = vld [vmem:[%s1 + $0x58] sm:$0xf]
          %v882 = vld [vmem:[%s1 + $0x5c] sm:$0xf]
          %v883 = vpack.c.bf16 %v857, %v857
          %v884 = vpack.c.bf16 %v858, %v858
          %v909 = vunpack.c.l.b16 %v859
          %v910 = vunpack.c.l.b16 %v860
          %v911 = vunpack.c.l.b16 %v861
          %v912 = vunpack.c.l.b16 %v862
          %v913 = vunpack.c.l.b16 %v863
          %v914 = vunpack.c.l.b16 %v864
          %v915 = vunpack.c.l.b16 %v865
          %v916 = vunpack.c.l.b16 %v866
          %v917 = vunpack.c.l.b16 %v867
          %v918 = vunpack.c.l.b16 %v868
          %v919 = vunpack.c.l.b16 %v869
          %v920 = vunpack.c.l.b16 %v870
          %v921 = vunpack.c.l.b16 %v871
          %v922 = vunpack.c.l.b16 %v872
          %v923 = vunpack.c.l.b16 %v873
          %v924 = vunpack.c.l.b16 %v874
          %v925 = vunpack.c.l.b16 %v875
          %v926 = vunpack.c.l.b16 %v876
          %v927 = vunpack.c.l.b16 %v877
          %v928 = vunpack.c.l.b16 %v878
          %v929 = vunpack.c.l.b16 %v879
          %v930 = vunpack.c.l.b16 %v880
          %v931 = vunpack.c.l.b16 %v881
          %v932 = vunpack.c.l.b16 %v882
          %v933 = vpack.c.b16 %v910, %v909
          %v934 = vpack.c.b16 %v912, %v911
          %v935 = vpack.c.b16 %v914, %v913
          %v936 = vpack.c.b16 %v916, %v915
          %v937 = vpack.c.b16 %v918, %v917
          %v938 = vpack.c.b16 %v920, %v919
          %v939 = vpack.c.b16 %v922, %v921
          %v940 = vpack.c.b16 %v924, %v923
          %v941 = vpack.c.b16 %v926, %v925
          %v942 = vpack.c.b16 %v928, %v927
          %v943 = vpack.c.b16 %v930, %v929
          %v944 = vpack.c.b16 %v932, %v931
          %vm957 = vcmask 523264
          %v959 = vsel %vm957, %v884, 0
          %961 = vmatpush.bf16.msra.mxu0 %v940
          %962 = vmatpush.bf16.msra.mxu0 %v939
          %963 = vmatpush.bf16.msra.mxu0 %v938
          %964 = vmatpush.bf16.msra.mxu0 %v937
          %965 = vmatpush.bf16.msra.mxu0 %v936
          %966 = vmatpush.bf16.msra.mxu0 %v935
          %967 = vmatpush.bf16.msra.mxu0 %v934
          %968 = vmatpush.bf16.msra.mxu0 %v933
          %969 = vmatmul.bf16.gmra.mxu0 %v883
          %v970 = vpop.f32.mrf.mxu0
          %v971 = vadd.f32 0.0, %v970
          %v972 = vpop.f32.mrf.mxu0
          %973 = vdwg.mxu0
          %974 = vmatpush.bf16.msra.mxu0 0
          %975 = vmatpush.bf16.msra.mxu0 0
          %976 = vmatpush.bf16.msra.mxu0 0
          %977 = vmatpush.bf16.msra.mxu0 0
          %978 = vmatpush.bf16.msra.mxu0 %v944
          %979 = vmatpush.bf16.msra.mxu0 %v943
          %980 = vmatpush.bf16.msra.mxu0 %v942
          %981 = vmatpush.bf16.msra.mxu0 %v941
          %982 = vmatmul.bf16.gmra.mxu0 %v959
          %v983 = vpop.f32.mrf.mxu0
          %v984 = vadd.f32 %v971, %v983
          %v985 = vpop.f32.mrf.mxu0
          %986 = vdwg.mxu0
          %v987 = vld [vmem:[%s2] sm:$0x1]
          %v989 = vrot.slane %v984, 7
          %vm991 = vcmask 1040384
          %v992 = vsel %vm991, %v987, %v989
          %vm993 = vcmask 1044480
          %v994 = vsel %vm993, %v992, 0.0
          %v995 = vld [vmem:[%s3] sm:$0xff]
          %v996 = vadd.f32 %v994, %v995
          %v997 = vld [vmem:[%s4] sm:$0x1]
          %v998 = vld [vmem:[%s5] sm:$0x1]
          %vm999 = vcmask 261120
          %v1000 = vsel %vm999, %v996, 0.0
          %1001 = vadd.xlane.f32.xlu0 %v1000
          %v1002 = vpop.xlane.xlu0 %1001
          %v1003 = vrcp.pop 32.0
          %v1004 = vmul.f32 32.0, %v1003
          %v1005 = vsub.f32 1.0, %v1004
          %v1006 = vmul.f32 %v1003, %v1005
          %v1007 = vadd.f32 %v1003, %v1006
          %vm1008 = vweird.f32 %v1003
          %v1009 = vsel %vm1008, %v1003, %v1007
          %v1010 = vmul.f32 %v1002, %v1009
          %v1011 = vsub.f32 %v996, %v1010
          %v1012 = vmul.f32 %v1011, %v1011
          %v1013 = vsel %vm999, %v1012, 0.0
          %1014 = vadd.xlane.f32.xlu0 %v1013
          %v1015 = vpop.xlane.xlu0 %1014
          %v1016 = vmul.f32 %v1015, %v1009
          %v1017 = vadd.f32 %v1016, 1e-05
          %v1018 = vrsqrt.pop %v1017
          %v1019 = vmul.f32 %v1018, %v1017
          %v1020 = vmul.f32 %v1019, %v1018
          %v1021 = vmul.f32 0.5, %v1020
          %v1022 = vsub.f32 1.5, %v1021
          %v1023 = vmul.f32 %v1018, %v1022
          %vm1024 = vweird.f32 %v1017
          %vm1025 = vweird.f32 %v1018
          %vm1026 = vmor %vm1024, %vm1025
          %v1027 = vsel %vm1026, %v1018, %v1023
          %v1028 = vmul.f32 %v1011, %v1027
          %v1030 = vperm.slane %v997, 0
          %v1032 = vmul.f32 %v1028, %v1030
          %v1034 = vperm.slane %v998, 0
          %v1036 = vadd.f32 %v1032, %v1034
          %1037 = vst.msk [vmem:[#allocation2] sm:$0xff] %vm999, %v1036
          %v1038 = vld [vmem:[%s2] sm:$0x1]
          %v1039 = vrot.slane %v984, 3
          %v1041 = vsel %vm991, %v1038, %v1039
          %v1042 = vsel %vm993, %v1041, 0.0
          %v1043 = vld [vmem:[%s3] sm:$0xff]
          %v1044 = vadd.f32 %v1042, %v1043
          %v1045 = vld [vmem:[%s4] sm:$0x1]
          %v1046 = vld [vmem:[%s5] sm:$0x1]
          %v1047 = vsel %vm999, %v1044, 0.0
          %1048 = vadd.xlane.f32.xlu0 %v1047
          %v1049 = vpop.xlane.xlu0 %1048
          %v1050 = vmul.f32 %v1049, %v1009
          %v1051 = vsub.f32 %v1044, %v1050
          %v1052 = vmul.f32 %v1051, %v1051
          %v1053 = vsel %vm999, %v1052, 0.0
          %1054 = vadd.xlane.f32.xlu0 %v1053
          %v1055 = vpop.xlane.xlu0 %1054
          %v1056 = vmul.f32 %v1055, %v1009
          %v1057 = vadd.f32 %v1056, 1e-05
          %v1058 = vrsqrt.pop %v1057
          %v1059 = vmul.f32 %v1058, %v1057
          %v1060 = vmul.f32 %v1059, %v1058
          %v1061 = vmul.f32 0.5, %v1060
          %v1062 = vsub.f32 1.5, %v1061
          %v1063 = vmul.f32 %v1058, %v1062
          %vm1064 = vweird.f32 %v1057
          %vm1065 = vweird.f32 %v1058
          %vm1066 = vmor %vm1064, %vm1065
          %v1067 = vsel %vm1066, %v1058, %v1063
          %v1068 = vmul.f32 %v1051, %v1067
          %v1070 = vperm.slane %v1045, 0
          %v1072 = vmul.f32 %v1068, %v1070
          %v1074 = vperm.slane %v1046, 0
          %v1076 = vadd.f32 %v1072, %v1074
          %1077 = vst.msk [vmem:[#allocation2 + $0x8] sm:$0xff] %vm999, %v1076
        $region108: #{vit_encoder_forward.1} parent=103 // pred_fallthru
          _
        %v1078 = vld [vmem:[#allocation2] sm:$0xff]
        %v1079 = vld [vmem:[#allocation2 + $0x8] sm:$0xff]
        %v1080 = vld [vmem:[%s810] sm:$0x1]
        %v1081 = vld [vmem:[%s813] sm:$0x1]
        %vm1082 = vcmask 261120
        %v1083 = vsel %vm1082, %v1078, 0.0
        %1084 = vadd.xlane.f32.xlu0 %v1083
        %v1085 = vpop.xlane.xlu0 %1084
        %v1086 = vsel %vm1082, %v1079, 0.0
        %1087 = vadd.xlane.f32.xlu0 %v1086
        %v1088 = vpop.xlane.xlu0 %1087
        %v1089 = vrcp.pop 32.0
        %v1090 = vmul.f32 32.0, %v1089
        %v1091 = vsub.f32 1.0, %v1090
        %v1092 = vmul.f32 %v1089, %v1091
        %v1093 = vadd.f32 %v1089, %v1092
        %vm1094 = vweird.f32 %v1089
        %v1095 = vsel %vm1094, %v1089, %v1093
        %v1096 = vmul.f32 %v1085, %v1095
        %v1097 = vmul.f32 %v1088, %v1095
        %v1098 = vsub.f32 %v1078, %v1096
        %v1099 = vsub.f32 %v1079, %v1097
        %v1100 = vmul.f32 %v1098, %v1098
        %v1101 = vmul.f32 %v1099, %v1099
        %v1102 = vsel %vm1082, %v1100, 0.0
        %1103 = vadd.xlane.f32.xlu0 %v1102
        %v1104 = vpop.xlane.xlu0 %1103
        %v1105 = vsel %vm1082, %v1101, 0.0
        %1106 = vadd.xlane.f32.xlu0 %v1105
        %v1107 = vpop.xlane.xlu0 %1106
        %v1108 = vmul.f32 %v1104, %v1095
        %v1109 = vmul.f32 %v1107, %v1095
        %v1110 = vadd.f32 %v1108, 1e-05
        %v1111 = vadd.f32 %v1109, 1e-05
        %v1112 = vrsqrt.pop %v1110
        %v1113 = vmul.f32 %v1112, %v1110
        %v1114 = vmul.f32 %v1113, %v1112
        %v1115 = vmul.f32 0.5, %v1114
        %v1116 = vsub.f32 1.5, %v1115
        %v1117 = vmul.f32 %v1112, %v1116
        %vm1118 = vweird.f32 %v1110
        %vm1119 = vweird.f32 %v1112
        %vm1120 = vmor %vm1118, %vm1119
        %v1121 = vsel %vm1120, %v1112, %v1117
        %v1122 = vrsqrt.pop %v1111
        %v1123 = vmul.f32 %v1122, %v1111
        %v1124 = vmul.f32 %v1123, %v1122
        %v1125 = vmul.f32 0.5, %v1124
        %v1126 = vsub.f32 1.5, %v1125
        %v1127 = vmul.f32 %v1122, %v1126
        %vm1128 = vweird.f32 %v1111
        %vm1129 = vweird.f32 %v1122
        %vm1130 = vmor %vm1128, %vm1129
        %v1131 = vsel %vm1130, %v1122, %v1127
        %v1132 = vmul.f32 %v1098, %v1121
        %v1133 = vmul.f32 %v1099, %v1131
        %v1135 = vperm.slane %v1080, 0
        %v1137 = vmul.f32 %v1132, %v1135
        %v1138 = vmul.f32 %v1133, %v1135
        %v1140 = vperm.slane %v1081, 0
        %v1142 = vadd.f32 %v1137, %v1140
        %v1143 = vadd.f32 %v1138, %v1140
        %v1144 = vld [vmem:[%s818] sm:$0xf]
        %v1145 = vld [vmem:[%s818 + $0x4] sm:$0xf]
        %v1146 = vld [vmem:[%s818 + $0x8] sm:$0xf]
        %v1147 = vld [vmem:[%s818 + $0xc] sm:$0xf]
        %v1148 = vpack.c.bf16 %v1143, %v1142
        %v1149 = vld [vmem:[%s821] sm:$0x1]
        %v1151 = vperm.slane %v1149, 0
        %v1157 = vunpack.c.l.b16 %v1144
        %v1158 = vunpack.c.l.b16 %v1145
        %v1159 = vunpack.c.l.b16 %v1146
        %v1160 = vunpack.c.l.b16 %v1147
        %v1161 = vpack.c.b16 %v1158, %v1157
        %v1162 = vpack.c.b16 %v1160, %v1159
        %v1166 = vsel %vm1082, %v1148, 0
        %1168 = vmatpush.bf16.msra.mxu0 0
        %1169 = vmatpush.bf16.msra.mxu0 0
        %1170 = vmatpush.bf16.msra.mxu0 0
        %1171 = vmatpush.bf16.msra.mxu0 0
        %1172 = vmatpush.bf16.msra.mxu0 0
        %1173 = vmatpush.bf16.msra.mxu0 0
        %1174 = vmatpush.bf16.msra.mxu0 %v1162
        %1175 = vmatpush.bf16.msra.mxu0 %v1161
        %1176 = vmatmul.bf16.gmra.mxu0 %v1166
        %v1177 = vpop.f32.mrf.mxu0
        %v1178 = vadd.f32 %v1151, %v1177
        %v1179 = vpop.f32.mrf.mxu0
        %v1180 = vadd.f32 %v1151, %v1179
        %1181 = vdwg.mxu0
        %v1182 = vmul.f32 %v1178, 0.35355338
        %v1183 = vmul.f32 %v1180, 0.35355338
        %v1184 = vlaneseq
        %v1185 = vand.u32 %v1184, 127
        %vm1186 = vcmp.ge.s32.totalorder %v1185, 5
        %v1187 = vsel %vm1186, -1e+30, 0.0
        %v1188 = vpack.c.bf16 %v1182, %v1182
        %v1189 = vpack.c.bf16 %v1178, %v1178
        %1191 = vrot.lane.b32.xlu0 %v1189, 96
        %v1192 = vpop.permute.xlu0 %1191
        %vm1193 = vcmask 64512
        %v1195 = vsel %vm1193, %v1188, 0
        %v1198 = vsel %vm1193, %v1192, 0
        %1200 = vmatpush.bf16.xpose.msra.mxu0 0
        %1201 = vmatpush.bf16.xpose.msra.mxu0 0
        %1202 = vmatpush.bf16.xpose.msra.mxu0 0
        %1203 = vmatpush.bf16.xpose.msra.mxu0 0
        %1204 = vmatpush.bf16.xpose.msra.mxu0 0
        %1205 = vmatpush.bf16.xpose.msra.mxu0 0
        %1206 = vmatpush.bf16.xpose.msra.mxu0 0
        %1207 = vmatpush.bf16.xpose.msra.mxu0 %v1198
        %1208 = vmatmul.bf16.gmra.mxu0 %v1195
        %v1209 = vpop.f32.mrf.mxu0
        %v1210 = vadd.f32 %v1187, %v1209
        %v1211 = vpop.f32.mrf.mxu0
        %1212 = vdwg.mxu0
        %v1213 = vsel %vm1193, %v1210, -inf
        %1214 = vmax.xlane.f32.xlu0 %v1213
        %v1215 = vpop.xlane.xlu0 %1214
        %v1216 = vsub.f32 %v1210, %v1215
        %v1217 = vmul.f32 %v1216, 1.442695
        %v1218 = vpow.pop %v1217
        %v1219 = vsel %vm1193, %v1218, 0.0
        %1220 = vadd.xlane.f32.xlu0 %v1219
        %v1221 = vpop.xlane.xlu0 %1220
        %v1222 = vrcp.pop %v1221
        %v1223 = vmul.f32 %v1221, %v1222
        %v1224 = vsub.f32 1.0, %v1223
        %v1225 = vmul.f32 %v1222, %v1224
        %v1226 = vadd.f32 %v1222, %v1225
        %vm1227 = vweird.f32 %v1221
        %vm1228 = vweird.f32 %v1222
        %vm1229 = vmor %vm1227, %vm1228
        %v1230 = vsel %vm1229, %v1222, %v1226
        %v1231 = vand.u32 2147483647, %v1221
        %vm1232 = vcmp.eq.f32.partialorder %v1231, 8.507059e+37
        %v1233 = vand.u32 %v1221, 2147483648
        %v1234 = vor.u32 1.1754944e-38, %v1233
        %v1235 = vsel %vm1232, %v1234, %v1230
        %v1236 = vmul.f32 %v1218, %v1235
        %v1237 = vpack.c.bf16 %v1236, %v1236
        %1238 = vrot.lane.b32.xlu0 %v1189, 64
        %v1239 = vpop.permute.xlu0 %1238
        %v1241 = vsel %vm1193, %v1237, 0
        %vm1243 = vcmask 1043456
        %v1245 = vsel %vm1243, %v1239, 0
        %1247 = vmatpush.bf16.msra.mxu0 0
        %1248 = vmatpush.bf16.msra.mxu0 0
        %1249 = vmatpush.bf16.msra.mxu0 0
        %1250 = vmatpush.bf16.msra.mxu0 0
        %1251 = vmatpush.bf16.msra.mxu0 0
        %1252 = vmatpush.bf16.msra.mxu0 0
        %1253 = vmatpush.bf16.msra.mxu0 0
        %1254 = vmatpush.bf16.msra.mxu0 %v1245
        %1255 = vmatmul.bf16.gmra.mxu0 %v1241
        %v1256 = vpop.f32.mrf.mxu0
        %v1257 = vadd.f32 0.0, %v1256
        %v1258 = vpop.f32.mrf.mxu0
        %1259 = vdwg.mxu0
        %v1260 = vld [vmem:[%s826] sm:$0xf]
        %v1261 = vpack.c.bf16 %v1257, %v1257
        %1263 = vrot.lane.b32.xlu0 %v1188, 120
        %v1264 = vpop.permute.xlu0 %1263
        %1265 = vrot.lane.b32.xlu0 %v1189, 88
        %v1266 = vpop.permute.xlu0 %1265
        %v1268 = vsel %vm1193, %v1264, 0
        %v1271 = vsel %vm1193, %v1266, 0
        %1273 = vmatpush.bf16.xpose.msra.mxu0 0
        %1274 = vmatpush.bf16.xpose.msra.mxu0 0
        %1275 = vmatpush.bf16.xpose.msra.mxu0 0
        %1276 = vmatpush.bf16.xpose.msra.mxu0 0
        %1277 = vmatpush.bf16.xpose.msra.mxu0 0
        %1278 = vmatpush.bf16.xpose.msra.mxu0 0
        %1279 = vmatpush.bf16.xpose.msra.mxu0 0
        %1280 = vmatpush.bf16.xpose.msra.mxu0 %v1271
        %1281 = vmatmul.bf16.gmra.mxu0 %v1268
        %v1282 = vpop.f32.mrf.mxu0
        %v1283 = vadd.f32 %v1187, %v1282
        %v1284 = vpop.f32.mrf.mxu0
        %1285 = vdwg.mxu0
        %v1286 = vsel %vm1193, %v1283, -inf
        %1287 = vmax.xlane.f32.xlu0 %v1286
        %v1288 = vpop.xlane.xlu0 %1287
        %v1289 = vsub.f32 %v1283, %v1288
        %v1290 = vmul.f32 %v1289, 1.442695
        %v1291 = vpow.pop %v1290
        %v1292 = vsel %vm1193, %v1291, 0.0
        %1293 = vadd.xlane.f32.xlu0 %v1292
        %v1294 = vpop.xlane.xlu0 %1293
        %v1295 = vrcp.pop %v1294
        %v1296 = vmul.f32 %v1294, %v1295
        %v1297 = vsub.f32 1.0, %v1296
        %v1298 = vmul.f32 %v1295, %v1297
        %v1299 = vadd.f32 %v1295, %v1298
        %vm1300 = vweird.f32 %v1294
        %vm1301 = vweird.f32 %v1295
        %vm1302 = vmor %vm1300, %vm1301
        %v1303 = vsel %vm1302, %v1295, %v1299
        %v1304 = vand.u32 2147483647, %v1294
        %vm1305 = vcmp.eq.f32.partialorder %v1304, 8.507059e+37
        %v1306 = vand.u32 %v1294, 2147483648
        %v1307 = vor.u32 1.1754944e-38, %v1306
        %v1308 = vsel %vm1305, %v1307, %v1303
        %v1309 = vmul.f32 %v1291, %v1308
        %v1310 = vpack.c.bf16 %v1309, %v1309
        %1311 = vrot.lane.b32.xlu0 %v1189, 56
        %v1312 = vpop.permute.xlu0 %1311
        %v1314 = vsel %vm1193, %v1310, 0
        %v1317 = vsel %vm1243, %v1312, 0
        %1319 = vmatpush.bf16.msra.mxu0 0
        %1320 = vmatpush.bf16.msra.mxu0 0
        %1321 = vmatpush.bf16.msra.mxu0 0
        %1322 = vmatpush.bf16.msra.mxu0 0
        %1323 = vmatpush.bf16.msra.mxu0 0
        %1324 = vmatpush.bf16.msra.mxu0 0
        %1325 = vmatpush.bf16.msra.mxu0 0
        %1326 = vmatpush.bf16.msra.mxu0 %v1317
        %1327 = vmatmul.bf16.gmra.mxu0 %v1314
        %v1328 = vpop.f32.mrf.mxu0
        %v1329 = vadd.f32 0.0, %v1328
        %v1330 = vpop.f32.mrf.mxu0
        %1331 = vdwg.mxu0
        %v1332 = vld [vmem:[%s826 + $0x4] sm:$0xf]
        %v1333 = vpack.c.bf16 %v1329, %v1329
        %v1335 = vsel %vm1193, %v1333, 0
        %v1338 = vsel %vm1243, %v1332, 0
        %1340 = vmatpush.bf16.msra.mxu0 0
        %1341 = vmatpush.bf16.msra.mxu0 0
        %1342 = vmatpush.bf16.msra.mxu0 0
        %1343 = vmatpush.bf16.msra.mxu0 0
        %1344 = vmatpush.bf16.msra.mxu0 0
        %1345 = vmatpush.bf16.msra.mxu0 0
        %1346 = vmatpush.bf16.msra.mxu0 0
        %1347 = vmatpush.bf16.msra.mxu0 %v1338
        %1348 = vmatmul.bf16.gmra.mxu0 %v1335
        %v1349 = vpop.f32.mrf.mxu0
        %v1350 = vadd.f32 0.0, %v1349
        %v1351 = vpop.f32.mrf.mxu0
        %1352 = vdwg.mxu0
        %v1354 = vsel %vm1193, %v1261, 0
        %v1357 = vsel %vm1243, %v1260, 0
        %1359 = vmatpush.bf16.msra.mxu0 0
        %1360 = vmatpush.bf16.msra.mxu0 0
        %1361 = vmatpush.bf16.msra.mxu0 0
        %1362 = vmatpush.bf16.msra.mxu0 0
        %1363 = vmatpush.bf16.msra.mxu0 0
        %1364 = vmatpush.bf16.msra.mxu0 0
        %1365 = vmatpush.bf16.msra.mxu0 0
        %1366 = vmatpush.bf16.msra.mxu0 %v1357
        %1367 = vmatmul.bf16.gmra.mxu0 %v1354
        %v1368 = vpop.f32.mrf.mxu0
        %v1369 = vadd.f32 %v1350, %v1368
        %v1370 = vpop.f32.mrf.mxu0
        %1371 = vdwg.mxu0
        %1372 = vrot.lane.b32.xlu0 %v1188, 112
        %v1373 = vpop.permute.xlu0 %1372
        %1374 = vrot.lane.b32.xlu0 %v1189, 80
        %v1375 = vpop.permute.xlu0 %1374
        %v1377 = vsel %vm1193, %v1373, 0
        %v1380 = vsel %vm1193, %v1375, 0
        %1382 = vmatpush.bf16.xpose.msra.mxu0 0
        %1383 = vmatpush.bf16.xpose.msra.mxu0 0
        %1384 = vmatpush.bf16.xpose.msra.mxu0 0
        %1385 = vmatpush.bf16.xpose.msra.mxu0 0
        %1386 = vmatpush.bf16.xpose.msra.mxu0 0
        %1387 = vmatpush.bf16.xpose.msra.mxu0 0
        %1388 = vmatpush.bf16.xpose.msra.mxu0 0
        %1389 = vmatpush.bf16.xpose.msra.mxu0 %v1380
        %1390 = vmatmul.bf16.gmra.mxu0 %v1377
        %v1391 = vpop.f32.mrf.mxu0
        %v1392 = vadd.f32 %v1187, %v1391
        %v1393 = vpop.f32.mrf.mxu0
        %1394 = vdwg.mxu0
        %v1395 = vsel %vm1193, %v1392, -inf
        %1396 = vmax.xlane.f32.xlu0 %v1395
        %v1397 = vpop.xlane.xlu0 %1396
        %v1398 = vsub.f32 %v1392, %v1397
        %v1399 = vmul.f32 %v1398, 1.442695
        %v1400 = vpow.pop %v1399
        %v1401 = vsel %vm1193, %v1400, 0.0
        %1402 = vadd.xlane.f32.xlu0 %v1401
        %v1403 = vpop.xlane.xlu0 %1402
        %v1404 = vrcp.pop %v1403
        %v1405 = vmul.f32 %v1403, %v1404
        %v1406 = vsub.f32 1.0, %v1405
        %v1407 = vmul.f32 %v1404, %v1406
        %v1408 = vadd.f32 %v1404, %v1407
        %vm1409 = vweird.f32 %v1403
        %vm1410 = vweird.f32 %v1404
        %vm1411 = vmor %vm1409, %vm1410
        %v1412 = vsel %vm1411, %v1404, %v1408
        %v1413 = vand.u32 2147483647, %v1403
        %vm1414 = vcmp.eq.f32.partialorder %v1413, 8.507059e+37
        %v1415 = vand.u32 %v1403, 2147483648
        %v1416 = vor.u32 1.1754944e-38, %v1415
        %v1417 = vsel %vm1414, %v1416, %v1412
        %v1418 = vmul.f32 %v1400, %v1417
        %v1419 = vpack.c.bf16 %v1418, %v1418
        %1420 = vrot.lane.b32.xlu0 %v1189, 48
        %v1421 = vpop.permute.xlu0 %1420
        %v1423 = vsel %vm1193, %v1419, 0
        %v1426 = vsel %vm1243, %v1421, 0
        %1428 = vmatpush.bf16.msra.mxu0 0
        %1429 = vmatpush.bf16.msra.mxu0 0
        %1430 = vmatpush.bf16.msra.mxu0 0
        %1431 = vmatpush.bf16.msra.mxu0 0
        %1432 = vmatpush.bf16.msra.mxu0 0
        %1433 = vmatpush.bf16.msra.mxu0 0
        %1434 = vmatpush.bf16.msra.mxu0 0
        %1435 = vmatpush.bf16.msra.mxu0 %v1426
        %1436 = vmatmul.bf16.gmra.mxu0 %v1423
        %v1437 = vpop.f32.mrf.mxu0
        %v1438 = vadd.f32 0.0, %v1437
        %v1439 = vpop.f32.mrf.mxu0
        %1440 = vdwg.mxu0
        %v1441 = vld [vmem:[%s826 + $0x8] sm:$0xf]
        %v1442 = vpack.c.bf16 %v1438, %v1438
        %v1444 = vsel %vm1193, %v1442, 0
        %v1447 = vsel %vm1243, %v1441, 0
        %1449 = vmatpush.bf16.msra.mxu0 0
        %1450 = vmatpush.bf16.msra.mxu0 0
        %1451 = vmatpush.bf16.msra.mxu0 0
        %1452 = vmatpush.bf16.msra.mxu0 0
        %1453 = vmatpush.bf16.msra.mxu0 0
        %1454 = vmatpush.bf16.msra.mxu0 0
        %1455 = vmatpush.bf16.msra.mxu0 0
        %1456 = vmatpush.bf16.msra.mxu0 %v1447
        %1457 = vmatmul.bf16.gmra.mxu0 %v1444
        %v1458 = vpop.f32.mrf.mxu0
        %v1459 = vadd.f32 0.0, %v1458
        %v1460 = vpop.f32.mrf.mxu0
        %1461 = vdwg.mxu0
        %v1462 = vadd.f32 %v1369, %v1459
        %1463 = vrot.lane.b32.xlu0 %v1188, 104
        %v1464 = vpop.permute.xlu0 %1463
        %1465 = vrot.lane.b32.xlu0 %v1189, 72
        %v1466 = vpop.permute.xlu0 %1465
        %v1468 = vsel %vm1193, %v1464, 0
        %v1471 = vsel %vm1193, %v1466, 0
        %1473 = vmatpush.bf16.xpose.msra.mxu0 0
        %1474 = vmatpush.bf16.xpose.msra.mxu0 0
        %1475 = vmatpush.bf16.xpose.msra.mxu0 0
        %1476 = vmatpush.bf16.xpose.msra.mxu0 0
        %1477 = vmatpush.bf16.xpose.msra.mxu0 0
        %1478 = vmatpush.bf16.xpose.msra.mxu0 0
        %1479 = vmatpush.bf16.xpose.msra.mxu0 0
        %1480 = vmatpush.bf16.xpose.msra.mxu0 %v1471
        %1481 = vmatmul.bf16.gmra.mxu0 %v1468
        %v1482 = vpop.f32.mrf.mxu0
        %v1483 = vadd.f32 %v1187, %v1482
        %v1484 = vpop.f32.mrf.mxu0
        %1485 = vdwg.mxu0
        %v1486 = vsel %vm1193, %v1483, -inf
        %1487 = vmax.xlane.f32.xlu0 %v1486
        %v1488 = vpop.xlane.xlu0 %1487
        %v1489 = vsub.f32 %v1483, %v1488
        %v1490 = vmul.f32 %v1489, 1.442695
        %v1491 = vpow.pop %v1490
        %v1492 = vsel %vm1193, %v1491, 0.0
        %1493 = vadd.xlane.f32.xlu0 %v1492
        %v1494 = vpop.xlane.xlu0 %1493
        %v1495 = vrcp.pop %v1494
        %v1496 = vmul.f32 %v1494, %v1495
        %v1497 = vsub.f32 1.0, %v1496
        %v1498 = vmul.f32 %v1495, %v1497
        %v1499 = vadd.f32 %v1495, %v1498
        %vm1500 = vweird.f32 %v1494
        %vm1501 = vweird.f32 %v1495
        %vm1502 = vmor %vm1500, %vm1501
        %v1503 = vsel %vm1502, %v1495, %v1499
        %v1504 = vand.u32 2147483647, %v1494
        %vm1505 = vcmp.eq.f32.partialorder %v1504, 8.507059e+37
        %v1506 = vand.u32 %v1494, 2147483648
        %v1507 = vor.u32 1.1754944e-38, %v1506
        %v1508 = vsel %vm1505, %v1507, %v1503
        %v1509 = vmul.f32 %v1491, %v1508
        %v1510 = vpack.c.bf16 %v1509, %v1509
        %1511 = vrot.lane.b32.xlu0 %v1189, 40
        %v1512 = vpop.permute.xlu0 %1511
        %v1514 = vsel %vm1193, %v1510, 0
        %v1517 = vsel %vm1243, %v1512, 0
        %1519 = vmatpush.bf16.msra.mxu0 0
        %1520 = vmatpush.bf16.msra.mxu0 0
        %1521 = vmatpush.bf16.msra.mxu0 0
        %1522 = vmatpush.bf16.msra.mxu0 0
        %1523 = vmatpush.bf16.msra.mxu0 0
        %1524 = vmatpush.bf16.msra.mxu0 0
        %1525 = vmatpush.bf16.msra.mxu0 0
        %1526 = vmatpush.bf16.msra.mxu0 %v1517
        %1527 = vmatmul.bf16.gmra.mxu0 %v1514
        %v1528 = vpop.f32.mrf.mxu0
        %v1529 = vadd.f32 0.0, %v1528
        %v1530 = vpop.f32.mrf.mxu0
        %1531 = vdwg.mxu0
        %v1532 = vld [vmem:[%s826 + $0xc] sm:$0xf]
        %v1533 = vpack.c.bf16 %v1529, %v1529
        %v1535 = vsel %vm1193, %v1533, 0
        %v1538 = vsel %vm1243, %v1532, 0
        %1540 = vmatpush.bf16.msra.mxu0 0
        %1541 = vmatpush.bf16.msra.mxu0 0
        %1542 = vmatpush.bf16.msra.mxu0 0
        %1543 = vmatpush.bf16.msra.mxu0 0
        %1544 = vmatpush.bf16.msra.mxu0 0
        %1545 = vmatpush.bf16.msra.mxu0 0
        %1546 = vmatpush.bf16.msra.mxu0 0
        %1547 = vmatpush.bf16.msra.mxu0 %v1538
        %1548 = vmatmul.bf16.gmra.mxu0 %v1535
        %v1549 = vpop.f32.mrf.mxu0
        %v1550 = vadd.f32 0.0, %v1549
        %v1551 = vpop.f32.mrf.mxu0
        %1552 = vdwg.mxu0
        %v1553 = vadd.f32 %v1462, %v1550
        %v1554 = vpack.c.bf16 %v1183, %v1183
        %v1555 = vpack.c.bf16 %v1180, %v1180
        %1557 = vrot.lane.b32.xlu0 %v1555, 96
        %v1558 = vpop.permute.xlu0 %1557
        %v1560 = vsel %vm1193, %v1554, 0
        %v1563 = vsel %vm1193, %v1558, 0
        %1565 = vmatpush.bf16.xpose.msra.mxu0 0
        %1566 = vmatpush.bf16.xpose.msra.mxu0 0
        %1567 = vmatpush.bf16.xpose.msra.mxu0 0
        %1568 = vmatpush.bf16.xpose.msra.mxu0 0
        %1569 = vmatpush.bf16.xpose.msra.mxu0 0
        %1570 = vmatpush.bf16.xpose.msra.mxu0 0
        %1571 = vmatpush.bf16.xpose.msra.mxu0 0
        %1572 = vmatpush.bf16.xpose.msra.mxu0 %v1563
        %1573 = vmatmul.bf16.gmra.mxu0 %v1560
        %v1574 = vpop.f32.mrf.mxu0
        %v1575 = vadd.f32 %v1187, %v1574
        %v1576 = vpop.f32.mrf.mxu0
        %1577 = vdwg.mxu0
        %v1578 = vsel %vm1193, %v1575, -inf
        %1579 = vmax.xlane.f32.xlu0 %v1578
        %v1580 = vpop.xlane.xlu0 %1579
        %v1581 = vsub.f32 %v1575, %v1580
        %v1582 = vmul.f32 %v1581, 1.442695
        %v1583 = vpow.pop %v1582
        %v1584 = vsel %vm1193, %v1583, 0.0
        %1585 = vadd.xlane.f32.xlu0 %v1584
        %v1586 = vpop.xlane.xlu0 %1585
        %v1587 = vrcp.pop %v1586
        %v1588 = vmul.f32 %v1586, %v1587
        %v1589 = vsub.f32 1.0, %v1588
        %v1590 = vmul.f32 %v1587, %v1589
        %v1591 = vadd.f32 %v1587, %v1590
        %vm1592 = vweird.f32 %v1586
        %vm1593 = vweird.f32 %v1587
        %vm1594 = vmor %vm1592, %vm1593
        %v1595 = vsel %vm1594, %v1587, %v1591
        %v1596 = vand.u32 2147483647, %v1586
        %vm1597 = vcmp.eq.f32.partialorder %v1596, 8.507059e+37
        %v1598 = vand.u32 %v1586, 2147483648
        %v1599 = vor.u32 1.1754944e-38, %v1598
        %v1600 = vsel %vm1597, %v1599, %v1595
        %v1601 = vmul.f32 %v1583, %v1600
        %v1602 = vpack.c.bf16 %v1601, %v1601
        %1603 = vrot.lane.b32.xlu0 %v1555, 64
        %v1604 = vpop.permute.xlu0 %1603
        %v1606 = vsel %vm1193, %v1602, 0
        %v1609 = vsel %vm1243, %v1604, 0
        %1611 = vmatpush.bf16.msra.mxu0 0
        %1612 = vmatpush.bf16.msra.mxu0 0
        %1613 = vmatpush.bf16.msra.mxu0 0
        %1614 = vmatpush.bf16.msra.mxu0 0
        %1615 = vmatpush.bf16.msra.mxu0 0
        %1616 = vmatpush.bf16.msra.mxu0 0
        %1617 = vmatpush.bf16.msra.mxu0 0
        %1618 = vmatpush.bf16.msra.mxu0 %v1609
        %1619 = vmatmul.bf16.gmra.mxu0 %v1606
        %v1620 = vpop.f32.mrf.mxu0
        %v1621 = vadd.f32 0.0, %v1620
        %v1622 = vpop.f32.mrf.mxu0
        %1623 = vdwg.mxu0
        %v1624 = vpack.c.bf16 %v1621, %v1621
        %1626 = vrot.lane.b32.xlu0 %v1554, 120
        %v1627 = vpop.permute.xlu0 %1626
        %1628 = vrot.lane.b32.xlu0 %v1555, 88
        %v1629 = vpop.permute.xlu0 %1628
        %v1631 = vsel %vm1193, %v1627, 0
        %v1634 = vsel %vm1193, %v1629, 0
        %1636 = vmatpush.bf16.xpose.msra.mxu0 0
        %1637 = vmatpush.bf16.xpose.msra.mxu0 0
        %1638 = vmatpush.bf16.xpose.msra.mxu0 0
        %1639 = vmatpush.bf16.xpose.msra.mxu0 0
        %1640 = vmatpush.bf16.xpose.msra.mxu0 0
        %1641 = vmatpush.bf16.xpose.msra.mxu0 0
        %1642 = vmatpush.bf16.xpose.msra.mxu0 0
        %1643 = vmatpush.bf16.xpose.msra.mxu0 %v1634
        %1644 = vmatmul.bf16.gmra.mxu0 %v1631
        %v1645 = vpop.f32.mrf.mxu0
        %v1646 = vadd.f32 %v1187, %v1645
        %v1647 = vpop.f32.mrf.mxu0
        %1648 = vdwg.mxu0
        %v1649 = vsel %vm1193, %v1646, -inf
        %1650 = vmax.xlane.f32.xlu0 %v1649
        %v1651 = vpop.xlane.xlu0 %1650
        %v1652 = vsub.f32 %v1646, %v1651
        %v1653 = vmul.f32 %v1652, 1.442695
        %v1654 = vpow.pop %v1653
        %v1655 = vsel %vm1193, %v1654, 0.0
        %1656 = vadd.xlane.f32.xlu0 %v1655
        %v1657 = vpop.xlane.xlu0 %1656
        %v1658 = vrcp.pop %v1657
        %v1659 = vmul.f32 %v1657, %v1658
        %v1660 = vsub.f32 1.0, %v1659
        %v1661 = vmul.f32 %v1658, %v1660
        %v1662 = vadd.f32 %v1658, %v1661
        %vm1663 = vweird.f32 %v1657
        %vm1664 = vweird.f32 %v1658
        %vm1665 = vmor %vm1663, %vm1664
        %v1666 = vsel %vm1665, %v1658, %v1662
        %v1667 = vand.u32 2147483647, %v1657
        %vm1668 = vcmp.eq.f32.partialorder %v1667, 8.507059e+37
        %v1669 = vand.u32 %v1657, 2147483648
        %v1670 = vor.u32 1.1754944e-38, %v1669
        %v1671 = vsel %vm1668, %v1670, %v1666
        %v1672 = vmul.f32 %v1654, %v1671
        %v1673 = vpack.c.bf16 %v1672, %v1672
        %1674 = vrot.lane.b32.xlu0 %v1555, 56
        %v1675 = vpop.permute.xlu0 %1674
        %v1677 = vsel %vm1193, %v1673, 0
        %v1680 = vsel %vm1243, %v1675, 0
        %1682 = vmatpush.bf16.msra.mxu0 0
        %1683 = vmatpush.bf16.msra.mxu0 0
        %1684 = vmatpush.bf16.msra.mxu0 0
        %1685 = vmatpush.bf16.msra.mxu0 0
        %1686 = vmatpush.bf16.msra.mxu0 0
        %1687 = vmatpush.bf16.msra.mxu0 0
        %1688 = vmatpush.bf16.msra.mxu0 0
        %1689 = vmatpush.bf16.msra.mxu0 %v1680
        %1690 = vmatmul.bf16.gmra.mxu0 %v1677
        %v1691 = vpop.f32.mrf.mxu0
        %v1692 = vadd.f32 0.0, %v1691
        %v1693 = vpop.f32.mrf.mxu0
        %1694 = vdwg.mxu0
        %v1695 = vpack.c.bf16 %v1692, %v1692
        %v1697 = vsel %vm1193, %v1695, 0
        %1699 = vmatpush.bf16.msra.mxu0 0
        %1700 = vmatpush.bf16.msra.mxu0 0
        %1701 = vmatpush.bf16.msra.mxu0 0
        %1702 = vmatpush.bf16.msra.mxu0 0
        %1703 = vmatpush.bf16.msra.mxu0 0
        %1704 = vmatpush.bf16.msra.mxu0 0
        %1705 = vmatpush.bf16.msra.mxu0 0
        %1706 = vmatpush.bf16.msra.mxu0 %v1338
        %1707 = vmatmul.bf16.gmra.mxu0 %v1697
        %v1708 = vpop.f32.mrf.mxu0
        %v1709 = vadd.f32 0.0, %v1708
        %v1710 = vpop.f32.mrf.mxu0
        %1711 = vdwg.mxu0
        %v1713 = vsel %vm1193, %v1624, 0
        %1715 = vmatpush.bf16.msra.mxu0 0
        %1716 = vmatpush.bf16.msra.mxu0 0
        %1717 = vmatpush.bf16.msra.mxu0 0
        %1718 = vmatpush.bf16.msra.mxu0 0
        %1719 = vmatpush.bf16.msra.mxu0 0
        %1720 = vmatpush.bf16.msra.mxu0 0
        %1721 = vmatpush.bf16.msra.mxu0 0
        %1722 = vmatpush.bf16.msra.mxu0 %v1357
        %1723 = vmatmul.bf16.gmra.mxu0 %v1713
        %v1724 = vpop.f32.mrf.mxu0
        %v1725 = vadd.f32 %v1709, %v1724
        %v1726 = vpop.f32.mrf.mxu0
        %1727 = vdwg.mxu0
        %1728 = vrot.lane.b32.xlu0 %v1554, 112
        %v1729 = vpop.permute.xlu0 %1728
        %1730 = vrot.lane.b32.xlu0 %v1555, 80
        %v1731 = vpop.permute.xlu0 %1730
        %v1733 = vsel %vm1193, %v1729, 0
        %v1736 = vsel %vm1193, %v1731, 0
        %1738 = vmatpush.bf16.xpose.msra.mxu0 0
        %1739 = vmatpush.bf16.xpose.msra.mxu0 0
        %1740 = vmatpush.bf16.xpose.msra.mxu0 0
        %1741 = vmatpush.bf16.xpose.msra.mxu0 0
        %1742 = vmatpush.bf16.xpose.msra.mxu0 0
        %1743 = vmatpush.bf16.xpose.msra.mxu0 0
        %1744 = vmatpush.bf16.xpose.msra.mxu0 0
        %1745 = vmatpush.bf16.xpose.msra.mxu0 %v1736
        %1746 = vmatmul.bf16.gmra.mxu0 %v1733
        %v1747 = vpop.f32.mrf.mxu0
        %v1748 = vadd.f32 %v1187, %v1747
        %v1749 = vpop.f32.mrf.mxu0
        %1750 = vdwg.mxu0
        %v1751 = vsel %vm1193, %v1748, -inf
        %1752 = vmax.xlane.f32.xlu0 %v1751
        %v1753 = vpop.xlane.xlu0 %1752
        %v1754 = vsub.f32 %v1748, %v1753
        %v1755 = vmul.f32 %v1754, 1.442695
        %v1756 = vpow.pop %v1755
        %v1757 = vsel %vm1193, %v1756, 0.0
        %1758 = vadd.xlane.f32.xlu0 %v1757
        %v1759 = vpop.xlane.xlu0 %1758
        %v1760 = vrcp.pop %v1759
        %v1761 = vmul.f32 %v1759, %v1760
        %v1762 = vsub.f32 1.0, %v1761
        %v1763 = vmul.f32 %v1760, %v1762
        %v1764 = vadd.f32 %v1760, %v1763
        %vm1765 = vweird.f32 %v1759
        %vm1766 = vweird.f32 %v1760
        %vm1767 = vmor %vm1765, %vm1766
        %v1768 = vsel %vm1767, %v1760, %v1764
        %v1769 = vand.u32 2147483647, %v1759
        %vm1770 = vcmp.eq.f32.partialorder %v1769, 8.507059e+37
        %v1771 = vand.u32 %v1759, 2147483648
        %v1772 = vor.u32 1.1754944e-38, %v1771
        %v1773 = vsel %vm1770, %v1772, %v1768
        %v1774 = vmul.f32 %v1756, %v1773
        %v1775 = vpack.c.bf16 %v1774, %v1774
        %1776 = vrot.lane.b32.xlu0 %v1555, 48
        %v1777 = vpop.permute.xlu0 %1776
        %v1779 = vsel %vm1193, %v1775, 0
        %v1782 = vsel %vm1243, %v1777, 0
        %1784 = vmatpush.bf16.msra.mxu0 0
        %1785 = vmatpush.bf16.msra.mxu0 0
        %1786 = vmatpush.bf16.msra.mxu0 0
        %1787 = vmatpush.bf16.msra.mxu0 0
        %1788 = vmatpush.bf16.msra.mxu0 0
        %1789 = vmatpush.bf16.msra.mxu0 0
        %1790 = vmatpush.bf16.msra.mxu0 0
        %1791 = vmatpush.bf16.msra.mxu0 %v1782
        %1792 = vmatmul.bf16.gmra.mxu0 %v1779
        %v1793 = vpop.f32.mrf.mxu0
        %v1794 = vadd.f32 0.0, %v1793
        %v1795 = vpop.f32.mrf.mxu0
        %1796 = vdwg.mxu0
        %v1797 = vpack.c.bf16 %v1794, %v1794
        %v1799 = vsel %vm1193, %v1797, 0
        %1801 = vmatpush.bf16.msra.mxu0 0
        %1802 = vmatpush.bf16.msra.mxu0 0
        %1803 = vmatpush.bf16.msra.mxu0 0
        %1804 = vmatpush.bf16.msra.mxu0 0
        %1805 = vmatpush.bf16.msra.mxu0 0
        %1806 = vmatpush.bf16.msra.mxu0 0
        %1807 = vmatpush.bf16.msra.mxu0 0
        %1808 = vmatpush.bf16.msra.mxu0 %v1447
        %1809 = vmatmul.bf16.gmra.mxu0 %v1799
        %v1810 = vpop.f32.mrf.mxu0
        %v1811 = vadd.f32 0.0, %v1810
        %v1812 = vpop.f32.mrf.mxu0
        %1813 = vdwg.mxu0
        %v1814 = vadd.f32 %v1725, %v1811
        %1815 = vrot.lane.b32.xlu0 %v1554, 104
        %v1816 = vpop.permute.xlu0 %1815
        %1817 = vrot.lane.b32.xlu0 %v1555, 72
        %v1818 = vpop.permute.xlu0 %1817
        %v1820 = vsel %vm1193, %v1816, 0
        %v1823 = vsel %vm1193, %v1818, 0
        %1825 = vmatpush.bf16.xpose.msra.mxu0 0
        %1826 = vmatpush.bf16.xpose.msra.mxu0 0
        %1827 = vmatpush.bf16.xpose.msra.mxu0 0
        %1828 = vmatpush.bf16.xpose.msra.mxu0 0
        %1829 = vmatpush.bf16.xpose.msra.mxu0 0
        %1830 = vmatpush.bf16.xpose.msra.mxu0 0
        %1831 = vmatpush.bf16.xpose.msra.mxu0 0
        %1832 = vmatpush.bf16.xpose.msra.mxu0 %v1823
        %1833 = vmatmul.bf16.gmra.mxu0 %v1820
        %v1834 = vpop.f32.mrf.mxu0
        %v1835 = vadd.f32 %v1187, %v1834
        %v1836 = vpop.f32.mrf.mxu0
        %1837 = vdwg.mxu0
        %v1838 = vsel %vm1193, %v1835, -inf
        %1839 = vmax.xlane.f32.xlu0 %v1838
        %v1840 = vpop.xlane.xlu0 %1839
        %v1841 = vsub.f32 %v1835, %v1840
        %v1842 = vmul.f32 %v1841, 1.442695
        %v1843 = vpow.pop %v1842
        %v1844 = vsel %vm1193, %v1843, 0.0
        %1845 = vadd.xlane.f32.xlu0 %v1844
        %v1846 = vpop.xlane.xlu0 %1845
        %v1847 = vrcp.pop %v1846
        %v1848 = vmul.f32 %v1846, %v1847
        %v1849 = vsub.f32 1.0, %v1848
        %v1850 = vmul.f32 %v1847, %v1849
        %v1851 = vadd.f32 %v1847, %v1850
        %vm1852 = vweird.f32 %v1846
        %vm1853 = vweird.f32 %v1847
        %vm1854 = vmor %vm1852, %vm1853
        %v1855 = vsel %vm1854, %v1847, %v1851
        %v1856 = vand.u32 2147483647, %v1846
        %vm1857 = vcmp.eq.f32.partialorder %v1856, 8.507059e+37
        %v1858 = vand.u32 %v1846, 2147483648
        %v1859 = vor.u32 1.1754944e-38, %v1858
        %v1860 = vsel %vm1857, %v1859, %v1855
        %v1861 = vmul.f32 %v1843, %v1860
        %v1862 = vpack.c.bf16 %v1861, %v1861
        %1863 = vrot.lane.b32.xlu0 %v1555, 40
        %v1864 = vpop.permute.xlu0 %1863
        %v1866 = vsel %vm1193, %v1862, 0
        %v1869 = vsel %vm1243, %v1864, 0
        %1871 = vmatpush.bf16.msra.mxu0 0
        %1872 = vmatpush.bf16.msra.mxu0 0
        %1873 = vmatpush.bf16.msra.mxu0 0
        %1874 = vmatpush.bf16.msra.mxu0 0
        %1875 = vmatpush.bf16.msra.mxu0 0
        %1876 = vmatpush.bf16.msra.mxu0 0
        %1877 = vmatpush.bf16.msra.mxu0 0
        %1878 = vmatpush.bf16.msra.mxu0 %v1869
        %1879 = vmatmul.bf16.gmra.mxu0 %v1866
        %v1880 = vpop.f32.mrf.mxu0
        %v1881 = vadd.f32 0.0, %v1880
        %v1882 = vpop.f32.mrf.mxu0
        %1883 = vdwg.mxu0
        %v1884 = vpack.c.bf16 %v1881, %v1881
        %v1886 = vsel %vm1193, %v1884, 0
        %1888 = vmatpush.bf16.msra.mxu0 0
        %1889 = vmatpush.bf16.msra.mxu0 0
        %1890 = vmatpush.bf16.msra.mxu0 0
        %1891 = vmatpush.bf16.msra.mxu0 0
        %1892 = vmatpush.bf16.msra.mxu0 0
        %1893 = vmatpush.bf16.msra.mxu0 0
        %1894 = vmatpush.bf16.msra.mxu0 0
        %1895 = vmatpush.bf16.msra.mxu0 %v1538
        %1896 = vmatmul.bf16.gmra.mxu0 %v1886
        %v1897 = vpop.f32.mrf.mxu0
        %v1898 = vadd.f32 0.0, %v1897
        %v1899 = vpop.f32.mrf.mxu0
        %1900 = vdwg.mxu0
        %v1901 = vadd.f32 %v1814, %v1898
        %v1902 = vadd.f32 %v1078, %v1553
        %v1903 = vadd.f32 %v1079, %v1901
        %v1904 = vld [vmem:[%s829] sm:$0x1]
        %v1906 = vperm.slane %v1904, 0
        %v1908 = vadd.f32 %v1902, %v1906
        %v1909 = vadd.f32 %v1903, %v1906
        %v1910 = vld [vmem:[%s832] sm:$0x1]
        %v1911 = vld [vmem:[%s835] sm:$0x1]
        %v1912 = vsel %vm1082, %v1908, 0.0
        %1913 = vadd.xlane.f32.xlu0 %v1912
        %v1914 = vpop.xlane.xlu0 %1913
        %v1915 = vsel %vm1082, %v1909, 0.0
        %1916 = vadd.xlane.f32.xlu0 %v1915
        %v1917 = vpop.xlane.xlu0 %1916
        %v1918 = vmul.f32 %v1914, %v1095
        %v1919 = vmul.f32 %v1917, %v1095
        %v1920 = vsub.f32 %v1908, %v1918
        %v1921 = vsub.f32 %v1909, %v1919
        %v1922 = vmul.f32 %v1920, %v1920
        %v1923 = vmul.f32 %v1921, %v1921
        %v1924 = vsel %vm1082, %v1922, 0.0
        %1925 = vadd.xlane.f32.xlu0 %v1924
        %v1926 = vpop.xlane.xlu0 %1925
        %v1927 = vsel %vm1082, %v1923, 0.0
        %1928 = vadd.xlane.f32.xlu0 %v1927
        %v1929 = vpop.xlane.xlu0 %1928
        %v1930 = vmul.f32 %v1926, %v1095
        %v1931 = vmul.f32 %v1929, %v1095
        %v1932 = vadd.f32 %v1930, 1e-05
        %v1933 = vadd.f32 %v1931, 1e-05
        %v1934 = vrsqrt.pop %v1932
        %v1935 = vmul.f32 %v1934, %v1932
        %v1936 = vmul.f32 %v1935, %v1934
        %v1937 = vmul.f32 0.5, %v1936
        %v1938 = vsub.f32 1.5, %v1937
        %v1939 = vmul.f32 %v1934, %v1938
        %vm1940 = vweird.f32 %v1932
        %vm1941 = vweird.f32 %v1934
        %vm1942 = vmor %vm1940, %vm1941
        %v1943 = vsel %vm1942, %v1934, %v1939
        %v1944 = vrsqrt.pop %v1933
        %v1945 = vmul.f32 %v1944, %v1933
        %v1946 = vmul.f32 %v1945, %v1944
        %v1947 = vmul.f32 0.5, %v1946
        %v1948 = vsub.f32 1.5, %v1947
        %v1949 = vmul.f32 %v1944, %v1948
        %vm1950 = vweird.f32 %v1933
        %vm1951 = vweird.f32 %v1944
        %vm1952 = vmor %vm1950, %vm1951
        %v1953 = vsel %vm1952, %v1944, %v1949
        %v1954 = vmul.f32 %v1920, %v1943
        %v1955 = vmul.f32 %v1921, %v1953
        %v1957 = vperm.slane %v1910, 0
        %v1959 = vmul.f32 %v1954, %v1957
        %v1960 = vmul.f32 %v1955, %v1957
        %v1962 = vperm.slane %v1911, 0
        %v1964 = vadd.f32 %v1959, %v1962
        %v1965 = vadd.f32 %v1960, %v1962
        %v1966 = vld [vmem:[%s840] sm:$0xf]
        %v1967 = vld [vmem:[%s840 + $0x4] sm:$0xf]
        %v1968 = vld [vmem:[%s840 + $0x8] sm:$0xf]
        %v1969 = vld [vmem:[%s840 + $0xc] sm:$0xf]
        %v1970 = vpack.c.bf16 %v1965, %v1964
        %v1971 = vld [vmem:[%s843] sm:$0x1]
        %v1973 = vperm.slane %v1971, 0
        %v1979 = vunpack.c.l.b16 %v1966
        %v1980 = vunpack.c.l.b16 %v1967
        %v1981 = vunpack.c.l.b16 %v1968
        %v1982 = vunpack.c.l.b16 %v1969
        %v1983 = vpack.c.b16 %v1980, %v1979
        %v1984 = vpack.c.b16 %v1982, %v1981
        %v1988 = vsel %vm1082, %v1970, 0
        %1990 = vmatpush.bf16.msra.mxu0 0
        %1991 = vmatpush.bf16.msra.mxu0 0
        %1992 = vmatpush.bf16.msra.mxu0 0
        %1993 = vmatpush.bf16.msra.mxu0 0
        %1994 = vmatpush.bf16.msra.mxu0 0
        %1995 = vmatpush.bf16.msra.mxu0 0
        %1996 = vmatpush.bf16.msra.mxu0 %v1984
        %1997 = vmatpush.bf16.msra.mxu0 %v1983
        %1998 = vmatmul.bf16.gmra.mxu0 %v1988
        %v1999 = vpop.f32.mrf.mxu0
        %v2000 = vadd.f32 %v1973, %v1999
        %v2001 = vpop.f32.mrf.mxu0
        %v2002 = vadd.f32 %v1973, %v2001
        %2003 = vdwg.mxu0
        %v2004 = vmul.f32 %v2000, 1.702
        %v2005 = vmul.f32 %v2002, 1.702
        %v2006 = vxor.u32 %v2004, 2147483648
        %v2007 = vxor.u32 %v2005, 2147483648
        %v2008 = vmul.f32 %v2006, 1.442695
        %v2009 = vpow.pop %v2008
        %v2010 = vmul.f32 %v2007, 1.442695
        %v2011 = vpow.pop %v2010
        %v2012 = vadd.f32 %v2009, 1.0
        %v2013 = vadd.f32 %v2011, 1.0
        %v2014 = vrcp.pop %v2012
        %v2015 = vmul.f32 %v2012, %v2014
        %v2016 = vsub.f32 1.0, %v2015
        %v2017 = vmul.f32 %v2014, %v2016
        %v2018 = vadd.f32 %v2014, %v2017
        %vm2019 = vweird.f32 %v2012
        %vm2020 = vweird.f32 %v2014
        %vm2021 = vmor %vm2019, %vm2020
        %v2022 = vsel %vm2021, %v2014, %v2018
        %v2023 = vand.u32 2147483647, %v2012
        %vm2024 = vcmp.eq.f32.partialorder %v2023, 8.507059e+37
        %v2025 = vand.u32 %v2012, 2147483648
        %v2026 = vor.u32 1.1754944e-38, %v2025
        %v2027 = vsel %vm2024, %v2026, %v2022
        %v2028 = vmul.f32 1.0, %v2027
        %v2029 = vrcp.pop %v2013
        %v2030 = vmul.f32 %v2013, %v2029
        %v2031 = vsub.f32 1.0, %v2030
        %v2032 = vmul.f32 %v2029, %v2031
        %v2033 = vadd.f32 %v2029, %v2032
        %vm2034 = vweird.f32 %v2013
        %vm2035 = vweird.f32 %v2029
        %vm2036 = vmor %vm2034, %vm2035
        %v2037 = vsel %vm2036, %v2029, %v2033
        %v2038 = vand.u32 2147483647, %v2013
        %vm2039 = vcmp.eq.f32.partialorder %v2038, 8.507059e+37
        %v2040 = vand.u32 %v2013, 2147483648
        %v2041 = vor.u32 1.1754944e-38, %v2040
        %v2042 = vsel %vm2039, %v2041, %v2037
        %v2043 = vmul.f32 1.0, %v2042
        %v2044 = vmul.f32 %v2000, %v2028
        %v2045 = vmul.f32 %v2002, %v2043
        %v2046 = vld [vmem:[%s848] sm:$0xf]
        %v2047 = vld [vmem:[%s848 + $0x4] sm:$0xf]
        %v2048 = vld [vmem:[%s848 + $0x8] sm:$0xf]
        %v2049 = vld [vmem:[%s848 + $0xc] sm:$0xf]
        %v2050 = vld [vmem:[%s848 + $0x10] sm:$0xf]
        %v2051 = vld [vmem:[%s848 + $0x14] sm:$0xf]
        %v2052 = vld [vmem:[%s848 + $0x18] sm:$0xf]
        %v2053 = vld [vmem:[%s848 + $0x1c] sm:$0xf]
        %v2054 = vld [vmem:[%s848 + $0x20] sm:$0xf]
        %v2055 = vld [vmem:[%s848 + $0x24] sm:$0xf]
        %v2056 = vld [vmem:[%s848 + $0x28] sm:$0xf]
        %v2057 = vld [vmem:[%s848 + $0x2c] sm:$0xf]
        %v2058 = vld [vmem:[%s848 + $0x30] sm:$0xf]
        %v2059 = vld [vmem:[%s848 + $0x34] sm:$0xf]
        %v2060 = vld [vmem:[%s848 + $0x38] sm:$0xf]
        %v2061 = vld [vmem:[%s848 + $0x3c] sm:$0xf]
        %v2062 = vpack.c.bf16 %v2045, %v2044
        %v2079 = vunpack.c.l.b16 %v2046
        %v2080 = vunpack.c.l.b16 %v2047
        %v2081 = vunpack.c.l.b16 %v2048
        %v2082 = vunpack.c.l.b16 %v2049
        %v2083 = vunpack.c.l.b16 %v2050
        %v2084 = vunpack.c.l.b16 %v2051
        %v2085 = vunpack.c.l.b16 %v2052
        %v2086 = vunpack.c.l.b16 %v2053
        %v2087 = vunpack.c.l.b16 %v2054
        %v2088 = vunpack.c.l.b16 %v2055
        %v2089 = vunpack.c.l.b16 %v2056
        %v2090 = vunpack.c.l.b16 %v2057
        %v2091 = vunpack.c.l.b16 %v2058
        %v2092 = vunpack.c.l.b16 %v2059
        %v2093 = vunpack.c.l.b16 %v2060
        %v2094 = vunpack.c.l.b16 %v2061
        %v2095 = vpack.c.b16 %v2080, %v2079
        %v2096 = vpack.c.b16 %v2082, %v2081
        %v2097 = vpack.c.b16 %v2084, %v2083
        %v2098 = vpack.c.b16 %v2086, %v2085
        %v2099 = vpack.c.b16 %v2088, %v2087
        %v2100 = vpack.c.b16 %v2090, %v2089
        %v2101 = vpack.c.b16 %v2092, %v2091
        %v2102 = vpack.c.b16 %v2094, %v2093
        %2111 = vmatpush.bf16.msra.mxu0 %v2102
        %2112 = vmatpush.bf16.msra.mxu0 %v2101
        %2113 = vmatpush.bf16.msra.mxu0 %v2100
        %2114 = vmatpush.bf16.msra.mxu0 %v2099
        %2115 = vmatpush.bf16.msra.mxu0 %v2098
        %2116 = vmatpush.bf16.msra.mxu0 %v2097
        %2117 = vmatpush.bf16.msra.mxu0 %v2096
        %2118 = vmatpush.bf16.msra.mxu0 %v2095
        %2119 = vmatmul.bf16.gmra.mxu0 %v2062
        %v2120 = vpop.f32.mrf.mxu0
        %v2121 = vadd.f32 0.0, %v2120
        %v2122 = vpop.f32.mrf.mxu0
        %v2123 = vadd.f32 0.0, %v2122
        %2124 = vdwg.mxu0
        %v2125 = vadd.f32 %v1908, %v2121
        %v2126 = vadd.f32 %v1909, %v2123
        %v2127 = vld [vmem:[%s851] sm:$0x1]
        %v2129 = vperm.slane %v2127, 0
        %v2131 = vadd.f32 %v2125, %v2129
        %v2132 = vadd.f32 %v2126, %v2129
        %2133 = vst.msk [vmem:[#allocation2] sm:$0xff] %vm1082, %v2131
        %2134 = vst.msk [vmem:[#allocation2 + $0x8] sm:$0xff] %vm1082, %v2132
        %p2135 = scmp.eq.s32.totalorder %s38, 1
        // Predicated region
        $region109: #{vit_encoder_forward.1} parent=103 // pred_check
          %p2136 = pneg %p2135
        $region110: #{vit_encoder_forward.1} parent=103 // pred_check_branch
          %2138 = sbr.rel (%p2136) target = $region112
        $region111: #{vit_encoder_forward.1} parent=103 // pred_region
          %v2140 = vrot.slane %v2132, 7
          %vm2142 = vcmask 1040384
          %v2143 = vsel %vm2142, %v2131, %v2140
          %v2144 = vld [vmem:[%s18] sm:$0x1]
          %v2145 = vld [vmem:[%s19] sm:$0x1]
          %vm2146 = vcmask 254976
          %v2147 = vsel %vm2146, %v2143, 0.0
          %2148 = vadd.xlane.f32.xlu0 %v2147
          %v2149 = vpop.xlane.xlu0 %2148
          %v2150 = vmul.f32 %v2149, %v1095
          %v2151 = vsub.f32 %v2143, %v2150
          %v2152 = vmul.f32 %v2151, %v2151
          %v2153 = vsel %vm2146, %v2152, 0.0
          %2154 = vadd.xlane.f32.xlu0 %v2153
          %v2155 = vpop.xlane.xlu0 %2154
          %v2156 = vmul.f32 %v2155, %v1095
          %v2157 = vadd.f32 %v2156, 1e-05
          %v2158 = vrsqrt.pop %v2157
          %v2159 = vmul.f32 %v2158, %v2157
          %v2160 = vmul.f32 %v2159, %v2158
          %v2161 = vmul.f32 0.5, %v2160
          %v2162 = vsub.f32 1.5, %v2161
          %v2163 = vmul.f32 %v2158, %v2162
          %vm2164 = vweird.f32 %v2157
          %vm2165 = vweird.f32 %v2158
          %vm2166 = vmor %vm2164, %vm2165
          %v2167 = vsel %vm2166, %v2158, %v2163
          %v2168 = vmul.f32 %v2151, %v2167
          %v2170 = vperm.slane %v2144, 0
          %v2172 = vmul.f32 %v2168, %v2170
          %v2174 = vperm.slane %v2145, 0
          %v2176 = vadd.f32 %v2172, %v2174
          %v2177 = vld [vmem:[%s20] sm:$0xf]
          %v2178 = vld [vmem:[%s20 + $0x4] sm:$0xf]
          %v2179 = vld [vmem:[%s20 + $0x8] sm:$0xf]
          %v2180 = vld [vmem:[%s20 + $0xc] sm:$0xf]
          %v2181 = vpack.c.bf16 %v2176, %v2176
          %v2186 = vunpack.c.l.b16 %v2177
          %v2187 = vunpack.c.l.b16 %v2178
          %v2188 = vunpack.c.l.b16 %v2179
          %v2189 = vunpack.c.l.b16 %v2180
          %v2190 = vpack.c.b16 %v2187, %v2186
          %v2191 = vpack.c.b16 %v2189, %v2188
          %v2195 = vsel %vm1082, %v2181, 0
          %2197 = vmatpush.bf16.msra.mxu0 0
          %2198 = vmatpush.bf16.msra.mxu0 0
          %2199 = vmatpush.bf16.msra.mxu0 0
          %2200 = vmatpush.bf16.msra.mxu0 0
          %2201 = vmatpush.bf16.msra.mxu0 0
          %2202 = vmatpush.bf16.msra.mxu0 0
          %2203 = vmatpush.bf16.msra.mxu0 %v2191
          %2204 = vmatpush.bf16.msra.mxu0 %v2190
          %2205 = vmatmul.bf16.gmra.mxu0 %v2195
          %v2206 = vpop.f32.mrf.mxu0
          %v2207 = vadd.f32 0.0, %v2206
          %v2208 = vpop.f32.mrf.mxu0
          %2209 = vdwg.mxu0
          %2210 = vst [vmem:[#allocation3] sm:$0x3] %v2207
        $region112: #{vit_encoder_forward.1} parent=103 // pred_fallthru
          _
        // Predicated region
        $region113: #{vit_encoder_forward.1} parent=103 // pred_check
          %p2211 = pneg %p569
        $region114: #{vit_encoder_forward.1} parent=103 // pred_check_branch
          %2213 = sbr.rel (%p2211) target = $region116
        $region115: #{vit_encoder_forward.1} parent=103 // pred_region
          %2215 = vsyncadd [#allocation4], 0
          %s2216 = smul.addr %s37, 2
          %s2217 = scalar_lea.hbm %s21, %s2216
          %s2219 = sshll.u32 [#allocation3], 4
          %s2220 = int_to_ptr.vmem [resolvable:$true] %s2219
          %s2221 = sshll.u32 %s2217, 4
          %s2222 = int_to_ptr.hbm [resolvable:$true] %s2221
          %2224 = dma.vmem_to_hbm [thread:$0]  %s2220, 32, %s2222, [#allocation4]
        $region116: #{vit_encoder_forward.1} parent=103 // pred_fallthru
          _
        // Predicated region
        $region117: #{vit_encoder_forward.1} parent=103 // pred_check
          %p2225 = pneg %p569
        $region118: #{vit_encoder_forward.1} parent=103 // pred_check_branch
          %2227 = sbr.rel (%p2225) target = $region120
        $region119: #{vit_encoder_forward.1} parent=103 // pred_region
          %2229 = dma.done [#allocation4], 32
        $region120: #{vit_encoder_forward.1} parent=103 // pred_fallthru
          _
      $region104: #{vit_encoder_forward.1} parent=5 // pred_fallthru
        _
      %p2230 = scmp.le.s32.totalorder 2, %s28
      // Predicated region
      $region121: #{vit_encoder_forward.1} parent=5 // pred_check
        %p2231 = pneg %p2230
      $region122: #{vit_encoder_forward.1} parent=5 // pred_check_branch
        %2233 = sbr.rel (%p2231) target = $region124
      $region123: #{vit_encoder_forward.1} parent=5 // pred_region
        %s2234 = ssub.s32 %s28, 2
      $region124: #{vit_encoder_forward.1} parent=5 // pred_fallthru
        _
    $region6: #{vit_encoder_forward.1} parent=1 // loop_footer
      %s32 = sadd.s32 1, %s28
    $region7: #{vit_encoder_forward.1} parent=1 // loop_footer_branch
      %27 = sbr.rel target = $region3
    $region8: #{vit_encoder_forward.1} parent=1 // loop_exit
      _
    %2235 = vsyncpa [#allocation4], 1
    %s2236 = scalar_lea.sflag [#allocation4], 1
    %2237 = vsyncpa %s2236, 1

</llo_original>
